<compile_context>
chip_gen: v5e
topology: v5e:2x2
jax: 0.10.0
libtpu: 0.0.40
codegen_flags: <defaults>
</compile_context>

<pallas_src>
import functools
import numpy as np
import jax
import jax.numpy as jnp
from jax.experimental import pallas as pl
from jax.experimental.pallas import tpu as pltpu

LOG2PI = float(np.log(2.0 * np.pi))
MM_DTYPE = jnp.bfloat16          # MXU dtype; accumulation is always f32.


# ----------------------------------------------------------------------------
# In-kernel helpers
# ----------------------------------------------------------------------------
def _dot(a, b):
    return jnp.dot(a.astype(MM_DTYPE), b.astype(MM_DTYPE),
                   preferred_element_type=jnp.float32)


def _conv3x3(x, wflat, bias, Wp2):
    """3x3 'same' conv on a zero-halo'd (Cin, Np) slab as ONE matmul.

    x:     (Cin, Np) activation; lane q = (h+1)*(W+2) + (w+1); halo lanes == 0
    wflat: (Cout, 9*Cin) tap-major weights (tap k = kh*3 + kw)
    bias:  (Cout, 1)
    Rolls follow the np.roll convention: rolled[q] = x[(q + d) mod Np].
    """
    Np = x.shape[1]
    taps = []
    for k in range(9):
        d = (k // 3 - 1) * Wp2 + (k % 3 - 1)
        taps.append(x if d == 0 else pltpu.roll(x, shift=(-d) % Np, axis=1))
    return _dot(wflat, jnp.concatenate(taps, axis=0)) + bias


# ----------------------------------------------------------------------------
# Pallas kernels
# ----------------------------------------------------------------------------
def _level_kernel(zin_ref, mcp_ref, bcp_ref, msp_ref,
                  w1_ref, b1_ref, w2_ref, b2_ref, w3_ref, b3_ref,
                  vmask_ref, zo_ref, ld_ref, *, Wp2, Chp):
    """One WoodburyGlow step; grid = (batch [parallel], step [arbitrary]).

    zo_ref is both output and the VMEM-resident carry across the step axis.
    """
    s = pl.program_id(1)

    @pl.when(s == 0)
    def _init():
        zo_ref[...] = zin_ref[...]
        ld_ref[...] = jnp.zeros_like(ld_ref)

    vmask = vmask_ref[...]                       # (1, Np) valid-lane mask
    z = zo_ref[...]                              # (Cp, Np) f32 carry

    # ActNorm folded into the Woodbury channel mix:  z <- Mc' z + b'
    z = _dot(mcp_ref[...], z) + bcp_ref[...]
    # Woodbury spatial mix embedded in the halo'd lane layout (its halo/pad
    # columns are zero, so it also re-zeroes the halo lanes for the conv).
    z = _dot(z, msp_ref[...])

    z1 = z[:Chp, :]
    z2 = z[Chp:, :]

    # Affine-coupling CNN: conv3x3 -> relu -> conv1x1 -> relu -> conv3x3(zero-init)
    h = jnp.maximum(_conv3x3(z1, w1_ref[...], b1_ref[...], Wp2), 0.0)
    h = jnp.maximum(_dot(w2_ref[...], h) + b2_ref[...], 0.0)
    h = h * vmask                                # re-zero halo before the 2nd 3x3
    h = _conv3x3(h, w3_ref[...], b3_ref[...], Wp2)

    shift = h[:Chp, :]
    t = h[Chp:, :] + 2.0
    # scale = sigmoid(t) with one exp + approx reciprocal; logscale = log(sigmoid(t))
    e = jnp.exp(-jnp.abs(t))
    r = pl.reciprocal(1.0 + e, approx=True)
    scale = jnp.where(t >= 0.0, r, e * r)
    logscale = jnp.minimum(t, 0.0) - jnp.log(1.0 + e)

    zo_ref[:Chp, :] = z1
    zo_ref[Chp:, :] = (z2 + shift) * scale
    ld_ref[...] = ld_ref[...] + jnp.sum(logscale * vmask, axis=0, keepdims=True)


def _split_kernel(z_ref, w_ref, b_ref, vmask_ref, lp_ref, *, Wp2, Chp):
    """Split2d learned conditional Gaussian prior on the dropped half."""
    vm = vmask_ref[...]
    z1 = z_ref[:Chp, :]
    z2 = z_ref[Chp:, :]
    h = _conv3x3(z1, w_ref[...], b_ref[...], Wp2)
    mean = h[:Chp, :]
    logs = h[Chp:, :] * vm
    diff = (z2 - mean) * vm
    ll = -0.5 * ((2.0 * logs + LOG2PI) * vm + diff * diff * jnp.exp(-2.0 * logs))
    lp_ref[...] = jnp.sum(ll, axis=0, keepdims=True)


def _prior_kernel(z_ref, mask_ref, lp_ref):
    z = z_ref[...]
    lp_ref[...] = jnp.sum(-0.5 * (z * z + LOG2PI) * mask_ref[...],
                          axis=0, keepdims=True)


# ----------------------------------------------------------------------------
# pallas_call wrappers
# ----------------------------------------------------------------------------
_CPARAMS_2D = pltpu.CompilerParams(dimension_semantics=("parallel", "arbitrary"),
                                   vmem_limit_bytes=32 * 1024 * 1024)
_CPARAMS_1D = pltpu.CompilerParams(dimension_semantics=("parallel",),
                                   vmem_limit_bytes=32 * 1024 * 1024)


def _level_call(zslab, ps, vmask, *, Wp2, Chp):
    B, Cp, Np = zslab.shape
    K = ps['mcp'].shape[0]
    order = ('mcp', 'bcp', 'msp', 'w1', 'b1', 'w2', 'b2', 'w3', 'b3')

    def pspec(arr):
        return pl.BlockSpec((None,) + arr.shape[1:], lambda b, s: (s, 0, 0))

    in_specs = [pl.BlockSpec((None, Cp, Np), lambda b, s: (b, 0, 0))]
    in_specs += [pspec(ps[k]) for k in order]
    in_specs += [pl.BlockSpec((1, Np), lambda b, s: (0, 0))]

    return pl.pallas_call(
        functools.partial(_level_kernel, Wp2=Wp2, Chp=Chp),
        grid=(B, K),
        in_specs=in_specs,
        out_specs=(pl.BlockSpec((None, Cp, Np), lambda b, s: (b, 0, 0)),
                   pl.BlockSpec((None, 1, Np), lambda b, s: (b, 0, 0))),
        out_shape=(jax.ShapeDtypeStruct((B, Cp, Np), jnp.float32),
                   jax.ShapeDtypeStruct((B, 1, Np), jnp.float32)),
        compiler_params=_CPARAMS_2D,
    )(zslab, *[ps[k] for k in order], vmask)


def _split_call(zslab, wsf, bsp, vmask, *, Wp2, Chp):
    B, Cp, Np = zslab.shape
    return pl.pallas_call(
        functools.partial(_split_kernel, Wp2=Wp2, Chp=Chp),
        grid=(B,),
        in_specs=[pl.BlockSpec((None, Cp, Np), lambda b: (b, 0, 0)),
                  pl.BlockSpec(wsf.shape, lambda b: (0, 0)),
                  pl.BlockSpec(bsp.shape, lambda b: (0, 0)),
                  pl.BlockSpec((1, Np), lambda b: (0, 0))],
        out_specs=pl.BlockSpec((None, 1, Np), lambda b: (b, 0, 0)),
        out_shape=jax.ShapeDtypeStruct((B, 1, Np), jnp.float32),
        compiler_params=_CPARAMS_1D,
    )(zslab, wsf, bsp, vmask)


def _prior_call(zslab, mask):
    B, Cp, Np = zslab.shape
    return pl.pallas_call(
        _prior_kernel,
        grid=(B,),
        in_specs=[pl.BlockSpec((None, Cp, Np), lambda b: (b, 0, 0)),
                  pl.BlockSpec((Cp, Np), lambda b: (0, 0))],
        out_specs=pl.BlockSpec((None, 1, Np), lambda b: (b, 0, 0)),
        out_shape=jax.ShapeDtypeStruct((B, 1, Np), jnp.float32),
        compiler_params=_CPARAMS_1D,
    )(zslab, mask)


# ----------------------------------------------------------------------------
# JAX glue: layouts, per-level parameter preparation, logdet bookkeeping
# ----------------------------------------------------------------------------
def _round_up(x, m):
    return (x + m - 1) // m * m


def squeeze2d(x, factor=2):
    B, C, H, W = x.shape
    x = x.reshape(B, C, H // factor, factor, W // factor, factor)
    x = x.transpose(0, 1, 3, 5, 2, 4)
    return x.reshape(B, C * factor * factor, H // factor, W // factor)


def _make_lane_mask(H, W, Np):
    Wp2 = W + 2
    m = np.zeros((1, Np), np.float32)
    for h in range(H):
        for w in range(W):
            m[0, (h + 1) * Wp2 + (w + 1)] = 1.0
    return jnp.asarray(m)


def to_slab(x, Ch, Chp, Np):
    """(B, C, H, W) -> (B, 2*Chp, Np): channel halves padded to Chp sublanes,
    spatial flattened with a 1-pixel zero halo, lanes padded to Np."""
    B, C, H, W = x.shape
    z1 = jnp.pad(x[:, :Ch], ((0, 0), (0, Chp - Ch), (0, 0), (0, 0)))
    z2 = jnp.pad(x[:, Ch:], ((0, 0), (0, Chp - (C - Ch)), (0, 0), (0, 0)))
    xp = jnp.concatenate([z1, z2], axis=1)
    xp = jnp.pad(xp, ((0, 0), (0, 0), (1, 1), (1, 1)))
    xp = xp.reshape(B, 2 * Chp, (H + 2) * (W + 2))
    return jnp.pad(xp, ((0, 0), (0, 0), (0, Np - (H + 2) * (W + 2))))


def from_slab(zs, chan_rows, H, W):
    B = zs.shape[0]
    Hp2, Wp2 = H + 2, W + 2
    body = zs[:, :, :Hp2 * Wp2].reshape(B, zs.shape[1], Hp2, Wp2)[:, :, 1:H + 1, 1:W + 1]
    return body[:, np.asarray(chan_rows)]


def _perm_even_odd(C):
    return np.concatenate([np.arange(0, C, 2), np.arange(1, C, 2)])


def _prep_level(level, C, H, W, Chp, Np):
    """Fold ActNorm + Woodbury into dense matrices, tap-flatten convs, pad and
    permute to the slab layout, stack over the K steps, cast weights to bf16."""
    Ch = C // 2
    Cp = 2 * Chp
    N = H * W
    Wp2 = W + 2
    rows = np.concatenate([np.arange(Ch), np.arange(Chp, Chp + Ch)])
    perm = _perm_even_odd(C)
    lanes = (np.arange(N) // W + 1) * Wp2 + (np.arange(N) % W + 1)

    acc = {k: [] for k in ('mcp', 'bcp', 'msp', 'w1', 'b1', 'w2', 'b2', 'w3', 'b3')}
    indep_ld = jnp.float32(0.0)
    for p in level['steps']:
        hid = p['w1'].shape[0]
        # ActNorm folded into the Woodbury channel mix
        esc = jnp.exp(p['an_logs'])                                   # (C, 1)
        mc = jnp.eye(C, dtype=jnp.float32) + p['uc'] @ p['vc']
        mcf = mc * esc.reshape(1, C)                                  # Mc diag(e^logs)
        bcf = mc @ (esc * p['an_bias'])                               # (C, 1)
        mcp = jnp.zeros((Cp, Cp), jnp.float32).at[rows[:, None], rows[None, :]].set(mcf)
        bcp = jnp.zeros((Cp, 1), jnp.float32).at[rows, :].set(bcf)
        # Spatial Woodbury, embedded into the halo'd lane layout
        ms = jnp.eye(N, dtype=jnp.float32) + p['us'] @ p['vs']
        msp = jnp.zeros((Np, Np), jnp.float32).at[lanes[:, None], lanes[None, :]].set(ms)
        # Coupling net weights, tap-flattened / padded / output-permuted
        w1p = jnp.pad(p['w1'], ((0, 0), (0, Chp - Ch), (0, 0), (0, 0)))
        w1f = jnp.transpose(w1p, (0, 2, 3, 1)).reshape(hid, 9 * Chp)
        b1 = p['b1'].reshape(hid, 1)
        w2 = p['w2'].reshape(hid, hid)
        b2 = p['b2'].reshape(hid, 1)
        s3 = jnp.exp(p['logs3'] * 3.0)
        w3e = (p['w3'] * s3[:, None, None, None])[perm]               # shift rows first
        w3p = jnp.zeros((Cp, hid, 3, 3), jnp.float32).at[rows].set(w3e)
        w3f = jnp.transpose(w3p, (0, 2, 3, 1)).reshape(Cp, 9 * hid)
        b3e = (p['b3'] * s3)[perm].reshape(C, 1)
        b3p = jnp.zeros((Cp, 1), jnp.float32).at[rows, :].set(b3e)
        if Chp > Ch:  # padded scale rows -> sigmoid ~ 1, ~0 logdet contribution
            b3p = b3p.at[Chp + Ch:, :].set(30.0)
        # Data-independent logdet terms (tiny d x d slogdets stay in XLA)
        dc, ds = p['uc'].shape[1], p['us'].shape[1]
        indep_ld = indep_ld + float(N) * jnp.sum(p['an_logs'])
        indep_ld = indep_ld + float(N) * jnp.linalg.slogdet(
            jnp.eye(dc, dtype=jnp.float32) + p['vc'] @ p['uc'])[1]
        indep_ld = indep_ld + float(C) * jnp.linalg.slogdet(
            jnp.eye(ds, dtype=jnp.float32) + p['vs'] @ p['us'])[1]

        acc['mcp'].append(mcp.astype(MM_DTYPE)); acc['bcp'].append(bcp)
        acc['msp'].append(msp.astype(MM_DTYPE))
        acc['w1'].append(w1f.astype(MM_DTYPE)); acc['b1'].append(b1)
        acc['w2'].append(w2.astype(MM_DTYPE)); acc['b2'].append(b2)
        acc['w3'].append(w3f.astype(MM_DTYPE)); acc['b3'].append(b3p)
    return {k: jnp.stack(v) for k, v in acc.items()}, indep_ld


def _prep_split(sp, C, Chp):
    Ch = C // 2
    Cp = 2 * Chp
    rows = np.concatenate([np.arange(Ch), np.arange(Chp, Chp + Ch)])
    perm = _perm_even_odd(C)
    s = jnp.exp(sp['logs_sp'] * 3.0)
    wse = (sp['w_sp'] * s[:, None, None, None])[perm]                 # (C, Ch, 3, 3)
    wse = jnp.pad(wse, ((0, 0), (0, Chp - Ch), (0, 0), (0, 0)))
    wsp = jnp.zeros((Cp, Chp, 3, 3), jnp.float32).at[rows].set(wse)
    wsf = jnp.transpose(wsp, (0, 2, 3, 1)).reshape(Cp, 9 * Chp)
    bse = (sp['b_sp'] * s)[perm].reshape(C, 1)
    bsp = jnp.zeros((Cp, 1), jnp.float32).at[rows, :].set(bse)
    if Chp > Ch:  # padded logs rows -> exactly zero log-likelihood contribution
        bsp = bsp.at[Chp + Ch:, :].set(-0.5 * LOG2PI)
    return wsf.astype(MM_DTYPE), bsp


def woodbury_glow_forward(x, params, n_bits=8):
    """Forward (reverse=False) pass of WoodburyGlow; returns (z, nll)."""
    B, C0, H0, W0 = x.shape
    pixels = C0 * H0 * W0
    n_bins = float(2.0 ** n_bits)
    logdet = jnp.full((B,), -np.log(n_bins) * pixels, dtype=jnp.float32)

    z = x
    L = len(params['levels'])
    zslab = vmask = None
    C = H = W = Chp = None
    for li, level in enumerate(params['levels']):
        z = squeeze2d(z, 2)
        _, C, H, W = z.shape
        Ch = C // 2
        Chp = _round_up(Ch, 8)
        Wp2 = W + 2
        Np = _round_up((H + 2) * (W + 2), 128)
        vmask = _make_lane_mask(H, W, Np)
        zslab = to_slab(z, Ch, Chp, Np)

        ps, indep_ld = _prep_level(level, C, H, W, Chp, Np)
        zslab, ld = _level_call(zslab, ps, vmask, Wp2=Wp2, Chp=Chp)
        logdet = logdet + indep_ld + ld.sum(axis=(1, 2))

        if level['split'] is not None:
            wsf, bsp = _prep_split(level['split'], C, Chp)
            lp = _split_call(zslab, wsf, bsp, vmask, Wp2=Wp2, Chp=Chp)
            logdet = logdet + lp.sum(axis=(1, 2))
            C = Ch                                           # keep z1 only
        if li < L - 1:
            keep = (np.arange(C) if level['split'] is not None else
                    np.concatenate([np.arange(C // 2), np.arange(Chp, Chp + C // 2)]))
            z = from_slab(zslab, keep, H, W)

    # Top prior (learn_top=False -> zero mean / zero logs)
    chan_rows = np.concatenate([np.arange(C // 2), np.arange(Chp, Chp + C - C // 2)])
    cm = np.zeros((zslab.shape[1], 1), np.float32)
    cm[chan_rows, 0] = 1.0
    lp_top = _prior_call(zslab, jnp.asarray(cm) * vmask)
    objective = logdet + lp_top.sum(axis=(1, 2))
    nll = -objective / float(np.log(2.0) * pixels)
    return from_slab(zslab, chan_rows, H, W), nll


# ----------------------------------------------------------------------------
# Deterministic parameter initialization (shapes as in the PyTorch __init__)
# ----------------------------------------------------------------------------
def init_params(key, image_shape, hidden_channels, K, L, d_c, d_s):
    C, H, W = image_shape
    levels = []
    for l in range(L):
        C, H, W = C * 4, H // 2, W // 2
        N = H * W
        steps = []
        for _ in range(K):
            key, *ks = jax.random.split(key, 10)
            steps.append({
                'an_bias': 0.05 * jax.random.normal(ks[0], (C, 1), jnp.float32),
                'an_logs': 0.05 * jax.random.normal(ks[1], (C, 1), jnp.float32),
                'uc': 0.05 * jax.random.normal(ks[2], (C, d_c[l]), jnp.float32),
                'vc': 0.05 * jax.random.normal(ks[3], (d_c[l], C), jnp.float32),
                'us': 0.05 * jax.random.normal(ks[4], (N, d_s[l]), jnp.float32),
                'vs': 0.05 * jax.random.normal(ks[5], (d_s[l], N), jnp.float32),
                'w1': 0.05 * jax.random.normal(ks[6], (hidden_channels, C // 2, 3, 3), jnp.float32),
                'b1': jnp.zeros((hidden_channels,), jnp.float32),
                'w2': 0.05 * jax.random.normal(ks[7], (hidden_channels, hidden_channels, 1, 1), jnp.float32),
                'b2': jnp.zeros((hidden_channels,), jnp.float32),
                'w3': 0.02 * jax.random.normal(ks[8], (C, hidden_channels, 3, 3), jnp.float32),
                'b3': jnp.zeros((C,), jnp.float32),
                'logs3': jnp.zeros((C,), jnp.float32),
            })
        split = None
        if l < L - 1:
            key, k1 = jax.random.split(key)
            split = {
                'w_sp': 0.02 * jax.random.normal(k1, (C, C // 2, 3, 3), jnp.float32),
                'b_sp': jnp.zeros((C,), jnp.float32),
                'logs_sp': jnp.zeros((C,), jnp.float32),
            }
            C = C // 2
        levels.append({'steps': steps, 'split': split})
    return {'levels': levels}


if __name__ == "__main__":
    key = jax.random.PRNGKey(0)
    kx, kp = jax.random.split(key)

    B = 2
    image_shape = (3, 16, 16)       # (C, H, W), C must be 1 or 3
    hidden_channels = 16
    K, L = 2, 2                     # flow_depth, num_levels
    d_c = [4, 4]                    # Woodbury channel ranks per level
    d_s = [4, 4]                    # Woodbury spatial ranks per level

    x = jax.random.uniform(kx, (B,) + image_shape, dtype=jnp.float32)
    params = init_params(kp, image_shape, hidden_channels, K, L, d_c, d_s)

    fwd = jax.jit(functools.partial(woodbury_glow_forward, n_bits=8))
    z, nll = fwd(x, params)
    jax.block_until_ready((z, nll))

    assert z.shape == (B, 24, 4, 4) and nll.shape == (B,)
    assert bool(jnp.all(jnp.isfinite(z))) and bool(jnp.all(jnp.isfinite(nll)))
    print("KERNEL_OK")
</pallas_src>

<mosaic_0001>
module attributes {stable_mosaic.version = 11 : i64} {
  func.func @_level_kernel(%arg0: i32, %arg1: i32, %arg2: memref<1x16x128xf32, #tpu.memory_space<vmem>>, %arg3: memref<1x16x16xbf16, #tpu.memory_space<vmem>>, %arg4: memref<1x16x1xf32, #tpu.memory_space<vmem>>, %arg5: memref<1x128x128xbf16, #tpu.memory_space<vmem>>, %arg6: memref<1x16x72xbf16, #tpu.memory_space<vmem>>, %arg7: memref<1x16x1xf32, #tpu.memory_space<vmem>>, %arg8: memref<1x16x16xbf16, #tpu.memory_space<vmem>>, %arg9: memref<1x16x1xf32, #tpu.memory_space<vmem>>, %arg10: memref<1x16x144xbf16, #tpu.memory_space<vmem>>, %arg11: memref<1x16x1xf32, #tpu.memory_space<vmem>>, %arg12: memref<1x128xf32, #tpu.memory_space<vmem>>, %arg13: memref<1x16x128xf32, #tpu.memory_space<vmem>>, %arg14: memref<1x1x128xf32, #tpu.memory_space<vmem>>) attributes {dimension_semantics = [#tpu.dimension_semantics<parallel>, #tpu.dimension_semantics<arbitrary>], iteration_bounds = array<i64: 2, 2>, scalar_prefetch = 0 : i64, scratch_operands = 0 : i64, tpu.core_type = #tpu.core_type<tc>, window_params = [{transform_indices = @transform_0, window_bounds = array<i64: 1, 16, 128>}, {transform_indices = @transform_1, window_bounds = array<i64: 1, 16, 16>}, {transform_indices = @transform_2, window_bounds = array<i64: 1, 16, 1>}, {transform_indices = @transform_3, window_bounds = array<i64: 1, 128, 128>}, {transform_indices = @transform_4, window_bounds = array<i64: 1, 16, 72>}, {transform_indices = @transform_5, window_bounds = array<i64: 1, 16, 1>}, {transform_indices = @transform_6, window_bounds = array<i64: 1, 16, 16>}, {transform_indices = @transform_7, window_bounds = array<i64: 1, 16, 1>}, {transform_indices = @transform_8, window_bounds = array<i64: 1, 16, 144>}, {transform_indices = @transform_9, window_bounds = array<i64: 1, 16, 1>}, {pipeline_mode = #tpu.pipeline_mode<synchronous>, transform_indices = @transform_10, window_bounds = array<i64: 1, 128>}, {transform_indices = @transform_11, window_bounds = array<i64: 1, 16, 128>}, {transform_indices = @transform_12, window_bounds = array<i64: 1, 1, 128>}]} {
    %c0_i32 = arith.constant 0 : i32
    %0 = arith.cmpi eq, %arg1, %c0_i32 : i32
    %1 = arith.extui %0 : i1 to i32
    %c0_i32_0 = arith.constant 0 : i32
    %2 = arith.cmpi ne, %1, %c0_i32_0 : i32
    scf.if %2 {
      %c0_64 = arith.constant 0 : index
      %c0_65 = arith.constant 0 : index
      %c0_66 = arith.constant 0 : index
      %107 = vector.load %arg2[%c0_64, %c0_65, %c0_66] : memref<1x16x128xf32, #tpu.memory_space<vmem>>, vector<1x16x128xf32>
      %108 = vector.shape_cast %107 : vector<1x16x128xf32> to vector<16x128xf32>
      %c0_67 = arith.constant 0 : index
      %c0_68 = arith.constant 0 : index
      %c0_69 = arith.constant 0 : index
      %109 = vector.load %arg13[%c0_67, %c0_68, %c0_69] : memref<1x16x128xf32, #tpu.memory_space<vmem>>, vector<1x16x128xf32>
      %110 = vector.shape_cast %109 : vector<1x16x128xf32> to vector<16x128xf32>
      %111 = vector.shape_cast %108 : vector<16x128xf32> to vector<1x16x128xf32>
      tpu.vector_store %arg13[%c0_67, %c0_68, %c0_69], %111 {strides = array<i32>} : memref<1x16x128xf32, #tpu.memory_space<vmem>>, vector<1x16x128xf32>,
      %cst_70 = arith.constant 0.000000e+00 : f32
      %112 = vector.broadcast %cst_70 : f32 to vector<1x128xf32>
      %c0_71 = arith.constant 0 : index
      %c0_72 = arith.constant 0 : index
      %c0_73 = arith.constant 0 : index
      %113 = vector.load %arg14[%c0_71, %c0_72, %c0_73] : memref<1x1x128xf32, #tpu.memory_space<vmem>>, vector<1x1x128xf32>
      %114 = vector.shape_cast %113 : vector<1x1x128xf32> to vector<1x128xf32>
      %115 = vector.shape_cast %112 : vector<1x128xf32> to vector<1x1x128xf32>
      tpu.vector_store %arg14[%c0_71, %c0_72, %c0_73], %115 {strides = array<i32>} : memref<1x1x128xf32, #tpu.memory_space<vmem>>, vector<1x1x128xf32>,
    } else {
    }
    %c0 = arith.constant 0 : index
    %c0_1 = arith.constant 0 : index
    %3 = vector.load %arg12[%c0, %c0_1] : memref<1x128xf32, #tpu.memory_space<vmem>>, vector<1x128xf32>
    %c0_2 = arith.constant 0 : index
    %c0_3 = arith.constant 0 : index
    %c0_4 = arith.constant 0 : index
    %4 = vector.load %arg13[%c0_2, %c0_3, %c0_4] : memref<1x16x128xf32, #tpu.memory_space<vmem>>, vector<1x16x128xf32>
    %5 = vector.shape_cast %4 : vector<1x16x128xf32> to vector<16x128xf32>
    %c0_5 = arith.constant 0 : index
    %c0_6 = arith.constant 0 : index
    %c0_7 = arith.constant 0 : index
    %6 = vector.load %arg3[%c0_5, %c0_6, %c0_7] : memref<1x16x16xbf16, #tpu.memory_space<vmem>>, vector<1x16x16xbf16>
    %7 = vector.shape_cast %6 : vector<1x16x16xbf16> to vector<16x16xbf16>
    %8 = arith.truncf %5 : vector<16x128xf32> to vector<16x128xbf16>
    %cst = arith.constant dense<0.000000e+00> : vector<16x128xf32>
    %9 = tpu.matmul %7, %8, %cst {dimension_numbers = #tpu.dot_dimension_numbers<[1], [0], [0], [1], [0, 0, 1, 1], [], []>} : vector<16x16xbf16>, vector<16x128xbf16>, vector<16x128xf32> -> vector<16x128xf32>
    %c0_8 = arith.constant 0 : index
    %c0_9 = arith.constant 0 : index
    %c0_10 = arith.constant 0 : index
    %10 = vector.load %arg4[%c0_8, %c0_9, %c0_10] : memref<1x16x1xf32, #tpu.memory_space<vmem>>, vector<1x16x1xf32>
    %11 = vector.shape_cast %10 : vector<1x16x1xf32> to vector<16x1xf32>
    %12 = vector.broadcast %11 : vector<16x1xf32> to vector<16x128xf32>
    %13 = arith.addf %9, %12 : vector<16x128xf32>
    %c0_11 = arith.constant 0 : index
    %c0_12 = arith.constant 0 : index
    %c0_13 = arith.constant 0 : index
    %14 = vector.load %arg5[%c0_11, %c0_12, %c0_13] : memref<1x128x128xbf16, #tpu.memory_space<vmem>>, vector<1x128x128xbf16>
    %15 = vector.shape_cast %14 : vector<1x128x128xbf16> to vector<128x128xbf16>
    %16 = arith.truncf %13 : vector<16x128xf32> to vector<16x128xbf16>
    %cst_14 = arith.constant dense<0.000000e+00> : vector<16x128xf32>
    %17 = tpu.matmul %16, %15, %cst_14 {dimension_numbers = #tpu.dot_dimension_numbers<[1], [0], [0], [1], [0, 0, 1, 1], [], []>} : vector<16x128xbf16>, vector<128x128xbf16>, vector<16x128xf32> -> vector<16x128xf32>
    %18 = vector.extract_strided_slice %17 {offsets = [0, 0], sizes = [8, 128], strides = [1, 1]} : vector<16x128xf32> to vector<8x128xf32>
    %19 = vector.extract_strided_slice %17 {offsets = [8, 0], sizes = [8, 128], strides = [1, 1]} : vector<16x128xf32> to vector<8x128xf32>
    %c0_15 = arith.constant 0 : index
    %c0_16 = arith.constant 0 : index
    %c0_17 = arith.constant 0 : index
    %20 = vector.load %arg6[%c0_15, %c0_16, %c0_17] : memref<1x16x72xbf16, #tpu.memory_space<vmem>>, vector<1x16x72xbf16>
    %21 = vector.shape_cast %20 : vector<1x16x72xbf16> to vector<16x72xbf16>
    %c0_18 = arith.constant 0 : index
    %c0_19 = arith.constant 0 : index
    %c0_20 = arith.constant 0 : index
    %22 = vector.load %arg7[%c0_18, %c0_19, %c0_20] : memref<1x16x1xf32, #tpu.memory_space<vmem>>, vector<1x16x1xf32>
    %23 = vector.shape_cast %22 : vector<1x16x1xf32> to vector<16x1xf32>
    %c11_i32 = arith.constant 11 : i32
    %24 = tpu.dynamic_rotate %18 by %c11_i32 dim 1 : vector<8x128xf32>, i32 -> vector<8x128xf32>
    %c10_i32 = arith.constant 10 : i32
    %25 = tpu.dynamic_rotate %18 by %c10_i32 dim 1 : vector<8x128xf32>, i32 -> vector<8x128xf32>
    %c9_i32 = arith.constant 9 : i32
    %26 = tpu.dynamic_rotate %18 by %c9_i32 dim 1 : vector<8x128xf32>, i32 -> vector<8x128xf32>
    %c1_i32 = arith.constant 1 : i32
    %27 = tpu.dynamic_rotate %18 by %c1_i32 dim 1 : vector<8x128xf32>, i32 -> vector<8x128xf32>
    %c127_i32 = arith.constant 127 : i32
    %28 = tpu.dynamic_rotate %18 by %c127_i32 dim 1 : vector<8x128xf32>, i32 -> vector<8x128xf32>
    %c119_i32 = arith.constant 119 : i32
    %29 = tpu.dynamic_rotate %18 by %c119_i32 dim 1 : vector<8x128xf32>, i32 -> vector<8x128xf32>
    %c118_i32 = arith.constant 118 : i32
    %30 = tpu.dynamic_rotate %18 by %c118_i32 dim 1 : vector<8x128xf32>, i32 -> vector<8x128xf32>
    %c117_i32 = arith.constant 117 : i32
    %31 = tpu.dynamic_rotate %18 by %c117_i32 dim 1 : vector<8x128xf32>, i32 -> vector<8x128xf32>
    %32 = tpu.concatenate %24, %25, %26, %27, %18, %28, %29, %30, %31 in 0 : vector<8x128xf32>, vector<8x128xf32>, vector<8x128xf32>, vector<8x128xf32>, vector<8x128xf32>, vector<8x128xf32>, vector<8x128xf32>, vector<8x128xf32>, vector<8x128xf32> -> vector<72x128xf32>
    %33 = arith.truncf %32 : vector<72x128xf32> to vector<72x128xbf16>
    %cst_21 = arith.constant dense<0.000000e+00> : vector<16x128xf32>
    %34 = tpu.matmul %21, %33, %cst_21 {dimension_numbers = #tpu.dot_dimension_numbers<[1], [0], [0], [1], [0, 0, 1, 1], [], []>} : vector<16x72xbf16>, vector<72x128xbf16>, vector<16x128xf32> -> vector<16x128xf32>
    %35 = vector.broadcast %23 : vector<16x1xf32> to vector<16x128xf32>
    %36 = arith.addf %34, %35 : vector<16x128xf32>
    %cst_22 = arith.constant 0.000000e+00 : f32
    %37 = vector.broadcast %cst_22 : f32 to vector<16x128xf32>
    %38 = arith.maximumf %36, %37 : vector<16x128xf32>
    %c0_23 = arith.constant 0 : index
    %c0_24 = arith.constant 0 : index
    %c0_25 = arith.constant 0 : index
    %39 = vector.load %arg8[%c0_23, %c0_24, %c0_25] : memref<1x16x16xbf16, #tpu.memory_space<vmem>>, vector<1x16x16xbf16>
    %40 = vector.shape_cast %39 : vector<1x16x16xbf16> to vector<16x16xbf16>
    %41 = arith.truncf %38 : vector<16x128xf32> to vector<16x128xbf16>
    %cst_26 = arith.constant dense<0.000000e+00> : vector<16x128xf32>
    %42 = tpu.matmul %40, %41, %cst_26 {dimension_numbers = #tpu.dot_dimension_numbers<[1], [0], [0], [1], [0, 0, 1, 1], [], []>} : vector<16x16xbf16>, vector<16x128xbf16>, vector<16x128xf32> -> vector<16x128xf32>
    %c0_27 = arith.constant 0 : index
    %c0_28 = arith.constant 0 : index
    %c0_29 = arith.constant 0 : index
    %43 = vector.load %arg9[%c0_27, %c0_28, %c0_29] : memref<1x16x1xf32, #tpu.memory_space<vmem>>, vector<1x16x1xf32>
    %44 = vector.shape_cast %43 : vector<1x16x1xf32> to vector<16x1xf32>
    %45 = vector.broadcast %44 : vector<16x1xf32> to vector<16x128xf32>
    %46 = arith.addf %42, %45 : vector<16x128xf32>
    %cst_30 = arith.constant 0.000000e+00 : f32
    %47 = vector.broadcast %cst_30 : f32 to vector<16x128xf32>
    %48 = arith.maximumf %46, %47 : vector<16x128xf32>
    %49 = vector.broadcast %3 : vector<1x128xf32> to vector<16x128xf32>
    %50 = arith.mulf %48, %49 : vector<16x128xf32>
    %c0_31 = arith.constant 0 : index
    %c0_32 = arith.constant 0 : index
    %c0_33 = arith.constant 0 : index
    %51 = vector.load %arg10[%c0_31, %c0_32, %c0_33] : memref<1x16x144xbf16, #tpu.memory_space<vmem>>, vector<1x16x144xbf16>
    %52 = vector.shape_cast %51 : vector<1x16x144xbf16> to vector<16x144xbf16>
    %c0_34 = arith.constant 0 : index
    %c0_35 = arith.constant 0 : index
    %c0_36 = arith.constant 0 : index
    %53 = vector.load %arg11[%c0_34, %c0_35, %c0_36] : memref<1x16x1xf32, #tpu.memory_space<vmem>>, vector<1x16x1xf32>
    %54 = vector.shape_cast %53 : vector<1x16x1xf32> to vector<16x1xf32>
    %c11_i32_37 = arith.constant 11 : i32
    %55 = tpu.dynamic_rotate %50 by %c11_i32_37 dim 1 : vector<16x128xf32>, i32 -> vector<16x128xf32>
    %c10_i32_38 = arith.constant 10 : i32
    %56 = tpu.dynamic_rotate %50 by %c10_i32_38 dim 1 : vector<16x128xf32>, i32 -> vector<16x128xf32>
    %c9_i32_39 = arith.constant 9 : i32
    %57 = tpu.dynamic_rotate %50 by %c9_i32_39 dim 1 : vector<16x128xf32>, i32 -> vector<16x128xf32>
    %c1_i32_40 = arith.constant 1 : i32
    %58 = tpu.dynamic_rotate %50 by %c1_i32_40 dim 1 : vector<16x128xf32>, i32 -> vector<16x128xf32>
    %c127_i32_41 = arith.constant 127 : i32
    %59 = tpu.dynamic_rotate %50 by %c127_i32_41 dim 1 : vector<16x128xf32>, i32 -> vector<16x128xf32>
    %c119_i32_42 = arith.constant 119 : i32
    %60 = tpu.dynamic_rotate %50 by %c119_i32_42 dim 1 : vector<16x128xf32>, i32 -> vector<16x128xf32>
    %c118_i32_43 = arith.constant 118 : i32
    %61 = tpu.dynamic_rotate %50 by %c118_i32_43 dim 1 : vector<16x128xf32>, i32 -> vector<16x128xf32>
    %c117_i32_44 = arith.constant 117 : i32
    %62 = tpu.dynamic_rotate %50 by %c117_i32_44 dim 1 : vector<16x128xf32>, i32 -> vector<16x128xf32>
    %63 = tpu.concatenate %55, %56, %57, %58, %50, %59, %60, %61, %62 in 0 : vector<16x128xf32>, vector<16x128xf32>, vector<16x128xf32>, vector<16x128xf32>, vector<16x128xf32>, vector<16x128xf32>, vector<16x128xf32>, vector<16x128xf32>, vector<16x128xf32> -> vector<144x128xf32>
    %64 = arith.truncf %63 : vector<144x128xf32> to vector<144x128xbf16>
    %cst_45 = arith.constant dense<0.000000e+00> : vector<16x128xf32>
    %65 = tpu.matmul %52, %64, %cst_45 {dimension_numbers = #tpu.dot_dimension_numbers<[1], [0], [0], [1], [0, 0, 1, 1], [], []>} : vector<16x144xbf16>, vector<144x128xbf16>, vector<16x128xf32> -> vector<16x128xf32>
    %66 = vector.broadcast %54 : vector<16x1xf32> to vector<16x128xf32>
    %67 = arith.addf %65, %66 : vector<16x128xf32>
    %68 = vector.extract_strided_slice %67 {offsets = [0, 0], sizes = [8, 128], strides = [1, 1]} : vector<16x128xf32> to vector<8x128xf32>
    %69 = vector.extract_strided_slice %67 {offsets = [8, 0], sizes = [8, 128], strides = [1, 1]} : vector<16x128xf32> to vector<8x128xf32>
    %cst_46 = arith.constant 2.000000e+00 : f32
    %70 = vector.broadcast %cst_46 : f32 to vector<8x128xf32>
    %71 = arith.addf %69, %70 : vector<8x128xf32>
    %72 = math.absf %71 : vector<8x128xf32>
    %cst_47 = arith.constant 0.000000e+00 : f32
    %73 = vector.broadcast %cst_47 : f32 to vector<8x128xf32>
    %74 = arith.subf %73, %72 : vector<8x128xf32>
    %75 = math.exp %74 : vector<8x128xf32>
    %cst_48 = arith.constant 1.000000e+00 : f32
    %76 = vector.broadcast %cst_48 : f32 to vector<8x128xf32>
    %77 = arith.addf %76, %75 : vector<8x128xf32>
    %78 = tpu.reciprocal %77 {approx = true} : vector<8x128xf32> -> vector<8x128xf32>
    %cst_49 = arith.constant 0.000000e+00 : f32
    %79 = vector.broadcast %cst_49 : f32 to vector<8x128xf32>
    %80 = arith.cmpf oge, %71, %79 : vector<8x128xf32>
    %81 = arith.mulf %75, %78 : vector<8x128xf32>
    %82 = arith.select %80, %78, %81 : vector<8x128xi1>, vector<8x128xf32>
    %cst_50 = arith.constant 0.000000e+00 : f32
    %83 = vector.broadcast %cst_50 : f32 to vector<8x128xf32>
    %84 = arith.minimumf %71, %83 : vector<8x128xf32>
    %cst_51 = arith.constant 1.000000e+00 : f32
    %85 = vector.broadcast %cst_51 : f32 to vector<8x128xf32>
    %86 = arith.addf %85, %75 : vector<8x128xf32>
    %87 = math.log %86 : vector<8x128xf32>
    %88 = arith.subf %84, %87 : vector<8x128xf32>
    %c0_52 = arith.constant 0 : index
    %c0_53 = arith.constant 0 : index
    %c0_54 = arith.constant 0 : index
    %89 = vector.load %arg13[%c0_52, %c0_53, %c0_54] : memref<1x16x128xf32, #tpu.memory_space<vmem>>, vector<1x8x128xf32>
    %90 = vector.shape_cast %89 : vector<1x8x128xf32> to vector<8x128xf32>
    %91 = vector.shape_cast %18 : vector<8x128xf32> to vector<1x8x128xf32>
    tpu.vector_store %arg13[%c0_52, %c0_53, %c0_54], %91 {strides = array<i32>} : memref<1x16x128xf32, #tpu.memory_space<vmem>>, vector<1x8x128xf32>,
    %92 = arith.addf %19, %68 : vector<8x128xf32>
    %93 = arith.mulf %92, %82 : vector<8x128xf32>
    %c0_55 = arith.constant 0 : index
    %c8 = arith.constant 8 : index
    %c0_56 = arith.constant 0 : index
    %94 = vector.load %arg13[%c0_55, %c8, %c0_56] : memref<1x16x128xf32, #tpu.memory_space<vmem>>, vector<1x8x128xf32>
    %95 = vector.shape_cast %94 : vector<1x8x128xf32> to vector<8x128xf32>
    %96 = vector.shape_cast %93 : vector<8x128xf32> to vector<1x8x128xf32>
    tpu.vector_store %arg13[%c0_55, %c8, %c0_56], %96 {strides = array<i32>} : memref<1x16x128xf32, #tpu.memory_space<vmem>>, vector<1x8x128xf32>,
    %c0_57 = arith.constant 0 : index
    %c0_58 = arith.constant 0 : index
    %c0_59 = arith.constant 0 : index
    %97 = vector.load %arg14[%c0_57, %c0_58, %c0_59] : memref<1x1x128xf32, #tpu.memory_space<vmem>>, vector<1x1x128xf32>
    %98 = vector.shape_cast %97 : vector<1x1x128xf32> to vector<1x128xf32>
    %99 = vector.broadcast %3 : vector<1x128xf32> to vector<8x128xf32>
    %100 = arith.mulf %88, %99 : vector<8x128xf32>
    %cst_60 = arith.constant dense<0.000000e+00> : vector<128xf32>
    %101 = vector.multi_reduction <add>, %100, %cst_60 [0] : vector<8x128xf32> to vector<128xf32>
    %102 = vector.shape_cast %101 : vector<128xf32> to vector<1x128xf32>
    %103 = arith.addf %98, %102 : vector<1x128xf32>
    %c0_61 = arith.constant 0 : index
    %c0_62 = arith.constant 0 : index
    %c0_63 = arith.constant 0 : index
    %104 = vector.load %arg14[%c0_61, %c0_62, %c0_63] : memref<1x1x128xf32, #tpu.memory_space<vmem>>, vector<1x1x128xf32>
    %105 = vector.shape_cast %104 : vector<1x1x128xf32> to vector<1x128xf32>
    %106 = vector.shape_cast %103 : vector<1x128xf32> to vector<1x1x128xf32>
    tpu.vector_store %arg14[%c0_61, %c0_62, %c0_63], %106 {strides = array<i32>} : memref<1x1x128xf32, #tpu.memory_space<vmem>>, vector<1x1x128xf32>,
    return
  }
  func.func @transform_0(%arg0: i32, %arg1: i32) -> (i32, i32, i32) {
    %c0_i32 = arith.constant 0 : i32
    %c0_i32_0 = arith.constant 0 : i32
    %c0_i32_1 = arith.constant 0 : i32
    return %arg0, %c0_i32, %c0_i32_0 : i32, i32, i32
  }
  func.func @transform_1(%arg0: i32, %arg1: i32) -> (i32, i32, i32) {
    %c0_i32 = arith.constant 0 : i32
    %c0_i32_0 = arith.constant 0 : i32
    %c0_i32_1 = arith.constant 0 : i32
    return %arg1, %c0_i32, %c0_i32_0 : i32, i32, i32
  }
  func.func @transform_2(%arg0: i32, %arg1: i32) -> (i32, i32, i32) {
    %c0_i32 = arith.constant 0 : i32
    %c0_i32_0 = arith.constant 0 : i32
    %c0_i32_1 = arith.constant 0 : i32
    return %arg1, %c0_i32, %c0_i32_0 : i32, i32, i32
  }
  func.func @transform_3(%arg0: i32, %arg1: i32) -> (i32, i32, i32) {
    %c0_i32 = arith.constant 0 : i32
    %c0_i32_0 = arith.constant 0 : i32
    %c0_i32_1 = arith.constant 0 : i32
    return %arg1, %c0_i32, %c0_i32_0 : i32, i32, i32
  }
  func.func @transform_4(%arg0: i32, %arg1: i32) -> (i32, i32, i32) {
    %c0_i32 = arith.constant 0 : i32
    %c0_i32_0 = arith.constant 0 : i32
    %c0_i32_1 = arith.constant 0 : i32
    return %arg1, %c0_i32, %c0_i32_0 : i32, i32, i32
  }
  func.func @transform_5(%arg0: i32, %arg1: i32) -> (i32, i32, i32) {
    %c0_i32 = arith.constant 0 : i32
    %c0_i32_0 = arith.constant 0 : i32
    %c0_i32_1 = arith.constant 0 : i32
    return %arg1, %c0_i32, %c0_i32_0 : i32, i32, i32
  }
  func.func @transform_6(%arg0: i32, %arg1: i32) -> (i32, i32, i32) {
    %c0_i32 = arith.constant 0 : i32
    %c0_i32_0 = arith.constant 0 : i32
    %c0_i32_1 = arith.constant 0 : i32
    return %arg1, %c0_i32, %c0_i32_0 : i32, i32, i32
  }
  func.func @transform_7(%arg0: i32, %arg1: i32) -> (i32, i32, i32) {
    %c0_i32 = arith.constant 0 : i32
    %c0_i32_0 = arith.constant 0 : i32
    %c0_i32_1 = arith.constant 0 : i32
    return %arg1, %c0_i32, %c0_i32_0 : i32, i32, i32
  }
  func.func @transform_8(%arg0: i32, %arg1: i32) -> (i32, i32, i32) {
    %c0_i32 = arith.constant 0 : i32
    %c0_i32_0 = arith.constant 0 : i32
    %c0_i32_1 = arith.constant 0 : i32
    return %arg1, %c0_i32, %c0_i32_0 : i32, i32, i32
  }
  func.func @transform_9(%arg0: i32, %arg1: i32) -> (i32, i32, i32) {
    %c0_i32 = arith.constant 0 : i32
    %c0_i32_0 = arith.constant 0 : i32
    %c0_i32_1 = arith.constant 0 : i32
    return %arg1, %c0_i32, %c0_i32_0 : i32, i32, i32
  }
  func.func @transform_10(%arg0: i32, %arg1: i32) -> (i32, i32) {
    %c0_i32 = arith.constant 0 : i32
    %c0_i32_0 = arith.constant 0 : i32
    %c0_i32_1 = arith.constant 0 : i32
    return %c0_i32, %c0_i32_0 : i32, i32
  }
  func.func @transform_11(%arg0: i32, %arg1: i32) -> (i32, i32, i32) {
    %c0_i32 = arith.constant 0 : i32
    %c0_i32_0 = arith.constant 0 : i32
    %c0_i32_1 = arith.constant 0 : i32
    return %arg0, %c0_i32, %c0_i32_0 : i32, i32, i32
  }
  func.func @transform_12(%arg0: i32, %arg1: i32) -> (i32, i32, i32) {
    %c0_i32 = arith.constant 0 : i32
    %c0_i32_0 = arith.constant 0 : i32
    %c0_i32_1 = arith.constant 0 : i32
    return %arg0, %c0_i32, %c0_i32_0 : i32, i32, i32
  }
}

module attributes {stable_mosaic.version = 11 : i64} {
  func.func @_level_kernel(%arg0: i32, %arg1: i32, %arg2: memref<1x32x128xf32, #tpu.memory_space<vmem>>, %arg3: memref<1x32x32xbf16, #tpu.memory_space<vmem>>, %arg4: memref<1x32x1xf32, #tpu.memory_space<vmem>>, %arg5: memref<1x128x128xbf16, #tpu.memory_space<vmem>>, %arg6: memref<1x16x144xbf16, #tpu.memory_space<vmem>>, %arg7: memref<1x16x1xf32, #tpu.memory_space<vmem>>, %arg8: memref<1x16x16xbf16, #tpu.memory_space<vmem>>, %arg9: memref<1x16x1xf32, #tpu.memory_space<vmem>>, %arg10: memref<1x32x144xbf16, #tpu.memory_space<vmem>>, %arg11: memref<1x32x1xf32, #tpu.memory_space<vmem>>, %arg12: memref<1x128xf32, #tpu.memory_space<vmem>>, %arg13: memref<1x32x128xf32, #tpu.memory_space<vmem>>, %arg14: memref<1x1x128xf32, #tpu.memory_space<vmem>>) attributes {dimension_semantics = [#tpu.dimension_semantics<parallel>, #tpu.dimension_semantics<arbitrary>], iteration_bounds = array<i64: 2, 2>, scalar_prefetch = 0 : i64, scratch_operands = 0 : i64, tpu.core_type = #tpu.core_type<tc>, window_params = [{transform_indices = @transform_0, window_bounds = array<i64: 1, 32, 128>}, {transform_indices = @transform_1, window_bounds = array<i64: 1, 32, 32>}, {transform_indices = @transform_2, window_bounds = array<i64: 1, 32, 1>}, {transform_indices = @transform_3, window_bounds = array<i64: 1, 128, 128>}, {transform_indices = @transform_4, window_bounds = array<i64: 1, 16, 144>}, {transform_indices = @transform_5, window_bounds = array<i64: 1, 16, 1>}, {transform_indices = @transform_6, window_bounds = array<i64: 1, 16, 16>}, {transform_indices = @transform_7, window_bounds = array<i64: 1, 16, 1>}, {transform_indices = @transform_8, window_bounds = array<i64: 1, 32, 144>}, {transform_indices = @transform_9, window_bounds = array<i64: 1, 32, 1>}, {pipeline_mode = #tpu.pipeline_mode<synchronous>, transform_indices = @transform_10, window_bounds = array<i64: 1, 128>}, {transform_indices = @transform_11, window_bounds = array<i64: 1, 32, 128>}, {transform_indices = @transform_12, window_bounds = array<i64: 1, 1, 128>}]} {
    %c0_i32 = arith.constant 0 : i32
    %0 = arith.cmpi eq, %arg1, %c0_i32 : i32
    %1 = arith.extui %0 : i1 to i32
    %c0_i32_0 = arith.constant 0 : i32
    %2 = arith.cmpi ne, %1, %c0_i32_0 : i32
    scf.if %2 {
      %c0_64 = arith.constant 0 : index
      %c0_65 = arith.constant 0 : index
      %c0_66 = arith.constant 0 : index
      %107 = vector.load %arg2[%c0_64, %c0_65, %c0_66] : memref<1x32x128xf32, #tpu.memory_space<vmem>>, vector<1x32x128xf32>
      %108 = vector.shape_cast %107 : vector<1x32x128xf32> to vector<32x128xf32>
      %c0_67 = arith.constant 0 : index
      %c0_68 = arith.constant 0 : index
      %c0_69 = arith.constant 0 : index
      %109 = vector.load %arg13[%c0_67, %c0_68, %c0_69] : memref<1x32x128xf32, #tpu.memory_space<vmem>>, vector<1x32x128xf32>
      %110 = vector.shape_cast %109 : vector<1x32x128xf32> to vector<32x128xf32>
      %111 = vector.shape_cast %108 : vector<32x128xf32> to vector<1x32x128xf32>
      tpu.vector_store %arg13[%c0_67, %c0_68, %c0_69], %111 {strides = array<i32>} : memref<1x32x128xf32, #tpu.memory_space<vmem>>, vector<1x32x128xf32>,
      %cst_70 = arith.constant 0.000000e+00 : f32
      %112 = vector.broadcast %cst_70 : f32 to vector<1x128xf32>
      %c0_71 = arith.constant 0 : index
      %c0_72 = arith.constant 0 : index
      %c0_73 = arith.constant 0 : index
      %113 = vector.load %arg14[%c0_71, %c0_72, %c0_73] : memref<1x1x128xf32, #tpu.memory_space<vmem>>, vector<1x1x128xf32>
      %114 = vector.shape_cast %113 : vector<1x1x128xf32> to vector<1x128xf32>
      %115 = vector.shape_cast %112 : vector<1x128xf32> to vector<1x1x128xf32>
      tpu.vector_store %arg14[%c0_71, %c0_72, %c0_73], %115 {strides = array<i32>} : memref<1x1x128xf32, #tpu.memory_space<vmem>>, vector<1x1x128xf32>,
    } else {
    }
    %c0 = arith.constant 0 : index
    %c0_1 = arith.constant 0 : index
    %3 = vector.load %arg12[%c0, %c0_1] : memref<1x128xf32, #tpu.memory_space<vmem>>, vector<1x128xf32>
    %c0_2 = arith.constant 0 : index
    %c0_3 = arith.constant 0 : index
    %c0_4 = arith.constant 0 : index
    %4 = vector.load %arg13[%c0_2, %c0_3, %c0_4] : memref<1x32x128xf32, #tpu.memory_space<vmem>>, vector<1x32x128xf32>
    %5 = vector.shape_cast %4 : vector<1x32x128xf32> to vector<32x128xf32>
    %c0_5 = arith.constant 0 : index
    %c0_6 = arith.constant 0 : index
    %c0_7 = arith.constant 0 : index
    %6 = vector.load %arg3[%c0_5, %c0_6, %c0_7] : memref<1x32x32xbf16, #tpu.memory_space<vmem>>, vector<1x32x32xbf16>
    %7 = vector.shape_cast %6 : vector<1x32x32xbf16> to vector<32x32xbf16>
    %8 = arith.truncf %5 : vector<32x128xf32> to vector<32x128xbf16>
    %cst = arith.constant dense<0.000000e+00> : vector<32x128xf32>
    %9 = tpu.matmul %7, %8, %cst {dimension_numbers = #tpu.dot_dimension_numbers<[1], [0], [0], [1], [0, 0, 1, 1], [], []>} : vector<32x32xbf16>, vector<32x128xbf16>, vector<32x128xf32> -> vector<32x128xf32>
    %c0_8 = arith.constant 0 : index
    %c0_9 = arith.constant 0 : index
    %c0_10 = arith.constant 0 : index
    %10 = vector.load %arg4[%c0_8, %c0_9, %c0_10] : memref<1x32x1xf32, #tpu.memory_space<vmem>>, vector<1x32x1xf32>
    %11 = vector.shape_cast %10 : vector<1x32x1xf32> to vector<32x1xf32>
    %12 = vector.broadcast %11 : vector<32x1xf32> to vector<32x128xf32>
    %13 = arith.addf %9, %12 : vector<32x128xf32>
    %c0_11 = arith.constant 0 : index
    %c0_12 = arith.constant 0 : index
    %c0_13 = arith.constant 0 : index
    %14 = vector.load %arg5[%c0_11, %c0_12, %c0_13] : memref<1x128x128xbf16, #tpu.memory_space<vmem>>, vector<1x128x128xbf16>
    %15 = vector.shape_cast %14 : vector<1x128x128xbf16> to vector<128x128xbf16>
    %16 = arith.truncf %13 : vector<32x128xf32> to vector<32x128xbf16>
    %cst_14 = arith.constant dense<0.000000e+00> : vector<32x128xf32>
    %17 = tpu.matmul %16, %15, %cst_14 {dimension_numbers = #tpu.dot_dimension_numbers<[1], [0], [0], [1], [0, 0, 1, 1], [], []>} : vector<32x128xbf16>, vector<128x128xbf16>, vector<32x128xf32> -> vector<32x128xf32>
    %18 = vector.extract_strided_slice %17 {offsets = [0, 0], sizes = [16, 128], strides = [1, 1]} : vector<32x128xf32> to vector<16x128xf32>
    %19 = vector.extract_strided_slice %17 {offsets = [16, 0], sizes = [16, 128], strides = [1, 1]} : vector<32x128xf32> to vector<16x128xf32>
    %c0_15 = arith.constant 0 : index
    %c0_16 = arith.constant 0 : index
    %c0_17 = arith.constant 0 : index
    %20 = vector.load %arg6[%c0_15, %c0_16, %c0_17] : memref<1x16x144xbf16, #tpu.memory_space<vmem>>, vector<1x16x144xbf16>
    %21 = vector.shape_cast %20 : vector<1x16x144xbf16> to vector<16x144xbf16>
    %c0_18 = arith.constant 0 : index
    %c0_19 = arith.constant 0 : index
    %c0_20 = arith.constant 0 : index
    %22 = vector.load %arg7[%c0_18, %c0_19, %c0_20] : memref<1x16x1xf32, #tpu.memory_space<vmem>>, vector<1x16x1xf32>
    %23 = vector.shape_cast %22 : vector<1x16x1xf32> to vector<16x1xf32>
    %c7_i32 = arith.constant 7 : i32
    %24 = tpu.dynamic_rotate %18 by %c7_i32 dim 1 : vector<16x128xf32>, i32 -> vector<16x128xf32>
    %c6_i32 = arith.constant 6 : i32
    %25 = tpu.dynamic_rotate %18 by %c6_i32 dim 1 : vector<16x128xf32>, i32 -> vector<16x128xf32>
    %c5_i32 = arith.constant 5 : i32
    %26 = tpu.dynamic_rotate %18 by %c5_i32 dim 1 : vector<16x128xf32>, i32 -> vector<16x128xf32>
    %c1_i32 = arith.constant 1 : i32
    %27 = tpu.dynamic_rotate %18 by %c1_i32 dim 1 : vector<16x128xf32>, i32 -> vector<16x128xf32>
    %c127_i32 = arith.constant 127 : i32
    %28 = tpu.dynamic_rotate %18 by %c127_i32 dim 1 : vector<16x128xf32>, i32 -> vector<16x128xf32>
    %c123_i32 = arith.constant 123 : i32
    %29 = tpu.dynamic_rotate %18 by %c123_i32 dim 1 : vector<16x128xf32>, i32 -> vector<16x128xf32>
    %c122_i32 = arith.constant 122 : i32
    %30 = tpu.dynamic_rotate %18 by %c122_i32 dim 1 : vector<16x128xf32>, i32 -> vector<16x128xf32>
    %c121_i32 = arith.constant 121 : i32
    %31 = tpu.dynamic_rotate %18 by %c121_i32 dim 1 : vector<16x128xf32>, i32 -> vector<16x128xf32>
    %32 = tpu.concatenate %24, %25, %26, %27, %18, %28, %29, %30, %31 in 0 : vector<16x128xf32>, vector<16x128xf32>, vector<16x128xf32>, vector<16x128xf32>, vector<16x128xf32>, vector<16x128xf32>, vector<16x128xf32>, vector<16x128xf32>, vector<16x128xf32> -> vector<144x128xf32>
    %33 = arith.truncf %32 : vector<144x128xf32> to vector<144x128xbf16>
    %cst_21 = arith.constant dense<0.000000e+00> : vector<16x128xf32>
    %34 = tpu.matmul %21, %33, %cst_21 {dimension_numbers = #tpu.dot_dimension_numbers<[1], [0], [0], [1], [0, 0, 1, 1], [], []>} : vector<16x144xbf16>, vector<144x128xbf16>, vector<16x128xf32> -> vector<16x128xf32>
    %35 = vector.broadcast %23 : vector<16x1xf32> to vector<16x128xf32>
    %36 = arith.addf %34, %35 : vector<16x128xf32>
    %cst_22 = arith.constant 0.000000e+00 : f32
    %37 = vector.broadcast %cst_22 : f32 to vector<16x128xf32>
    %38 = arith.maximumf %36, %37 : vector<16x128xf32>
    %c0_23 = arith.constant 0 : index
    %c0_24 = arith.constant 0 : index
    %c0_25 = arith.constant 0 : index
    %39 = vector.load %arg8[%c0_23, %c0_24, %c0_25] : memref<1x16x16xbf16, #tpu.memory_space<vmem>>, vector<1x16x16xbf16>
    %40 = vector.shape_cast %39 : vector<1x16x16xbf16> to vector<16x16xbf16>
    %41 = arith.truncf %38 : vector<16x128xf32> to vector<16x128xbf16>
    %cst_26 = arith.constant dense<0.000000e+00> : vector<16x128xf32>
    %42 = tpu.matmul %40, %41, %cst_26 {dimension_numbers = #tpu.dot_dimension_numbers<[1], [0], [0], [1], [0, 0, 1, 1], [], []>} : vector<16x16xbf16>, vector<16x128xbf16>, vector<16x128xf32> -> vector<16x128xf32>
    %c0_27 = arith.constant 0 : index
    %c0_28 = arith.constant 0 : index
    %c0_29 = arith.constant 0 : index
    %43 = vector.load %arg9[%c0_27, %c0_28, %c0_29] : memref<1x16x1xf32, #tpu.memory_space<vmem>>, vector<1x16x1xf32>
    %44 = vector.shape_cast %43 : vector<1x16x1xf32> to vector<16x1xf32>
    %45 = vector.broadcast %44 : vector<16x1xf32> to vector<16x128xf32>
    %46 = arith.addf %42, %45 : vector<16x128xf32>
    %cst_30 = arith.constant 0.000000e+00 : f32
    %47 = vector.broadcast %cst_30 : f32 to vector<16x128xf32>
    %48 = arith.maximumf %46, %47 : vector<16x128xf32>
    %49 = vector.broadcast %3 : vector<1x128xf32> to vector<16x128xf32>
    %50 = arith.mulf %48, %49 : vector<16x128xf32>
    %c0_31 = arith.constant 0 : index
    %c0_32 = arith.constant 0 : index
    %c0_33 = arith.constant 0 : index
    %51 = vector.load %arg10[%c0_31, %c0_32, %c0_33] : memref<1x32x144xbf16, #tpu.memory_space<vmem>>, vector<1x32x144xbf16>
    %52 = vector.shape_cast %51 : vector<1x32x144xbf16> to vector<32x144xbf16>
    %c0_34 = arith.constant 0 : index
    %c0_35 = arith.constant 0 : index
    %c0_36 = arith.constant 0 : index
    %53 = vector.load %arg11[%c0_34, %c0_35, %c0_36] : memref<1x32x1xf32, #tpu.memory_space<vmem>>, vector<1x32x1xf32>
    %54 = vector.shape_cast %53 : vector<1x32x1xf32> to vector<32x1xf32>
    %c7_i32_37 = arith.constant 7 : i32
    %55 = tpu.dynamic_rotate %50 by %c7_i32_37 dim 1 : vector<16x128xf32>, i32 -> vector<16x128xf32>
    %c6_i32_38 = arith.constant 6 : i32
    %56 = tpu.dynamic_rotate %50 by %c6_i32_38 dim 1 : vector<16x128xf32>, i32 -> vector<16x128xf32>
    %c5_i32_39 = arith.constant 5 : i32
    %57 = tpu.dynamic_rotate %50 by %c5_i32_39 dim 1 : vector<16x128xf32>, i32 -> vector<16x128xf32>
    %c1_i32_40 = arith.constant 1 : i32
    %58 = tpu.dynamic_rotate %50 by %c1_i32_40 dim 1 : vector<16x128xf32>, i32 -> vector<16x128xf32>
    %c127_i32_41 = arith.constant 127 : i32
    %59 = tpu.dynamic_rotate %50 by %c127_i32_41 dim 1 : vector<16x128xf32>, i32 -> vector<16x128xf32>
    %c123_i32_42 = arith.constant 123 : i32
    %60 = tpu.dynamic_rotate %50 by %c123_i32_42 dim 1 : vector<16x128xf32>, i32 -> vector<16x128xf32>
    %c122_i32_43 = arith.constant 122 : i32
    %61 = tpu.dynamic_rotate %50 by %c122_i32_43 dim 1 : vector<16x128xf32>, i32 -> vector<16x128xf32>
    %c121_i32_44 = arith.constant 121 : i32
    %62 = tpu.dynamic_rotate %50 by %c121_i32_44 dim 1 : vector<16x128xf32>, i32 -> vector<16x128xf32>
    %63 = tpu.concatenate %55, %56, %57, %58, %50, %59, %60, %61, %62 in 0 : vector<16x128xf32>, vector<16x128xf32>, vector<16x128xf32>, vector<16x128xf32>, vector<16x128xf32>, vector<16x128xf32>, vector<16x128xf32>, vector<16x128xf32>, vector<16x128xf32> -> vector<144x128xf32>
    %64 = arith.truncf %63 : vector<144x128xf32> to vector<144x128xbf16>
    %cst_45 = arith.constant dense<0.000000e+00> : vector<32x128xf32>
    %65 = tpu.matmul %52, %64, %cst_45 {dimension_numbers = #tpu.dot_dimension_numbers<[1], [0], [0], [1], [0, 0, 1, 1], [], []>} : vector<32x144xbf16>, vector<144x128xbf16>, vector<32x128xf32> -> vector<32x128xf32>
    %66 = vector.broadcast %54 : vector<32x1xf32> to vector<32x128xf32>
    %67 = arith.addf %65, %66 : vector<32x128xf32>
    %68 = vector.extract_strided_slice %67 {offsets = [0, 0], sizes = [16, 128], strides = [1, 1]} : vector<32x128xf32> to vector<16x128xf32>
    %69 = vector.extract_strided_slice %67 {offsets = [16, 0], sizes = [16, 128], strides = [1, 1]} : vector<32x128xf32> to vector<16x128xf32>
    %cst_46 = arith.constant 2.000000e+00 : f32
    %70 = vector.broadcast %cst_46 : f32 to vector<16x128xf32>
    %71 = arith.addf %69, %70 : vector<16x128xf32>
    %72 = math.absf %71 : vector<16x128xf32>
    %cst_47 = arith.constant 0.000000e+00 : f32
    %73 = vector.broadcast %cst_47 : f32 to vector<16x128xf32>
    %74 = arith.subf %73, %72 : vector<16x128xf32>
    %75 = math.exp %74 : vector<16x128xf32>
    %cst_48 = arith.constant 1.000000e+00 : f32
    %76 = vector.broadcast %cst_48 : f32 to vector<16x128xf32>
    %77 = arith.addf %76, %75 : vector<16x128xf32>
    %78 = tpu.reciprocal %77 {approx = true} : vector<16x128xf32> -> vector<16x128xf32>
    %cst_49 = arith.constant 0.000000e+00 : f32
    %79 = vector.broadcast %cst_49 : f32 to vector<16x128xf32>
    %80 = arith.cmpf oge, %71, %79 : vector<16x128xf32>
    %81 = arith.mulf %75, %78 : vector<16x128xf32>
    %82 = arith.select %80, %78, %81 : vector<16x128xi1>, vector<16x128xf32>
    %cst_50 = arith.constant 0.000000e+00 : f32
    %83 = vector.broadcast %cst_50 : f32 to vector<16x128xf32>
    %84 = arith.minimumf %71, %83 : vector<16x128xf32>
    %cst_51 = arith.constant 1.000000e+00 : f32
    %85 = vector.broadcast %cst_51 : f32 to vector<16x128xf32>
    %86 = arith.addf %85, %75 : vector<16x128xf32>
    %87 = math.log %86 : vector<16x128xf32>
    %88 = arith.subf %84, %87 : vector<16x128xf32>
    %c0_52 = arith.constant 0 : index
    %c0_53 = arith.constant 0 : index
    %c0_54 = arith.constant 0 : index
    %89 = vector.load %arg13[%c0_52, %c0_53, %c0_54] : memref<1x32x128xf32, #tpu.memory_space<vmem>>, vector<1x16x128xf32>
    %90 = vector.shape_cast %89 : vector<1x16x128xf32> to vector<16x128xf32>
    %91 = vector.shape_cast %18 : vector<16x128xf32> to vector<1x16x128xf32>
    tpu.vector_store %arg13[%c0_52, %c0_53, %c0_54], %91 {strides = array<i32>} : memref<1x32x128xf32, #tpu.memory_space<vmem>>, vector<1x16x128xf32>,
    %92 = arith.addf %19, %68 : vector<16x128xf32>
    %93 = arith.mulf %92, %82 : vector<16x128xf32>
    %c0_55 = arith.constant 0 : index
    %c16 = arith.constant 16 : index
    %c0_56 = arith.constant 0 : index
    %94 = vector.load %arg13[%c0_55, %c16, %c0_56] : memref<1x32x128xf32, #tpu.memory_space<vmem>>, vector<1x16x128xf32>
    %95 = vector.shape_cast %94 : vector<1x16x128xf32> to vector<16x128xf32>
    %96 = vector.shape_cast %93 : vector<16x128xf32> to vector<1x16x128xf32>
    tpu.vector_store %arg13[%c0_55, %c16, %c0_56], %96 {strides = array<i32>} : memref<1x32x128xf32, #tpu.memory_space<vmem>>, vector<1x16x128xf32>,
    %c0_57 = arith.constant 0 : index
    %c0_58 = arith.constant 0 : index
    %c0_59 = arith.constant 0 : index
    %97 = vector.load %arg14[%c0_57, %c0_58, %c0_59] : memref<1x1x128xf32, #tpu.memory_space<vmem>>, vector<1x1x128xf32>
    %98 = vector.shape_cast %97 : vector<1x1x128xf32> to vector<1x128xf32>
    %99 = vector.broadcast %3 : vector<1x128xf32> to vector<16x128xf32>
    %100 = arith.mulf %88, %99 : vector<16x128xf32>
    %cst_60 = arith.constant dense<0.000000e+00> : vector<128xf32>
    %101 = vector.multi_reduction <add>, %100, %cst_60 [0] : vector<16x128xf32> to vector<128xf32>
    %102 = vector.shape_cast %101 : vector<128xf32> to vector<1x128xf32>
    %103 = arith.addf %98, %102 : vector<1x128xf32>
    %c0_61 = arith.constant 0 : index
    %c0_62 = arith.constant 0 : index
    %c0_63 = arith.constant 0 : index
    %104 = vector.load %arg14[%c0_61, %c0_62, %c0_63] : memref<1x1x128xf32, #tpu.memory_space<vmem>>, vector<1x1x128xf32>
    %105 = vector.shape_cast %104 : vector<1x1x128xf32> to vector<1x128xf32>
    %106 = vector.shape_cast %103 : vector<1x128xf32> to vector<1x1x128xf32>
    tpu.vector_store %arg14[%c0_61, %c0_62, %c0_63], %106 {strides = array<i32>} : memref<1x1x128xf32, #tpu.memory_space<vmem>>, vector<1x1x128xf32>,
    return
  }
  func.func @transform_0(%arg0: i32, %arg1: i32) -> (i32, i32, i32) {
    %c0_i32 = arith.constant 0 : i32
    %c0_i32_0 = arith.constant 0 : i32
    %c0_i32_1 = arith.constant 0 : i32
    return %arg0, %c0_i32, %c0_i32_0 : i32, i32, i32
  }
  func.func @transform_1(%arg0: i32, %arg1: i32) -> (i32, i32, i32) {
    %c0_i32 = arith.constant 0 : i32
    %c0_i32_0 = arith.constant 0 : i32
    %c0_i32_1 = arith.constant 0 : i32
    return %arg1, %c0_i32, %c0_i32_0 : i32, i32, i32
  }
  func.func @transform_2(%arg0: i32, %arg1: i32) -> (i32, i32, i32) {
    %c0_i32 = arith.constant 0 : i32
    %c0_i32_0 = arith.constant 0 : i32
    %c0_i32_1 = arith.constant 0 : i32
    return %arg1, %c0_i32, %c0_i32_0 : i32, i32, i32
  }
  func.func @transform_3(%arg0: i32, %arg1: i32) -> (i32, i32, i32) {
    %c0_i32 = arith.constant 0 : i32
    %c0_i32_0 = arith.constant 0 : i32
    %c0_i32_1 = arith.constant 0 : i32
    return %arg1, %c0_i32, %c0_i32_0 : i32, i32, i32
  }
  func.func @transform_4(%arg0: i32, %arg1: i32) -> (i32, i32, i32) {
    %c0_i32 = arith.constant 0 : i32
    %c0_i32_0 = arith.constant 0 : i32
    %c0_i32_1 = arith.constant 0 : i32
    return %arg1, %c0_i32, %c0_i32_0 : i32, i32, i32
  }
  func.func @transform_5(%arg0: i32, %arg1: i32) -> (i32, i32, i32) {
    %c0_i32 = arith.constant 0 : i32
    %c0_i32_0 = arith.constant 0 : i32
    %c0_i32_1 = arith.constant 0 : i32
    return %arg1, %c0_i32, %c0_i32_0 : i32, i32, i32
  }
  func.func @transform_6(%arg0: i32, %arg1: i32) -> (i32, i32, i32) {
    %c0_i32 = arith.constant 0 : i32
    %c0_i32_0 = arith.constant 0 : i32
    %c0_i32_1 = arith.constant 0 : i32
    return %arg1, %c0_i32, %c0_i32_0 : i32, i32, i32
  }
  func.func @transform_7(%arg0: i32, %arg1: i32) -> (i32, i32, i32) {
    %c0_i32 = arith.constant 0 : i32
    %c0_i32_0 = arith.constant 0 : i32
    %c0_i32_1 = arith.constant 0 : i32
    return %arg1, %c0_i32, %c0_i32_0 : i32, i32, i32
  }
  func.func @transform_8(%arg0: i32, %arg1: i32) -> (i32, i32, i32) {
    %c0_i32 = arith.constant 0 : i32
    %c0_i32_0 = arith.constant 0 : i32
    %c0_i32_1 = arith.constant 0 : i32
    return %arg1, %c0_i32, %c0_i32_0 : i32, i32, i32
  }
  func.func @transform_9(%arg0: i32, %arg1: i32) -> (i32, i32, i32) {
    %c0_i32 = arith.constant 0 : i32
    %c0_i32_0 = arith.constant 0 : i32
    %c0_i32_1 = arith.constant 0 : i32
    return %arg1, %c0_i32, %c0_i32_0 : i32, i32, i32
  }
  func.func @transform_10(%arg0: i32, %arg1: i32) -> (i32, i32) {
    %c0_i32 = arith.constant 0 : i32
    %c0_i32_0 = arith.constant 0 : i32
    %c0_i32_1 = arith.constant 0 : i32
    return %c0_i32, %c0_i32_0 : i32, i32
  }
  func.func @transform_11(%arg0: i32, %arg1: i32) -> (i32, i32, i32) {
    %c0_i32 = arith.constant 0 : i32
    %c0_i32_0 = arith.constant 0 : i32
    %c0_i32_1 = arith.constant 0 : i32
    return %arg0, %c0_i32, %c0_i32_0 : i32, i32, i32
  }
  func.func @transform_12(%arg0: i32, %arg1: i32) -> (i32, i32, i32) {
    %c0_i32 = arith.constant 0 : i32
    %c0_i32_0 = arith.constant 0 : i32
    %c0_i32_1 = arith.constant 0 : i32
    return %arg0, %c0_i32, %c0_i32_0 : i32, i32, i32
  }
}

module attributes {stable_mosaic.version = 11 : i64} {
  func.func @_prior_kernel(%arg0: i32, %arg1: memref<1x32x128xf32, #tpu.memory_space<vmem>>, %arg2: memref<32x128xf32, #tpu.memory_space<vmem>>, %arg3: memref<1x1x128xf32, #tpu.memory_space<vmem>>) attributes {dimension_semantics = [#tpu.dimension_semantics<parallel>], iteration_bounds = array<i64: 2>, scalar_prefetch = 0 : i64, scratch_operands = 0 : i64, tpu.core_type = #tpu.core_type<tc>, window_params = [{transform_indices = @transform_0, window_bounds = array<i64: 1, 32, 128>}, {pipeline_mode = #tpu.pipeline_mode<synchronous>, transform_indices = @transform_1, window_bounds = array<i64: 32, 128>}, {transform_indices = @transform_2, window_bounds = array<i64: 1, 1, 128>}]} {
    %c0 = arith.constant 0 : index
    %c0_0 = arith.constant 0 : index
    %c0_1 = arith.constant 0 : index
    %0 = vector.load %arg1[%c0, %c0_0, %c0_1] : memref<1x32x128xf32, #tpu.memory_space<vmem>>, vector<1x32x128xf32>
    %1 = vector.shape_cast %0 : vector<1x32x128xf32> to vector<32x128xf32>
    %2 = arith.mulf %1, %1 : vector<32x128xf32>
    %cst = arith.constant 1.83787704 : f32
    %3 = vector.broadcast %cst : f32 to vector<32x128xf32>
    %4 = arith.addf %2, %3 : vector<32x128xf32>
    %cst_2 = arith.constant -5.000000e-01 : f32
    %5 = vector.broadcast %cst_2 : f32 to vector<32x128xf32>
    %6 = arith.mulf %5, %4 : vector<32x128xf32>
    %c0_3 = arith.constant 0 : index
    %c0_4 = arith.constant 0 : index
    %7 = vector.load %arg2[%c0_3, %c0_4] : memref<32x128xf32, #tpu.memory_space<vmem>>, vector<32x128xf32>
    %8 = arith.mulf %6, %7 : vector<32x128xf32>
    %cst_5 = arith.constant dense<0.000000e+00> : vector<128xf32>
    %9 = vector.multi_reduction <add>, %8, %cst_5 [0] : vector<32x128xf32> to vector<128xf32>
    %10 = vector.shape_cast %9 : vector<128xf32> to vector<1x128xf32>
    %c0_6 = arith.constant 0 : index
    %c0_7 = arith.constant 0 : index
    %c0_8 = arith.constant 0 : index
    %11 = vector.load %arg3[%c0_6, %c0_7, %c0_8] : memref<1x1x128xf32, #tpu.memory_space<vmem>>, vector<1x1x128xf32>
    %12 = vector.shape_cast %11 : vector<1x1x128xf32> to vector<1x128xf32>
    %13 = vector.shape_cast %10 : vector<1x128xf32> to vector<1x1x128xf32>
    tpu.vector_store %arg3[%c0_6, %c0_7, %c0_8], %13 {strides = array<i32>} : memref<1x1x128xf32, #tpu.memory_space<vmem>>, vector<1x1x128xf32>,
    return
  }
  func.func @transform_0(%arg0: i32) -> (i32, i32, i32) {
    %c0_i32 = arith.constant 0 : i32
    %c0_i32_0 = arith.constant 0 : i32
    %c0_i32_1 = arith.constant 0 : i32
    return %arg0, %c0_i32, %c0_i32_0 : i32, i32, i32
  }
  func.func @transform_1(%arg0: i32) -> (i32, i32) {
    %c0_i32 = arith.constant 0 : i32
    %c0_i32_0 = arith.constant 0 : i32
    %c0_i32_1 = arith.constant 0 : i32
    return %c0_i32, %c0_i32_0 : i32, i32
  }
  func.func @transform_2(%arg0: i32) -> (i32, i32, i32) {
    %c0_i32 = arith.constant 0 : i32
    %c0_i32_0 = arith.constant 0 : i32
    %c0_i32_1 = arith.constant 0 : i32
    return %arg0, %c0_i32, %c0_i32_0 : i32, i32, i32
  }
}

module attributes {stable_mosaic.version = 11 : i64} {
  func.func @_split_kernel(%arg0: i32, %arg1: memref<1x16x128xf32, #tpu.memory_space<vmem>>, %arg2: memref<16x72xbf16, #tpu.memory_space<vmem>>, %arg3: memref<16x1xf32, #tpu.memory_space<vmem>>, %arg4: memref<1x128xf32, #tpu.memory_space<vmem>>, %arg5: memref<1x1x128xf32, #tpu.memory_space<vmem>>) attributes {dimension_semantics = [#tpu.dimension_semantics<parallel>], iteration_bounds = array<i64: 2>, scalar_prefetch = 0 : i64, scratch_operands = 0 : i64, tpu.core_type = #tpu.core_type<tc>, window_params = [{transform_indices = @transform_0, window_bounds = array<i64: 1, 16, 128>}, {pipeline_mode = #tpu.pipeline_mode<synchronous>, transform_indices = @transform_1, window_bounds = array<i64: 16, 72>}, {pipeline_mode = #tpu.pipeline_mode<synchronous>, transform_indices = @transform_2, window_bounds = array<i64: 16, 1>}, {pipeline_mode = #tpu.pipeline_mode<synchronous>, transform_indices = @transform_3, window_bounds = array<i64: 1, 128>}, {transform_indices = @transform_4, window_bounds = array<i64: 1, 1, 128>}]} {
    %c0 = arith.constant 0 : index
    %c0_0 = arith.constant 0 : index
    %0 = vector.load %arg4[%c0, %c0_0] : memref<1x128xf32, #tpu.memory_space<vmem>>, vector<1x128xf32>
    %c0_1 = arith.constant 0 : index
    %c0_2 = arith.constant 0 : index
    %c0_3 = arith.constant 0 : index
    %1 = vector.load %arg1[%c0_1, %c0_2, %c0_3] : memref<1x16x128xf32, #tpu.memory_space<vmem>>, vector<1x8x128xf32>
    %2 = vector.shape_cast %1 : vector<1x8x128xf32> to vector<8x128xf32>
    %c0_4 = arith.constant 0 : index
    %c8 = arith.constant 8 : index
    %c0_5 = arith.constant 0 : index
    %3 = vector.load %arg1[%c0_4, %c8, %c0_5] : memref<1x16x128xf32, #tpu.memory_space<vmem>>, vector<1x8x128xf32>
    %4 = vector.shape_cast %3 : vector<1x8x128xf32> to vector<8x128xf32>
    %c0_6 = arith.constant 0 : index
    %c0_7 = arith.constant 0 : index
    %5 = vector.load %arg2[%c0_6, %c0_7] : memref<16x72xbf16, #tpu.memory_space<vmem>>, vector<16x72xbf16>
    %c0_8 = arith.constant 0 : index
    %c0_9 = arith.constant 0 : index
    %6 = vector.load %arg3[%c0_8, %c0_9] : memref<16x1xf32, #tpu.memory_space<vmem>>, vector<16x1xf32>
    %c11_i32 = arith.constant 11 : i32
    %7 = tpu.dynamic_rotate %2 by %c11_i32 dim 1 : vector<8x128xf32>, i32 -> vector<8x128xf32>
    %c10_i32 = arith.constant 10 : i32
    %8 = tpu.dynamic_rotate %2 by %c10_i32 dim 1 : vector<8x128xf32>, i32 -> vector<8x128xf32>
    %c9_i32 = arith.constant 9 : i32
    %9 = tpu.dynamic_rotate %2 by %c9_i32 dim 1 : vector<8x128xf32>, i32 -> vector<8x128xf32>
    %c1_i32 = arith.constant 1 : i32
    %10 = tpu.dynamic_rotate %2 by %c1_i32 dim 1 : vector<8x128xf32>, i32 -> vector<8x128xf32>
    %c127_i32 = arith.constant 127 : i32
    %11 = tpu.dynamic_rotate %2 by %c127_i32 dim 1 : vector<8x128xf32>, i32 -> vector<8x128xf32>
    %c119_i32 = arith.constant 119 : i32
    %12 = tpu.dynamic_rotate %2 by %c119_i32 dim 1 : vector<8x128xf32>, i32 -> vector<8x128xf32>
    %c118_i32 = arith.constant 118 : i32
    %13 = tpu.dynamic_rotate %2 by %c118_i32 dim 1 : vector<8x128xf32>, i32 -> vector<8x128xf32>
    %c117_i32 = arith.constant 117 : i32
    %14 = tpu.dynamic_rotate %2 by %c117_i32 dim 1 : vector<8x128xf32>, i32 -> vector<8x128xf32>
    %15 = tpu.concatenate %7, %8, %9, %10, %2, %11, %12, %13, %14 in 0 : vector<8x128xf32>, vector<8x128xf32>, vector<8x128xf32>, vector<8x128xf32>, vector<8x128xf32>, vector<8x128xf32>, vector<8x128xf32>, vector<8x128xf32>, vector<8x128xf32> -> vector<72x128xf32>
    %16 = arith.truncf %15 : vector<72x128xf32> to vector<72x128xbf16>
    %cst = arith.constant dense<0.000000e+00> : vector<16x128xf32>
    %17 = tpu.matmul %5, %16, %cst {dimension_numbers = #tpu.dot_dimension_numbers<[1], [0], [0], [1], [0, 0, 1, 1], [], []>} : vector<16x72xbf16>, vector<72x128xbf16>, vector<16x128xf32> -> vector<16x128xf32>
    %18 = vector.broadcast %6 : vector<16x1xf32> to vector<16x128xf32>
    %19 = arith.addf %17, %18 : vector<16x128xf32>
    %20 = vector.extract_strided_slice %19 {offsets = [0, 0], sizes = [8, 128], strides = [1, 1]} : vector<16x128xf32> to vector<8x128xf32>
    %21 = vector.extract_strided_slice %19 {offsets = [8, 0], sizes = [8, 128], strides = [1, 1]} : vector<16x128xf32> to vector<8x128xf32>
    %22 = vector.broadcast %0 : vector<1x128xf32> to vector<8x128xf32>
    %23 = arith.mulf %21, %22 : vector<8x128xf32>
    %24 = arith.subf %4, %20 : vector<8x128xf32>
    %25 = vector.broadcast %0 : vector<1x128xf32> to vector<8x128xf32>
    %26 = arith.mulf %24, %25 : vector<8x128xf32>
    %cst_10 = arith.constant 2.000000e+00 : f32
    %27 = vector.broadcast %cst_10 : f32 to vector<8x128xf32>
    %28 = arith.mulf %27, %23 : vector<8x128xf32>
    %cst_11 = arith.constant 1.83787704 : f32
    %29 = vector.broadcast %cst_11 : f32 to vector<8x128xf32>
    %30 = arith.addf %28, %29 : vector<8x128xf32>
    %31 = vector.broadcast %0 : vector<1x128xf32> to vector<8x128xf32>
    %32 = arith.mulf %30, %31 : vector<8x128xf32>
    %33 = arith.mulf %26, %26 : vector<8x128xf32>
    %cst_12 = arith.constant -2.000000e+00 : f32
    %34 = vector.broadcast %cst_12 : f32 to vector<8x128xf32>
    %35 = arith.mulf %34, %23 : vector<8x128xf32>
    %36 = math.exp %35 : vector<8x128xf32>
    %37 = arith.mulf %33, %36 : vector<8x128xf32>
    %38 = arith.addf %32, %37 : vector<8x128xf32>
    %cst_13 = arith.constant -5.000000e-01 : f32
    %39 = vector.broadcast %cst_13 : f32 to vector<8x128xf32>
    %40 = arith.mulf %39, %38 : vector<8x128xf32>
    %cst_14 = arith.constant dense<0.000000e+00> : vector<128xf32>
    %41 = vector.multi_reduction <add>, %40, %cst_14 [0] : vector<8x128xf32> to vector<128xf32>
    %42 = vector.shape_cast %41 : vector<128xf32> to vector<1x128xf32>
    %c0_15 = arith.constant 0 : index
    %c0_16 = arith.constant 0 : index
    %c0_17 = arith.constant 0 : index
    %43 = vector.load %arg5[%c0_15, %c0_16, %c0_17] : memref<1x1x128xf32, #tpu.memory_space<vmem>>, vector<1x1x128xf32>
    %44 = vector.shape_cast %43 : vector<1x1x128xf32> to vector<1x128xf32>
    %45 = vector.shape_cast %42 : vector<1x128xf32> to vector<1x1x128xf32>
    tpu.vector_store %arg5[%c0_15, %c0_16, %c0_17], %45 {strides = array<i32>} : memref<1x1x128xf32, #tpu.memory_space<vmem>>, vector<1x1x128xf32>,
    return
  }
  func.func @transform_0(%arg0: i32) -> (i32, i32, i32) {
    %c0_i32 = arith.constant 0 : i32
    %c0_i32_0 = arith.constant 0 : i32
    %c0_i32_1 = arith.constant 0 : i32
    return %arg0, %c0_i32, %c0_i32_0 : i32, i32, i32
  }
  func.func @transform_1(%arg0: i32) -> (i32, i32) {
    %c0_i32 = arith.constant 0 : i32
    %c0_i32_0 = arith.constant 0 : i32
    %c0_i32_1 = arith.constant 0 : i32
    return %c0_i32, %c0_i32_0 : i32, i32
  }
  func.func @transform_2(%arg0: i32) -> (i32, i32) {
    %c0_i32 = arith.constant 0 : i32
    %c0_i32_0 = arith.constant 0 : i32
    %c0_i32_1 = arith.constant 0 : i32
    return %c0_i32, %c0_i32_0 : i32, i32
  }
  func.func @transform_3(%arg0: i32) -> (i32, i32) {
    %c0_i32 = arith.constant 0 : i32
    %c0_i32_0 = arith.constant 0 : i32
    %c0_i32_1 = arith.constant 0 : i32
    return %c0_i32, %c0_i32_0 : i32, i32
  }
  func.func @transform_4(%arg0: i32) -> (i32, i32, i32) {
    %c0_i32 = arith.constant 0 : i32
    %c0_i32_0 = arith.constant 0 : i32
    %c0_i32_1 = arith.constant 0 : i32
    return %arg0, %c0_i32, %c0_i32_0 : i32, i32, i32
  }
}

</mosaic_0001>

<llo_original>
// kernel: woodbury_glow_forward.4
$region0: #{woodbury_glow_forward.4}
  #allocation0 [shape = 'u32[]', space=smem, size = 0x4, offset = 0x4, fixed_abs, tag = 'smem constant byte address 0x4 - core index']
  #allocation1 [shape = 'u32[72,128]{1,0:T(1,128)}', space=vmem, size = 0x9000, scoped, tag = 'internal scratch']
  %s0 = inlined_call_operand.vmem [shape: f32[2,16,128], index: 0, kind: input, shape index: {}]
  %s1 = inlined_call_operand.vmem [shape: bf16[2,16,16], index: 1, kind: input, shape index: {}]
  %s2 = inlined_call_operand.vmem [shape: f32[2,16,1], index: 2, kind: input, shape index: {}]
  %s3 = inlined_call_operand.vmem [shape: bf16[2,128,128], index: 3, kind: input, shape index: {}]
  %s4 = inlined_call_operand.vmem [shape: bf16[2,16,72], index: 4, kind: input, shape index: {}]
  %s5 = inlined_call_operand.vmem [shape: f32[2,16,1], index: 5, kind: input, shape index: {}]
  %s6 = inlined_call_operand.vmem [shape: bf16[2,16,16], index: 6, kind: input, shape index: {}]
  %s7 = inlined_call_operand.vmem [shape: f32[2,16,1], index: 7, kind: input, shape index: {}]
  %s8 = inlined_call_operand.vmem [shape: bf16[2,16,144], index: 8, kind: input, shape index: {}]
  %s9 = inlined_call_operand.vmem [shape: f32[2,16,1], index: 9, kind: input, shape index: {}]
  %s10 = inlined_call_operand.vmem [shape: f32[1,128], index: 10, kind: input, shape index: {}]
  %s11 = inlined_call_operand.vmem [shape: f32[2,16,128], index: 11, kind: output, shape index: {0}]
  %s12 = inlined_call_operand.vmem [shape: f32[2,1,128], index: 12, kind: output, shape index: {1}]
  %13 = xla_tuple %s11, %s12
  %s14 = sld [smem:[#allocation0]]
  $region89: #{woodbury_glow_forward.4} parent=0
    _
  %s16 = ssub.s32 1, %s14
  %s17 = scalar_select 0, %s16, %s14
  loop: start=0, step=1, limit=6
  $region2: #{woodbury_glow_forward.4} parent=0 // loop_pre_header
    _
  $region3: #{woodbury_glow_forward.4} parent=0 // loop_header
    %s19 = sphi 0, %s23
    %p20 = scmp.ge.s32.totalorder %s19, 6
    %s26 = sphi 0, %s38
    %s27 = sphi 0, %s34
    %s28 = sphi 0, %s26
    %s29 = sphi 0, %s27
    %s30 = sphi 0, %s28
    %s31 = sphi 0, %s29
    %s41 = sphi 0, %s43
    %s44 = sphi 0, %s41
    %s45 = sphi 0, %s44
    %s61 = sphi 0, %s45
    %s67 = sphi 0, %s69
    %s70 = sphi 0, %s67
    %s71 = sphi 0, %s70
    %s87 = sphi 0, %s71
    %s93 = sphi 0, %s95
    %s96 = sphi 0, %s93
    %s97 = sphi 0, %s96
    %s113 = sphi 0, %s97
    %s119 = sphi 0, %s121
    %s122 = sphi 0, %s119
    %s123 = sphi 0, %s122
    %s139 = sphi 0, %s123
    %s145 = sphi 0, %s147
    %s148 = sphi 0, %s145
    %s149 = sphi 0, %s148
    %s165 = sphi 0, %s149
    %s171 = sphi 0, %s173
    %s174 = sphi 0, %s171
    %s175 = sphi 0, %s174
    %s191 = sphi 0, %s175
    %s197 = sphi 0, %s199
    %s200 = sphi 0, %s197
    %s201 = sphi 0, %s200
    %s217 = sphi 0, %s201
    %s223 = sphi 0, %s225
    %s226 = sphi 0, %s223
    %s227 = sphi 0, %s226
    %s243 = sphi 0, %s227
    %s249 = sphi 0, %s251
    %s252 = sphi 0, %s249
    %s253 = sphi 0, %s252
    %s269 = sphi 0, %s253
    %s275 = sphi 0, %s277
    %s278 = sphi 0, %s275
    %s279 = sphi 0, %s278
    %s295 = sphi 0, %s279
    %s299 = sphi 0, %s299
    %s301 = sphi 0, %s299
    %s302 = sphi 0, %s301
    %s316 = sphi 0, %s302
    %s322 = sphi 0, %s324
    %s325 = sphi 0, %s322
    %s326 = sphi 0, %s325
    %s342 = sphi 0, %s326
    %s348 = sphi 0, %s350
    %s351 = sphi 0, %s348
    %s352 = sphi 0, %s351
    %s368 = sphi 0, %s352
  $region4: #{woodbury_glow_forward.4} parent=0 // loop_header_branch
    %22 = sbr.rel (%p20) target = $region8
  $region5: #{woodbury_glow_forward.4} parent=0 // loop_body
    %s24 = ssub.s32 %s19, 1
    %s25 = ssub.s32 %s19, 2
    %s32 = sadd.s32 1, %s27
    %p33 = scmp.ge.s32.totalorder %s32, 2
    %s34 = scalar_select %p33, 0, %s32
    %s35 = sadd.s32 1, %s26
    %s36 = scalar_select %p33, %s35, %s26
    %p37 = scmp.ge.s32.totalorder %s36, 2
    %s38 = scalar_select %p37, 0, %s36
    %s39 = ssub.s32 %s26, %s38
    %p40 = scmp.eq.s32.totalorder %s39, 0
    %s42 = sadd.s32 %s41, 1
    %s43 = scalar_select %p40, %s41, %s42
    %p46 = pneg %p40
    %p47 = scmp.eq.s32.totalorder %s19, 3
    %p48 = por %p46, %p47
    %p49 = scmp.ne.s32.totalorder %s41, %s44
    %p50 = scmp.eq.s32.totalorder %s19, 0
    %p51 = por %p49, %p50
    %p52 = scmp.ne.s32.totalorder %s41, %s44
    %p53 = scmp.eq.s32.totalorder %s24, 3
    %p54 = por %p52, %p53
    %p55 = scmp.ne.s32.totalorder %s44, %s45
    %p56 = scmp.eq.s32.totalorder %s24, 0
    %p57 = por %p55, %p56
    %p58 = scmp.ne.s32.totalorder %s44, %s45
    %p59 = scmp.eq.s32.totalorder %s25, 3
    %p60 = por %p58, %p59
    %p62 = scmp.ne.s32.totalorder %s45, %s61
    %p63 = scmp.eq.s32.totalorder %s25, 0
    %p64 = por %p62, %p63
    %s65 = ssub.s32 %s27, %s34
    %p66 = scmp.eq.s32.totalorder %s65, 0
    %s68 = sadd.s32 %s67, 1
    %s69 = scalar_select %p66, %s67, %s68
    %p72 = pneg %p66
    %p73 = scmp.eq.s32.totalorder %s19, 3
    %p74 = por %p72, %p73
    %p75 = scmp.ne.s32.totalorder %s67, %s70
    %p76 = scmp.eq.s32.totalorder %s19, 0
    %p77 = por %p75, %p76
    %p78 = scmp.ne.s32.totalorder %s67, %s70
    %p79 = scmp.eq.s32.totalorder %s24, 3
    %p80 = por %p78, %p79
    %p81 = scmp.ne.s32.totalorder %s70, %s71
    %p82 = scmp.eq.s32.totalorder %s24, 0
    %p83 = por %p81, %p82
    %p84 = scmp.ne.s32.totalorder %s70, %s71
    %p85 = scmp.eq.s32.totalorder %s25, 3
    %p86 = por %p84, %p85
    %p88 = scmp.ne.s32.totalorder %s71, %s87
    %p89 = scmp.eq.s32.totalorder %s25, 0
    %p90 = por %p88, %p89
    %s91 = ssub.s32 %s27, %s34
    %p92 = scmp.eq.s32.totalorder %s91, 0
    %s94 = sadd.s32 %s93, 1
    %s95 = scalar_select %p92, %s93, %s94
    %p98 = pneg %p92
    %p99 = scmp.eq.s32.totalorder %s19, 3
    %p100 = por %p98, %p99
    %p101 = scmp.ne.s32.totalorder %s93, %s96
    %p102 = scmp.eq.s32.totalorder %s19, 0
    %p103 = por %p101, %p102
    %p104 = scmp.ne.s32.totalorder %s93, %s96
    %p105 = scmp.eq.s32.totalorder %s24, 3
    %p106 = por %p104, %p105
    %p107 = scmp.ne.s32.totalorder %s96, %s97
    %p108 = scmp.eq.s32.totalorder %s24, 0
    %p109 = por %p107, %p108
    %p110 = scmp.ne.s32.totalorder %s96, %s97
    %p111 = scmp.eq.s32.totalorder %s25, 3
    %p112 = por %p110, %p111
    %p114 = scmp.ne.s32.totalorder %s97, %s113
    %p115 = scmp.eq.s32.totalorder %s25, 0
    %p116 = por %p114, %p115
    %s117 = ssub.s32 %s27, %s34
    %p118 = scmp.eq.s32.totalorder %s117, 0
    %s120 = sadd.s32 %s119, 1
    %s121 = scalar_select %p118, %s119, %s120
    %p124 = pneg %p118
    %p125 = scmp.eq.s32.totalorder %s19, 3
    %p126 = por %p124, %p125
    %p127 = scmp.ne.s32.totalorder %s119, %s122
    %p128 = scmp.eq.s32.totalorder %s19, 0
    %p129 = por %p127, %p128
    %p130 = scmp.ne.s32.totalorder %s119, %s122
    %p131 = scmp.eq.s32.totalorder %s24, 3
    %p132 = por %p130, %p131
    %p133 = scmp.ne.s32.totalorder %s122, %s123
    %p134 = scmp.eq.s32.totalorder %s24, 0
    %p135 = por %p133, %p134
    %p136 = scmp.ne.s32.totalorder %s122, %s123
    %p137 = scmp.eq.s32.totalorder %s25, 3
    %p138 = por %p136, %p137
    %p140 = scmp.ne.s32.totalorder %s123, %s139
    %p141 = scmp.eq.s32.totalorder %s25, 0
    %p142 = por %p140, %p141
    %s143 = ssub.s32 %s27, %s34
    %p144 = scmp.eq.s32.totalorder %s143, 0
    %s146 = sadd.s32 %s145, 1
    %s147 = scalar_select %p144, %s145, %s146
    %p150 = pneg %p144
    %p151 = scmp.eq.s32.totalorder %s19, 3
    %p152 = por %p150, %p151
    %p153 = scmp.ne.s32.totalorder %s145, %s148
    %p154 = scmp.eq.s32.totalorder %s19, 0
    %p155 = por %p153, %p154
    %p156 = scmp.ne.s32.totalorder %s145, %s148
    %p157 = scmp.eq.s32.totalorder %s24, 3
    %p158 = por %p156, %p157
    %p159 = scmp.ne.s32.totalorder %s148, %s149
    %p160 = scmp.eq.s32.totalorder %s24, 0
    %p161 = por %p159, %p160
    %p162 = scmp.ne.s32.totalorder %s148, %s149
    %p163 = scmp.eq.s32.totalorder %s25, 3
    %p164 = por %p162, %p163
    %p166 = scmp.ne.s32.totalorder %s149, %s165
    %p167 = scmp.eq.s32.totalorder %s25, 0
    %p168 = por %p166, %p167
    %s169 = ssub.s32 %s27, %s34
    %p170 = scmp.eq.s32.totalorder %s169, 0
    %s172 = sadd.s32 %s171, 1
    %s173 = scalar_select %p170, %s171, %s172
    %p176 = pneg %p170
    %p177 = scmp.eq.s32.totalorder %s19, 3
    %p178 = por %p176, %p177
    %p179 = scmp.ne.s32.totalorder %s171, %s174
    %p180 = scmp.eq.s32.totalorder %s19, 0
    %p181 = por %p179, %p180
    %p182 = scmp.ne.s32.totalorder %s171, %s174
    %p183 = scmp.eq.s32.totalorder %s24, 3
    %p184 = por %p182, %p183
    %p185 = scmp.ne.s32.totalorder %s174, %s175
    %p186 = scmp.eq.s32.totalorder %s24, 0
    %p187 = por %p185, %p186
    %p188 = scmp.ne.s32.totalorder %s174, %s175
    %p189 = scmp.eq.s32.totalorder %s25, 3
    %p190 = por %p188, %p189
    %p192 = scmp.ne.s32.totalorder %s175, %s191
    %p193 = scmp.eq.s32.totalorder %s25, 0
    %p194 = por %p192, %p193
    %s195 = ssub.s32 %s27, %s34
    %p196 = scmp.eq.s32.totalorder %s195, 0
    %s198 = sadd.s32 %s197, 1
    %s199 = scalar_select %p196, %s197, %s198
    %p202 = pneg %p196
    %p203 = scmp.eq.s32.totalorder %s19, 3
    %p204 = por %p202, %p203
    %p205 = scmp.ne.s32.totalorder %s197, %s200
    %p206 = scmp.eq.s32.totalorder %s19, 0
    %p207 = por %p205, %p206
    %p208 = scmp.ne.s32.totalorder %s197, %s200
    %p209 = scmp.eq.s32.totalorder %s24, 3
    %p210 = por %p208, %p209
    %p211 = scmp.ne.s32.totalorder %s200, %s201
    %p212 = scmp.eq.s32.totalorder %s24, 0
    %p213 = por %p211, %p212
    %p214 = scmp.ne.s32.totalorder %s200, %s201
    %p215 = scmp.eq.s32.totalorder %s25, 3
    %p216 = por %p214, %p215
    %p218 = scmp.ne.s32.totalorder %s201, %s217
    %p219 = scmp.eq.s32.totalorder %s25, 0
    %p220 = por %p218, %p219
    %s221 = ssub.s32 %s27, %s34
    %p222 = scmp.eq.s32.totalorder %s221, 0
    %s224 = sadd.s32 %s223, 1
    %s225 = scalar_select %p222, %s223, %s224
    %p228 = pneg %p222
    %p229 = scmp.eq.s32.totalorder %s19, 3
    %p230 = por %p228, %p229
    %p231 = scmp.ne.s32.totalorder %s223, %s226
    %p232 = scmp.eq.s32.totalorder %s19, 0
    %p233 = por %p231, %p232
    %p234 = scmp.ne.s32.totalorder %s223, %s226
    %p235 = scmp.eq.s32.totalorder %s24, 3
    %p236 = por %p234, %p235
    %p237 = scmp.ne.s32.totalorder %s226, %s227
    %p238 = scmp.eq.s32.totalorder %s24, 0
    %p239 = por %p237, %p238
    %p240 = scmp.ne.s32.totalorder %s226, %s227
    %p241 = scmp.eq.s32.totalorder %s25, 3
    %p242 = por %p240, %p241
    %p244 = scmp.ne.s32.totalorder %s227, %s243
    %p245 = scmp.eq.s32.totalorder %s25, 0
    %p246 = por %p244, %p245
    %s247 = ssub.s32 %s27, %s34
    %p248 = scmp.eq.s32.totalorder %s247, 0
    %s250 = sadd.s32 %s249, 1
    %s251 = scalar_select %p248, %s249, %s250
    %p254 = pneg %p248
    %p255 = scmp.eq.s32.totalorder %s19, 3
    %p256 = por %p254, %p255
    %p257 = scmp.ne.s32.totalorder %s249, %s252
    %p258 = scmp.eq.s32.totalorder %s19, 0
    %p259 = por %p257, %p258
    %p260 = scmp.ne.s32.totalorder %s249, %s252
    %p261 = scmp.eq.s32.totalorder %s24, 3
    %p262 = por %p260, %p261
    %p263 = scmp.ne.s32.totalorder %s252, %s253
    %p264 = scmp.eq.s32.totalorder %s24, 0
    %p265 = por %p263, %p264
    %p266 = scmp.ne.s32.totalorder %s252, %s253
    %p267 = scmp.eq.s32.totalorder %s25, 3
    %p268 = por %p266, %p267
    %p270 = scmp.ne.s32.totalorder %s253, %s269
    %p271 = scmp.eq.s32.totalorder %s25, 0
    %p272 = por %p270, %p271
    %s273 = ssub.s32 %s27, %s34
    %p274 = scmp.eq.s32.totalorder %s273, 0
    %s276 = sadd.s32 %s275, 1
    %s277 = scalar_select %p274, %s275, %s276
    %p280 = pneg %p274
    %p281 = scmp.eq.s32.totalorder %s19, 3
    %p282 = por %p280, %p281
    %p283 = scmp.ne.s32.totalorder %s275, %s278
    %p284 = scmp.eq.s32.totalorder %s19, 0
    %p285 = por %p283, %p284
    %p286 = scmp.ne.s32.totalorder %s275, %s278
    %p287 = scmp.eq.s32.totalorder %s24, 3
    %p288 = por %p286, %p287
    %p289 = scmp.ne.s32.totalorder %s278, %s279
    %p290 = scmp.eq.s32.totalorder %s24, 0
    %p291 = por %p289, %p290
    %p292 = scmp.ne.s32.totalorder %s278, %s279
    %p293 = scmp.eq.s32.totalorder %s25, 3
    %p294 = por %p292, %p293
    %p296 = scmp.ne.s32.totalorder %s279, %s295
    %p297 = scmp.eq.s32.totalorder %s25, 0
    %p298 = por %p296, %p297
    %s300 = sadd.s32 %s299, 1
    %p303 = scmp.eq.s32.totalorder %s19, 3
    %p304 = scmp.ne.s32.totalorder %s299, %s301
    %p305 = scmp.eq.s32.totalorder %s19, 0
    %p306 = por %p304, %p305
    %p307 = scmp.ne.s32.totalorder %s299, %s301
    %p308 = scmp.eq.s32.totalorder %s24, 3
    %p309 = por %p307, %p308
    %p310 = scmp.ne.s32.totalorder %s301, %s302
    %p311 = scmp.eq.s32.totalorder %s24, 0
    %p312 = por %p310, %p311
    %p313 = scmp.ne.s32.totalorder %s301, %s302
    %p314 = scmp.eq.s32.totalorder %s25, 3
    %p315 = por %p313, %p314
    %p317 = scmp.ne.s32.totalorder %s302, %s316
    %p318 = scmp.eq.s32.totalorder %s25, 0
    %p319 = por %p317, %p318
    %s320 = ssub.s32 %s26, %s38
    %p321 = scmp.eq.s32.totalorder %s320, 0
    %s323 = sadd.s32 %s322, 1
    %s324 = scalar_select %p321, %s322, %s323
    %p327 = pneg %p321
    %p328 = scmp.eq.s32.totalorder %s19, 3
    %p329 = por %p327, %p328
    %p330 = scmp.ne.s32.totalorder %s322, %s325
    %p331 = scmp.eq.s32.totalorder %s19, 0
    %p332 = por %p330, %p331
    %p333 = scmp.ne.s32.totalorder %s322, %s325
    %p334 = scmp.eq.s32.totalorder %s24, 3
    %p335 = por %p333, %p334
    %p336 = scmp.ne.s32.totalorder %s325, %s326
    %p337 = scmp.eq.s32.totalorder %s24, 0
    %p338 = por %p336, %p337
    %p339 = scmp.ne.s32.totalorder %s325, %s326
    %p340 = scmp.eq.s32.totalorder %s25, 3
    %p341 = por %p339, %p340
    %p343 = scmp.ne.s32.totalorder %s326, %s342
    %p344 = scmp.eq.s32.totalorder %s25, 0
    %p345 = por %p343, %p344
    %s346 = ssub.s32 %s26, %s38
    %p347 = scmp.eq.s32.totalorder %s346, 0
    %s349 = sadd.s32 %s348, 1
    %s350 = scalar_select %p347, %s348, %s349
    %p353 = pneg %p347
    %p354 = scmp.eq.s32.totalorder %s19, 3
    %p355 = por %p353, %p354
    %p356 = scmp.ne.s32.totalorder %s348, %s351
    %p357 = scmp.eq.s32.totalorder %s19, 0
    %p358 = por %p356, %p357
    %p359 = scmp.ne.s32.totalorder %s348, %s351
    %p360 = scmp.eq.s32.totalorder %s24, 3
    %p361 = por %p359, %p360
    %p362 = scmp.ne.s32.totalorder %s351, %s352
    %p363 = scmp.eq.s32.totalorder %s24, 0
    %p364 = por %p362, %p363
    %p365 = scmp.ne.s32.totalorder %s351, %s352
    %p366 = scmp.eq.s32.totalorder %s25, 3
    %p367 = por %p365, %p366
    %p369 = scmp.ne.s32.totalorder %s352, %s368
    %p370 = scmp.eq.s32.totalorder %s25, 0
    %p371 = por %p369, %p370
    %p372 = scmp.le.s32.totalorder 1, %s19
    %p373 = scmp.lt.s32.totalorder %s19, 5
    %p374 = pnand %p372, %p373
    %p375 = pneg %p374
    // Predicated region
    $region9: #{woodbury_glow_forward.4} parent=5 // pred_check
      _
    $region10: #{woodbury_glow_forward.4} parent=5 // pred_check_branch
      %377 = sbr.rel (%p374) target = $region12
    $region11: #{woodbury_glow_forward.4} parent=5 // pred_region
      %s378 = ssub.s32 %s19, 1
      // Predicated region
      $region13: #{woodbury_glow_forward.4} parent=11 // pred_check
        %p379 = pneg %p312
      $region14: #{woodbury_glow_forward.4} parent=11 // pred_check_branch
        %381 = sbr.rel (%p379) target = $region16
      $region15: #{woodbury_glow_forward.4} parent=11 // pred_region
        _
      $region16: #{woodbury_glow_forward.4} parent=11 // pred_fallthru
        _
    $region12: #{woodbury_glow_forward.4} parent=5 // pred_fallthru
      _
    %p382 = scmp.lt.s32.totalorder %s19, 4
    // Predicated region
    $region17: #{woodbury_glow_forward.4} parent=5 // pred_check
      %p383 = pneg %p382
    $region18: #{woodbury_glow_forward.4} parent=5 // pred_check_branch
      %385 = sbr.rel (%p383) target = $region20
    $region19: #{woodbury_glow_forward.4} parent=5 // pred_region
      // Predicated region
      $region21: #{woodbury_glow_forward.4} parent=19 // pred_check
        %p386 = pneg %p51
      $region22: #{woodbury_glow_forward.4} parent=19 // pred_check_branch
        %388 = sbr.rel (%p386) target = $region24
      $region23: #{woodbury_glow_forward.4} parent=19 // pred_region
        %p389 = scmp.lt.s32.totalorder %s26, 1
        %s390 = scalar_select %p389, %s26, 1
        %s391 = smul.addr %s390, 2
        %s392 = smul.addr %s391, 8
        %s393 = scalar_lea.vmem %s0, %s392
      $region24: #{woodbury_glow_forward.4} parent=19 // pred_fallthru
        _
      // Predicated region
      $region25: #{woodbury_glow_forward.4} parent=19 // pred_check
        %p394 = pneg %p77
      $region26: #{woodbury_glow_forward.4} parent=19 // pred_check_branch
        %396 = sbr.rel (%p394) target = $region28
      $region27: #{woodbury_glow_forward.4} parent=19 // pred_region
        %p397 = scmp.lt.s32.totalorder %s27, 1
        %s398 = scalar_select %p397, %s27, 1
        %s399 = smul.addr %s398, 2
        %s400 = smul.addr %s399, 4
        %s401 = scalar_lea.vmem %s1, %s400
      $region28: #{woodbury_glow_forward.4} parent=19 // pred_fallthru
        _
      // Predicated region
      $region29: #{woodbury_glow_forward.4} parent=19 // pred_check
        %p402 = pneg %p103
      $region30: #{woodbury_glow_forward.4} parent=19 // pred_check_branch
        %404 = sbr.rel (%p402) target = $region32
      $region31: #{woodbury_glow_forward.4} parent=19 // pred_region
        %p405 = scmp.lt.s32.totalorder %s27, 1
        %s406 = scalar_select %p405, %s27, 1
        %s407 = smul.addr %s406, 2
        %s408 = smul.addr %s407, 8
        %s409 = scalar_lea.vmem %s2, %s408
      $region32: #{woodbury_glow_forward.4} parent=19 // pred_fallthru
        _
      // Predicated region
      $region33: #{woodbury_glow_forward.4} parent=19 // pred_check
        %p410 = pneg %p129
      $region34: #{woodbury_glow_forward.4} parent=19 // pred_check_branch
        %412 = sbr.rel (%p410) target = $region36
      $region35: #{woodbury_glow_forward.4} parent=19 // pred_region
        %p413 = scmp.lt.s32.totalorder %s27, 1
        %s414 = scalar_select %p413, %s27, 1
        %s415 = smul.addr %s414, 16
        %s416 = smul.addr %s415, 4
        %s417 = scalar_lea.vmem %s3, %s416
      $region36: #{woodbury_glow_forward.4} parent=19 // pred_fallthru
        _
      // Predicated region
      $region37: #{woodbury_glow_forward.4} parent=19 // pred_check
        %p418 = pneg %p155
      $region38: #{woodbury_glow_forward.4} parent=19 // pred_check_branch
        %420 = sbr.rel (%p418) target = $region40
      $region39: #{woodbury_glow_forward.4} parent=19 // pred_region
        %p421 = scmp.lt.s32.totalorder %s27, 1
        %s422 = scalar_select %p421, %s27, 1
        %s423 = smul.addr %s422, 2
        %s424 = smul.addr %s423, 4
        %s425 = scalar_lea.vmem %s4, %s424
      $region40: #{woodbury_glow_forward.4} parent=19 // pred_fallthru
        _
      // Predicated region
      $region41: #{woodbury_glow_forward.4} parent=19 // pred_check
        %p426 = pneg %p181
      $region42: #{woodbury_glow_forward.4} parent=19 // pred_check_branch
        %428 = sbr.rel (%p426) target = $region44
      $region43: #{woodbury_glow_forward.4} parent=19 // pred_region
        %p429 = scmp.lt.s32.totalorder %s27, 1
        %s430 = scalar_select %p429, %s27, 1
        %s431 = smul.addr %s430, 2
        %s432 = smul.addr %s431, 8
        %s433 = scalar_lea.vmem %s5, %s432
      $region44: #{woodbury_glow_forward.4} parent=19 // pred_fallthru
        _
      // Predicated region
      $region45: #{woodbury_glow_forward.4} parent=19 // pred_check
        %p434 = pneg %p207
      $region46: #{woodbury_glow_forward.4} parent=19 // pred_check_branch
        %436 = sbr.rel (%p434) target = $region48
      $region47: #{woodbury_glow_forward.4} parent=19 // pred_region
        %p437 = scmp.lt.s32.totalorder %s27, 1
        %s438 = scalar_select %p437, %s27, 1
        %s439 = smul.addr %s438, 2
        %s440 = smul.addr %s439, 4
        %s441 = scalar_lea.vmem %s6, %s440
      $region48: #{woodbury_glow_forward.4} parent=19 // pred_fallthru
        _
      // Predicated region
      $region49: #{woodbury_glow_forward.4} parent=19 // pred_check
        %p442 = pneg %p233
      $region50: #{woodbury_glow_forward.4} parent=19 // pred_check_branch
        %444 = sbr.rel (%p442) target = $region52
      $region51: #{woodbury_glow_forward.4} parent=19 // pred_region
        %p445 = scmp.lt.s32.totalorder %s27, 1
        %s446 = scalar_select %p445, %s27, 1
        %s447 = smul.addr %s446, 2
        %s448 = smul.addr %s447, 8
        %s449 = scalar_lea.vmem %s7, %s448
      $region52: #{woodbury_glow_forward.4} parent=19 // pred_fallthru
        _
      // Predicated region
      $region53: #{woodbury_glow_forward.4} parent=19 // pred_check
        %p450 = pneg %p259
      $region54: #{woodbury_glow_forward.4} parent=19 // pred_check_branch
        %452 = sbr.rel (%p450) target = $region56
      $region55: #{woodbury_glow_forward.4} parent=19 // pred_region
        %p453 = scmp.lt.s32.totalorder %s27, 1
        %s454 = scalar_select %p453, %s27, 1
        %s455 = smul.addr %s454, 4
        %s456 = smul.addr %s455, 4
        %s457 = scalar_lea.vmem %s8, %s456
      $region56: #{woodbury_glow_forward.4} parent=19 // pred_fallthru
        _
      // Predicated region
      $region57: #{woodbury_glow_forward.4} parent=19 // pred_check
        %p458 = pneg %p285
      $region58: #{woodbury_glow_forward.4} parent=19 // pred_check_branch
        %460 = sbr.rel (%p458) target = $region60
      $region59: #{woodbury_glow_forward.4} parent=19 // pred_region
        %p461 = scmp.lt.s32.totalorder %s27, 1
        %s462 = scalar_select %p461, %s27, 1
        %s463 = smul.addr %s462, 2
        %s464 = smul.addr %s463, 8
        %s465 = scalar_lea.vmem %s9, %s464
      $region60: #{woodbury_glow_forward.4} parent=19 // pred_fallthru
        _
    $region20: #{woodbury_glow_forward.4} parent=5 // pred_fallthru
      _
    %p466 = scmp.le.s32.totalorder 1, %s19
    %p467 = scmp.lt.s32.totalorder %s19, 5
    %p468 = pnand %p466, %p467
    %p469 = pneg %p468
    // Predicated region
    $region61: #{woodbury_glow_forward.4} parent=5 // pred_check
      _
    $region62: #{woodbury_glow_forward.4} parent=5 // pred_check_branch
      %471 = sbr.rel (%p468) target = $region64
    $region63: #{woodbury_glow_forward.4} parent=5 // pred_region
      %s472 = ssub.s32 %s19, 1
      %p473 = scmp.lt.s32.totalorder %s28, 1
      %s474 = scalar_select %p473, %s28, 1
      %s475 = smul.addr %s474, 2
      %s476 = smul.addr %s475, 8
      %s477 = scalar_lea.vmem %s0, %s476
      %p478 = pneg %p57
      %p479 = pneg %p54
      %p480 = scmp.lt.s32.totalorder %s29, 1
      %s481 = scalar_select %p480, %s29, 1
      %s482 = smul.addr %s481, 2
      %s483 = smul.addr %s482, 4
      %s484 = scalar_lea.vmem %s1, %s483
      %p485 = pneg %p83
      %p486 = pneg %p80
      %p487 = scmp.lt.s32.totalorder %s29, 1
      %s488 = scalar_select %p487, %s29, 1
      %s489 = smul.addr %s488, 2
      %s490 = smul.addr %s489, 8
      %s491 = scalar_lea.vmem %s2, %s490
      %p492 = pneg %p109
      %p493 = pneg %p106
      %p494 = scmp.lt.s32.totalorder %s29, 1
      %s495 = scalar_select %p494, %s29, 1
      %s496 = smul.addr %s495, 16
      %s497 = smul.addr %s496, 4
      %s498 = scalar_lea.vmem %s3, %s497
      %p499 = pneg %p135
      %p500 = pneg %p132
      %p501 = scmp.lt.s32.totalorder %s29, 1
      %s502 = scalar_select %p501, %s29, 1
      %s503 = smul.addr %s502, 2
      %s504 = smul.addr %s503, 4
      %s505 = scalar_lea.vmem %s4, %s504
      %p506 = pneg %p161
      %p507 = pneg %p158
      %p508 = scmp.lt.s32.totalorder %s29, 1
      %s509 = scalar_select %p508, %s29, 1
      %s510 = smul.addr %s509, 2
      %s511 = smul.addr %s510, 8
      %s512 = scalar_lea.vmem %s5, %s511
      %p513 = pneg %p187
      %p514 = pneg %p184
      %p515 = scmp.lt.s32.totalorder %s29, 1
      %s516 = scalar_select %p515, %s29, 1
      %s517 = smul.addr %s516, 2
      %s518 = smul.addr %s517, 4
      %s519 = scalar_lea.vmem %s6, %s518
      %p520 = pneg %p213
      %p521 = pneg %p210
      %p522 = scmp.lt.s32.totalorder %s29, 1
      %s523 = scalar_select %p522, %s29, 1
      %s524 = smul.addr %s523, 2
      %s525 = smul.addr %s524, 8
      %s526 = scalar_lea.vmem %s7, %s525
      %p527 = pneg %p239
      %p528 = pneg %p236
      %p529 = scmp.lt.s32.totalorder %s29, 1
      %s530 = scalar_select %p529, %s29, 1
      %s531 = smul.addr %s530, 4
      %s532 = smul.addr %s531, 4
      %s533 = scalar_lea.vmem %s8, %s532
      %p534 = pneg %p265
      %p535 = pneg %p262
      %p536 = scmp.lt.s32.totalorder %s29, 1
      %s537 = scalar_select %p536, %s29, 1
      %s538 = smul.addr %s537, 2
      %s539 = smul.addr %s538, 8
      %s540 = scalar_lea.vmem %s9, %s539
      %p541 = pneg %p291
      %p542 = pneg %p288
      %p543 = pneg %p312
      %p544 = pneg %p309
      %p545 = pneg %p338
      %p546 = pneg %p335
      %p547 = scmp.lt.s32.totalorder %s28, 1
      %s548 = scalar_select %p547, %s28, 1
      %s549 = smul.addr %s548, 2
      %s550 = smul.addr %s549, 8
      %s551 = scalar_lea.vmem %s11, %s550
      %p552 = pneg %p364
      %p553 = pneg %p361
      %p554 = scmp.lt.s32.totalorder %s28, 1
      %s555 = scalar_select %p554, %s28, 1
      %s556 = scalar_lea.vmem %s12, %s555
      %p557 = scmp.lt.s32.totalorder %s28, 1
      %s558 = scalar_select %p557, %s28, 1
      %s559 = smul.addr %s558, 2
      %s560 = smul.addr %s559, 8
      %s561 = scalar_lea.vmem %s0, %s560
      %p562 = scmp.lt.s32.totalorder %s29, 1
      %s563 = scalar_select %p562, %s29, 1
      %s564 = smul.addr %s563, 2
      %s565 = smul.addr %s564, 4
      %s566 = scalar_lea.vmem %s1, %s565
      %p567 = scmp.lt.s32.totalorder %s29, 1
      %s568 = scalar_select %p567, %s29, 1
      %s569 = smul.addr %s568, 2
      %s570 = smul.addr %s569, 8
      %s571 = scalar_lea.vmem %s2, %s570
      %p572 = scmp.lt.s32.totalorder %s29, 1
      %s573 = scalar_select %p572, %s29, 1
      %s574 = smul.addr %s573, 16
      %s575 = smul.addr %s574, 4
      %s576 = scalar_lea.vmem %s3, %s575
      %p577 = scmp.lt.s32.totalorder %s29, 1
      %s578 = scalar_select %p577, %s29, 1
      %s579 = smul.addr %s578, 2
      %s580 = smul.addr %s579, 4
      %s581 = scalar_lea.vmem %s4, %s580
      %p582 = scmp.lt.s32.totalorder %s29, 1
      %s583 = scalar_select %p582, %s29, 1
      %s584 = smul.addr %s583, 2
      %s585 = smul.addr %s584, 8
      %s586 = scalar_lea.vmem %s5, %s585
      %p587 = scmp.lt.s32.totalorder %s29, 1
      %s588 = scalar_select %p587, %s29, 1
      %s589 = smul.addr %s588, 2
      %s590 = smul.addr %s589, 4
      %s591 = scalar_lea.vmem %s6, %s590
      %p592 = scmp.lt.s32.totalorder %s29, 1
      %s593 = scalar_select %p592, %s29, 1
      %s594 = smul.addr %s593, 2
      %s595 = smul.addr %s594, 8
      %s596 = scalar_lea.vmem %s7, %s595
      %p597 = scmp.lt.s32.totalorder %s29, 1
      %s598 = scalar_select %p597, %s29, 1
      %s599 = smul.addr %s598, 4
      %s600 = smul.addr %s599, 4
      %s601 = scalar_lea.vmem %s8, %s600
      %p602 = scmp.lt.s32.totalorder %s29, 1
      %s603 = scalar_select %p602, %s29, 1
      %s604 = smul.addr %s603, 2
      %s605 = smul.addr %s604, 8
      %s606 = scalar_lea.vmem %s9, %s605
      %p607 = scmp.lt.s32.totalorder %s28, 1
      %s608 = scalar_select %p607, %s28, 1
      %s609 = smul.addr %s608, 2
      %s610 = smul.addr %s609, 8
      %s611 = scalar_lea.vmem %s11, %s610
      %p612 = scmp.lt.s32.totalorder %s28, 1
      %s613 = scalar_select %p612, %s28, 1
      %s614 = scalar_lea.vmem %s12, %s613
      %p616 = scmp.eq.s32.totalorder %s29, 0
      // Predicated region
      $region65: #{woodbury_glow_forward.4} parent=63 // pred_check
        %p617 = pneg %p616
      $region66: #{woodbury_glow_forward.4} parent=63 // pred_check_branch
        %619 = sbr.rel (%p617) target = $region68
      $region67: #{woodbury_glow_forward.4} parent=63 // pred_region
        %v620 = vld [vmem:[%s561] sm:$0xff]
        %v621 = vld [vmem:[%s561 + $0x8] sm:$0xff]
        %622 = vst [vmem:[%s611] sm:$0xff] %v620
        %623 = vst [vmem:[%s611 + $0x8] sm:$0xff] %v621
        %624 = vst [vmem:[%s614] sm:$0x1] 0.0
      $region68: #{woodbury_glow_forward.4} parent=63 // pred_fallthru
        _
      %v625 = vld [vmem:[%s10] sm:$0x1]
      %v626 = vld [vmem:[%s611] sm:$0xff]
      %v627 = vld [vmem:[%s611 + $0x8] sm:$0xff]
      %v628 = vld [vmem:[%s566] sm:$0xf]
      %v629 = vld [vmem:[%s566 + $0x4] sm:$0xf]
      %v630 = vpack.c.bf16 %v627, %v626
      %v631 = vld [vmem:[%s571] sm:$0xff]
      %v632 = vld [vmem:[%s571 + $0x8] sm:$0xff]
      %634 = vset.pattern.permute.xlu0 0
      %635 = vperm.xlu0 %634, %v631
      %v636 = vpop.permute.xlu0 %635
      %639 = vset.pattern.permute.xlu0 0
      %640 = vperm.xlu0 %639, %v632
      %v641 = vpop.permute.xlu0 %640
      %v645 = vunpack.c.l.b16 %v628
      %v646 = vunpack.c.l.b16 %v629
      %v647 = vpack.c.b16 %v646, %v645
      %vm648 = vcmask 130048
      %v650 = vsel %vm648, %v647, 0
      %652 = vmatpush.bf16.msra.mxu0 0
      %653 = vmatpush.bf16.msra.mxu0 0
      %654 = vmatpush.bf16.msra.mxu0 0
      %655 = vmatpush.bf16.msra.mxu0 0
      %656 = vmatpush.bf16.msra.mxu0 0
      %657 = vmatpush.bf16.msra.mxu0 0
      %658 = vmatpush.bf16.msra.mxu0 0
      %659 = vmatpush.bf16.msra.mxu0 %v630
      %660 = vmatmul.bf16.gmra.mxu0 %v650
      %v661 = vpop.f32.mrf.mxu0
      %v662 = vadd.f32 %v636, %v661
      %v663 = vpop.f32.mrf.mxu0
      %v664 = vadd.f32 %v641, %v663
      %665 = vdwg.mxu0
      %v666 = vld [vmem:[%s576] sm:$0xf]
      %v667 = vld [vmem:[%s576 + $0x4] sm:$0xf]
      %v668 = vld [vmem:[%s576 + $0x8] sm:$0xf]
      %v669 = vld [vmem:[%s576 + $0xc] sm:$0xf]
      %v670 = vld [vmem:[%s576 + $0x10] sm:$0xf]
      %v671 = vld [vmem:[%s576 + $0x14] sm:$0xf]
      %v672 = vld [vmem:[%s576 + $0x18] sm:$0xf]
      %v673 = vld [vmem:[%s576 + $0x1c] sm:$0xf]
      %v674 = vld [vmem:[%s576 + $0x20] sm:$0xf]
      %v675 = vld [vmem:[%s576 + $0x24] sm:$0xf]
      %v676 = vld [vmem:[%s576 + $0x28] sm:$0xf]
      %v677 = vld [vmem:[%s576 + $0x2c] sm:$0xf]
      %v678 = vld [vmem:[%s576 + $0x30] sm:$0xf]
      %v679 = vld [vmem:[%s576 + $0x34] sm:$0xf]
      %v680 = vld [vmem:[%s576 + $0x38] sm:$0xf]
      %v681 = vld [vmem:[%s576 + $0x3c] sm:$0xf]
      %v682 = vpack.c.bf16 %v664, %v662
      %v699 = vunpack.c.l.b16 %v666
      %v700 = vunpack.c.l.b16 %v667
      %v701 = vunpack.c.l.b16 %v668
      %v702 = vunpack.c.l.b16 %v669
      %v703 = vunpack.c.l.b16 %v670
      %v704 = vunpack.c.l.b16 %v671
      %v705 = vunpack.c.l.b16 %v672
      %v706 = vunpack.c.l.b16 %v673
      %v707 = vunpack.c.l.b16 %v674
      %v708 = vunpack.c.l.b16 %v675
      %v709 = vunpack.c.l.b16 %v676
      %v710 = vunpack.c.l.b16 %v677
      %v711 = vunpack.c.l.b16 %v678
      %v712 = vunpack.c.l.b16 %v679
      %v713 = vunpack.c.l.b16 %v680
      %v714 = vunpack.c.l.b16 %v681
      %v715 = vpack.c.b16 %v700, %v699
      %v716 = vpack.c.b16 %v702, %v701
      %v717 = vpack.c.b16 %v704, %v703
      %v718 = vpack.c.b16 %v706, %v705
      %v719 = vpack.c.b16 %v708, %v707
      %v720 = vpack.c.b16 %v710, %v709
      %v721 = vpack.c.b16 %v712, %v711
      %v722 = vpack.c.b16 %v714, %v713
      %731 = vmatpush.bf16.msra.mxu0 %v722
      %732 = vmatpush.bf16.msra.mxu0 %v721
      %733 = vmatpush.bf16.msra.mxu0 %v720
      %734 = vmatpush.bf16.msra.mxu0 %v719
      %735 = vmatpush.bf16.msra.mxu0 %v718
      %736 = vmatpush.bf16.msra.mxu0 %v717
      %737 = vmatpush.bf16.msra.mxu0 %v716
      %738 = vmatpush.bf16.msra.mxu0 %v715
      %739 = vmatmul.bf16.gmra.mxu0 %v682
      %v740 = vpop.f32.mrf.mxu0
      %v741 = vadd.f32 0.0, %v740
      %v742 = vpop.f32.mrf.mxu0
      %v743 = vadd.f32 0.0, %v742
      %744 = vdwg.mxu0
      %v745 = vld [vmem:[%s581] sm:$0xf]
      %v746 = vld [vmem:[%s581 + $0x4] sm:$0xf]
      %v747 = vld [vmem:[%s586] sm:$0xff]
      %v748 = vld [vmem:[%s586 + $0x8] sm:$0xff]
      %749 = vrot.lane.b32.xlu0 %v741, 11
      %v750 = vpop.permute.xlu0 %749
      %751 = vrot.lane.b32.xlu0 %v741, 10
      %v752 = vpop.permute.xlu0 %751
      %753 = vrot.lane.b32.xlu0 %v741, 9
      %v754 = vpop.permute.xlu0 %753
      %755 = vrot.lane.b32.xlu0 %v741, 1
      %v756 = vpop.permute.xlu0 %755
      %757 = vrot.lane.b32.xlu0 %v741, 127
      %v758 = vpop.permute.xlu0 %757
      %759 = vrot.lane.b32.xlu0 %v741, 119
      %v760 = vpop.permute.xlu0 %759
      %761 = vrot.lane.b32.xlu0 %v741, 118
      %v762 = vpop.permute.xlu0 %761
      %763 = vrot.lane.b32.xlu0 %v741, 117
      %v764 = vpop.permute.xlu0 %763
      %v765 = vpack.c.bf16 %v752, %v750
      %v766 = vpack.c.bf16 %v756, %v754
      %v767 = vpack.c.bf16 %v758, %v741
      %v768 = vpack.c.bf16 %v762, %v760
      %v769 = vpack.c.bf16 %v764, %v764
      %771 = vset.pattern.permute.xlu0 0
      %772 = vperm.xlu0 %771, %v747
      %v773 = vpop.permute.xlu0 %772
      %776 = vset.pattern.permute.xlu0 0
      %777 = vperm.xlu0 %776, %v748
      %v778 = vpop.permute.xlu0 %777
      %v782 = vunpack.c.l.b16 %v745
      %v783 = vunpack.c.l.b16 %v746
      %v784 = vpack.c.b16 %v783, %v782
      %vm785 = vcmask 588800
      %v787 = vsel %vm785, %v784, 0
      %vm789 = vcmask 1043456
      %v791 = vsel %vm789, %v769, 0
      %793 = vmatpush.bf16.msra.mxu0 0
      %794 = vmatpush.bf16.msra.mxu0 0
      %795 = vmatpush.bf16.msra.mxu0 0
      %796 = vmatpush.bf16.msra.mxu0 %v791
      %797 = vmatpush.bf16.msra.mxu0 %v768
      %798 = vmatpush.bf16.msra.mxu0 %v767
      %799 = vmatpush.bf16.msra.mxu0 %v766
      %800 = vmatpush.bf16.msra.mxu0 %v765
      %801 = vmatmul.bf16.gmra.mxu0 %v787
      %v802 = vpop.f32.mrf.mxu0
      %v803 = vadd.f32 %v773, %v802
      %v804 = vpop.f32.mrf.mxu0
      %v805 = vadd.f32 %v778, %v804
      %806 = vdwg.mxu0
      %v807 = vmax.f32 %v803, 0.0
      %v808 = vmax.f32 %v805, 0.0
      %v809 = vld [vmem:[%s591] sm:$0xf]
      %v810 = vld [vmem:[%s591 + $0x4] sm:$0xf]
      %v811 = vpack.c.bf16 %v808, %v807
      %v812 = vld [vmem:[%s596] sm:$0xff]
      %v813 = vld [vmem:[%s596 + $0x8] sm:$0xff]
      %815 = vset.pattern.permute.xlu0 0
      %816 = vperm.xlu0 %815, %v812
      %v817 = vpop.permute.xlu0 %816
      %820 = vset.pattern.permute.xlu0 0
      %821 = vperm.xlu0 %820, %v813
      %v822 = vpop.permute.xlu0 %821
      %v826 = vunpack.c.l.b16 %v809
      %v827 = vunpack.c.l.b16 %v810
      %v828 = vpack.c.b16 %v827, %v826
      %v830 = vsel %vm648, %v828, 0
      %832 = vmatpush.bf16.msra.mxu0 0
      %833 = vmatpush.bf16.msra.mxu0 0
      %834 = vmatpush.bf16.msra.mxu0 0
      %835 = vmatpush.bf16.msra.mxu0 0
      %836 = vmatpush.bf16.msra.mxu0 0
      %837 = vmatpush.bf16.msra.mxu0 0
      %838 = vmatpush.bf16.msra.mxu0 0
      %839 = vmatpush.bf16.msra.mxu0 %v811
      %840 = vmatmul.bf16.gmra.mxu0 %v830
      %v841 = vpop.f32.mrf.mxu0
      %v842 = vadd.f32 %v817, %v841
      %v843 = vpop.f32.mrf.mxu0
      %v844 = vadd.f32 %v822, %v843
      %845 = vdwg.mxu0
      %v846 = vmax.f32 %v842, 0.0
      %v847 = vmax.f32 %v844, 0.0
      %v849 = vperm.slane %v625, 0
      %v851 = vmul.f32 %v846, %v849
      %v852 = vmul.f32 %v847, %v849
      %v853 = vld [vmem:[%s601] sm:$0xff]
      %v854 = vld [vmem:[%s601 + $0x8] sm:$0xff]
      %v855 = vld [vmem:[%s606] sm:$0xff]
      %v856 = vld [vmem:[%s606 + $0x8] sm:$0xff]
      %857 = vrot.lane.b32.xlu0 %v851, 11
      %v858 = vpop.permute.xlu0 %857
      %859 = vrot.lane.b32.xlu0 %v852, 11
      %v860 = vpop.permute.xlu0 %859
      %861 = vrot.lane.b32.xlu0 %v851, 10
      %v862 = vpop.permute.xlu0 %861
      %863 = vrot.lane.b32.xlu0 %v852, 10
      %v864 = vpop.permute.xlu0 %863
      %865 = vrot.lane.b32.xlu0 %v851, 9
      %v866 = vpop.permute.xlu0 %865
      %867 = vrot.lane.b32.xlu0 %v852, 9
      %v868 = vpop.permute.xlu0 %867
      %869 = vrot.lane.b32.xlu0 %v851, 1
      %v870 = vpop.permute.xlu0 %869
      %871 = vrot.lane.b32.xlu0 %v852, 1
      %v872 = vpop.permute.xlu0 %871
      %873 = vrot.lane.b32.xlu0 %v851, 127
      %v874 = vpop.permute.xlu0 %873
      %875 = vrot.lane.b32.xlu0 %v852, 127
      %v876 = vpop.permute.xlu0 %875
      %877 = vrot.lane.b32.xlu0 %v851, 119
      %v878 = vpop.permute.xlu0 %877
      %879 = vrot.lane.b32.xlu0 %v852, 119
      %v880 = vpop.permute.xlu0 %879
      %881 = vrot.lane.b32.xlu0 %v851, 118
      %v882 = vpop.permute.xlu0 %881
      %883 = vrot.lane.b32.xlu0 %v852, 118
      %v884 = vpop.permute.xlu0 %883
      %885 = vrot.lane.b32.xlu0 %v851, 117
      %v886 = vpop.permute.xlu0 %885
      %887 = vrot.lane.b32.xlu0 %v852, 117
      %v888 = vpop.permute.xlu0 %887
      %v889 = vpack.c.bf16 %v860, %v858
      %v890 = vpack.c.bf16 %v864, %v862
      %v891 = vpack.c.bf16 %v868, %v866
      %v892 = vpack.c.bf16 %v872, %v870
      %v893 = vpack.c.bf16 %v852, %v851
      %v894 = vpack.c.bf16 %v876, %v874
      %v895 = vpack.c.bf16 %v880, %v878
      %v896 = vpack.c.bf16 %v884, %v882
      %v897 = vpack.c.bf16 %v888, %v886
      %899 = vset.pattern.permute.xlu0 0
      %900 = vperm.xlu0 %899, %v855
      %v901 = vpop.permute.xlu0 %900
      %904 = vset.pattern.permute.xlu0 0
      %905 = vperm.xlu0 %904, %v856
      %v906 = vpop.permute.xlu0 %905
      %v910 = vunpack.c.l.b16 %v853
      %v911 = vunpack.c.h.b16 %v853
      %v912 = vunpack.c.l.b16 %v854
      %v913 = vunpack.c.h.b16 %v854
      %v914 = vpack.c.b16 %v912, %v910
      %v915 = vpack.c.b16 %v913, %v911
      %v918 = vsel %vm648, %v915, 0
      %920 = vmatpush.bf16.msra.mxu0 %v896
      %921 = vmatpush.bf16.msra.mxu0 %v895
      %922 = vmatpush.bf16.msra.mxu0 %v894
      %923 = vmatpush.bf16.msra.mxu0 %v893
      %924 = vmatpush.bf16.msra.mxu0 %v892
      %925 = vmatpush.bf16.msra.mxu0 %v891
      %926 = vmatpush.bf16.msra.mxu0 %v890
      %927 = vmatpush.bf16.msra.mxu0 %v889
      %928 = vmatmul.bf16.gmra.mxu0 %v914
      %v929 = vpop.f32.mrf.mxu0
      %v930 = vadd.f32 %v901, %v929
      %v931 = vpop.f32.mrf.mxu0
      %v932 = vadd.f32 %v906, %v931
      %933 = vdwg.mxu0
      %934 = vmatpush.bf16.msra.mxu0 0
      %935 = vmatpush.bf16.msra.mxu0 0
      %936 = vmatpush.bf16.msra.mxu0 0
      %937 = vmatpush.bf16.msra.mxu0 0
      %938 = vmatpush.bf16.msra.mxu0 0
      %939 = vmatpush.bf16.msra.mxu0 0
      %940 = vmatpush.bf16.msra.mxu0 0
      %941 = vmatpush.bf16.msra.mxu0 %v897
      %942 = vmatmul.bf16.gmra.mxu0 %v918
      %v943 = vpop.f32.mrf.mxu0
      %v944 = vadd.f32 %v930, %v943
      %v945 = vpop.f32.mrf.mxu0
      %v946 = vadd.f32 %v932, %v945
      %947 = vdwg.mxu0
      %v948 = vadd.f32 %v946, 2.0
      %v949 = vand.u32 2147483647, %v948
      %v950 = vsub.f32 0.0, %v949
      %v951 = vmul.f32 %v950, 1.442695
      %v952 = vpow.pop %v951
      %v953 = vadd.f32 %v952, 1.0
      %v954 = vrcp.pop %v953
      %vm955 = vcmp.ge.f32.partialorder %v948, 0.0
      %v956 = vmul.f32 %v952, %v954
      %v957 = vsel %vm955, %v954, %v956
      %v958 = vmin.f32 %v948, 0.0
      %v959 = vlog2.pop %v953
      %v960 = vmul.f32 %v959, 0.6931472
      %v961 = vsub.f32 %v958, %v960
      %962 = vst [vmem:[%s611] sm:$0xff] %v741
      %v963 = vadd.f32 %v743, %v944
      %v964 = vmul.f32 %v963, %v957
      %965 = vst [vmem:[%s611 + $0x8] sm:$0xff] %v964
      %v966 = vld [vmem:[%s614] sm:$0x1]
      %v967 = vmul.f32 %v961, %v849
      %v968 = vrot.slane %v967, 4
      %v969 = vadd.f32 %v967, %v968
      %v970 = vrot.slane %v969, 2
      %v971 = vadd.f32 %v969, %v970
      %v972 = vrot.slane %v971, 1
      %v973 = vadd.f32 %v971, %v972
      %v974 = vadd.f32 %v966, %v973
      %975 = vst [vmem:[%s614] sm:$0x1] %v974
      %p976 = scmp.lt.s32.totalorder %s28, 1
      %s977 = scalar_select %p976, %s28, 1
      %s978 = smul.addr %s977, 2
      %s979 = smul.addr %s978, 8
      %s980 = scalar_lea.vmem %s11, %s979
      %p981 = scmp.lt.s32.totalorder %s28, 1
      %s982 = scalar_select %p981, %s28, 1
      %s983 = scalar_lea.vmem %s12, %s982
      // Predicated region
      $region69: #{woodbury_glow_forward.4} parent=63 // pred_check
        %p984 = pneg %p335
      $region70: #{woodbury_glow_forward.4} parent=63 // pred_check_branch
        %986 = sbr.rel (%p984) target = $region72
      $region71: #{woodbury_glow_forward.4} parent=63 // pred_region
        _
      $region72: #{woodbury_glow_forward.4} parent=63 // pred_fallthru
        _
      // Predicated region
      $region73: #{woodbury_glow_forward.4} parent=63 // pred_check
        %p987 = pneg %p361
      $region74: #{woodbury_glow_forward.4} parent=63 // pred_check_branch
        %989 = sbr.rel (%p987) target = $region76
      $region75: #{woodbury_glow_forward.4} parent=63 // pred_region
        _
      $region76: #{woodbury_glow_forward.4} parent=63 // pred_fallthru
        _
    $region64: #{woodbury_glow_forward.4} parent=5 // pred_fallthru
      _
    %p990 = scmp.le.s32.totalorder 2, %s19
    // Predicated region
    $region77: #{woodbury_glow_forward.4} parent=5 // pred_check
      %p991 = pneg %p990
    $region78: #{woodbury_glow_forward.4} parent=5 // pred_check_branch
      %993 = sbr.rel (%p991) target = $region80
    $region79: #{woodbury_glow_forward.4} parent=5 // pred_region
      %s994 = ssub.s32 %s19, 2
      // Predicated region
      $region81: #{woodbury_glow_forward.4} parent=79 // pred_check
        %p995 = pneg %p341
      $region82: #{woodbury_glow_forward.4} parent=79 // pred_check_branch
        %997 = sbr.rel (%p995) target = $region84
      $region83: #{woodbury_glow_forward.4} parent=79 // pred_region
        %p998 = scmp.lt.s32.totalorder %s30, 1
        %s999 = scalar_select %p998, %s30, 1
        %s1000 = smul.addr %s999, 2
        %s1001 = smul.addr %s1000, 8
        %s1002 = scalar_lea.vmem %s11, %s1001
      $region84: #{woodbury_glow_forward.4} parent=79 // pred_fallthru
        _
      // Predicated region
      $region85: #{woodbury_glow_forward.4} parent=79 // pred_check
        %p1003 = pneg %p367
      $region86: #{woodbury_glow_forward.4} parent=79 // pred_check_branch
        %1005 = sbr.rel (%p1003) target = $region88
      $region87: #{woodbury_glow_forward.4} parent=79 // pred_region
        %p1006 = scmp.lt.s32.totalorder %s30, 1
        %s1007 = scalar_select %p1006, %s30, 1
        %s1008 = scalar_lea.vmem %s12, %s1007
      $region88: #{woodbury_glow_forward.4} parent=79 // pred_fallthru
        _
    $region80: #{woodbury_glow_forward.4} parent=5 // pred_fallthru
      _
  $region6: #{woodbury_glow_forward.4} parent=0 // loop_footer
    %s23 = sadd.s32 1, %s19
  $region7: #{woodbury_glow_forward.4} parent=0 // loop_footer_branch
    %18 = sbr.rel target = $region3
  $region8: #{woodbury_glow_forward.4} parent=0 // loop_exit
    _

// kernel: woodbury_glow_forward.7
$region0: #{woodbury_glow_forward.7}
  #allocation0 [shape = 'u32[]', space=smem, size = 0x4, offset = 0x4, fixed_abs, tag = 'smem constant byte address 0x4 - core index']
  #allocation1 [shape = 'u32[72,128]{1,0:T(1,128)}', space=vmem, size = 0x9000, scoped, tag = 'internal scratch']
  %s0 = inlined_call_operand.vmem [shape: f32[2,32,128], index: 0, kind: input, shape index: {}]
  %s1 = inlined_call_operand.vmem [shape: f32[32,128], index: 1, kind: input, shape index: {}]
  %s2 = inlined_call_operand.vmem [shape: f32[2,1,128], index: 2, kind: output, shape index: {}]
  %s3 = sld [smem:[#allocation0]]
  $region41: #{woodbury_glow_forward.7} parent=0
    _
  %s5 = ssub.s32 1, %s3
  %s6 = scalar_select 0, %s5, %s3
  loop: start=0, step=1, limit=4
  $region2: #{woodbury_glow_forward.7} parent=0 // loop_pre_header
    _
  $region3: #{woodbury_glow_forward.7} parent=0 // loop_header
    %s8 = sphi 0, %s12
    %p9 = scmp.ge.s32.totalorder %s8, 4
    %s18 = sphi 0, %s20
    %s21 = sphi 0, %s18
    %s22 = sphi 0, %s21
    %s38 = sphi 0, %s22
    %s42 = sphi 0, %s42
    %s44 = sphi 0, %s42
    %s45 = sphi 0, %s44
    %s59 = sphi 0, %s45
    %s65 = sphi 0, %s67
    %s68 = sphi 0, %s65
    %s69 = sphi 0, %s68
    %s85 = sphi 0, %s69
  $region4: #{woodbury_glow_forward.7} parent=0 // loop_header_branch
    %11 = sbr.rel (%p9) target = $region8
  $region5: #{woodbury_glow_forward.7} parent=0 // loop_body
    %s13 = ssub.s32 %s8, 1
    %s14 = ssub.s32 %s8, 2
    %s15 = sadd.s32 %s8, 1
    %s16 = ssub.s32 %s8, %s15
    %p17 = scmp.eq.s32.totalorder %s16, 0
    %s19 = sadd.s32 %s18, 1
    %s20 = scalar_select %p17, %s18, %s19
    %p23 = pneg %p17
    %p24 = scmp.eq.s32.totalorder %s8, 1
    %p25 = por %p23, %p24
    %p26 = scmp.ne.s32.totalorder %s18, %s21
    %p27 = scmp.eq.s32.totalorder %s8, 0
    %p28 = por %p26, %p27
    %p29 = scmp.ne.s32.totalorder %s18, %s21
    %p30 = scmp.eq.s32.totalorder %s13, 1
    %p31 = por %p29, %p30
    %p32 = scmp.ne.s32.totalorder %s21, %s22
    %p33 = scmp.eq.s32.totalorder %s13, 0
    %p34 = por %p32, %p33
    %p35 = scmp.ne.s32.totalorder %s21, %s22
    %p36 = scmp.eq.s32.totalorder %s14, 1
    %p37 = por %p35, %p36
    %p39 = scmp.ne.s32.totalorder %s22, %s38
    %p40 = scmp.eq.s32.totalorder %s14, 0
    %p41 = por %p39, %p40
    %s43 = sadd.s32 %s42, 1
    %p46 = scmp.eq.s32.totalorder %s8, 1
    %p47 = scmp.ne.s32.totalorder %s42, %s44
    %p48 = scmp.eq.s32.totalorder %s8, 0
    %p49 = por %p47, %p48
    %p50 = scmp.ne.s32.totalorder %s42, %s44
    %p51 = scmp.eq.s32.totalorder %s13, 1
    %p52 = por %p50, %p51
    %p53 = scmp.ne.s32.totalorder %s44, %s45
    %p54 = scmp.eq.s32.totalorder %s13, 0
    %p55 = por %p53, %p54
    %p56 = scmp.ne.s32.totalorder %s44, %s45
    %p57 = scmp.eq.s32.totalorder %s14, 1
    %p58 = por %p56, %p57
    %p60 = scmp.ne.s32.totalorder %s45, %s59
    %p61 = scmp.eq.s32.totalorder %s14, 0
    %p62 = por %p60, %p61
    %s63 = ssub.s32 %s8, %s15
    %p64 = scmp.eq.s32.totalorder %s63, 0
    %s66 = sadd.s32 %s65, 1
    %s67 = scalar_select %p64, %s65, %s66
    %p70 = pneg %p64
    %p71 = scmp.eq.s32.totalorder %s8, 1
    %p72 = por %p70, %p71
    %p73 = scmp.ne.s32.totalorder %s65, %s68
    %p74 = scmp.eq.s32.totalorder %s8, 0
    %p75 = por %p73, %p74
    %p76 = scmp.ne.s32.totalorder %s65, %s68
    %p77 = scmp.eq.s32.totalorder %s13, 1
    %p78 = por %p76, %p77
    %p79 = scmp.ne.s32.totalorder %s68, %s69
    %p80 = scmp.eq.s32.totalorder %s13, 0
    %p81 = por %p79, %p80
    %p82 = scmp.ne.s32.totalorder %s68, %s69
    %p83 = scmp.eq.s32.totalorder %s14, 1
    %p84 = por %p82, %p83
    %p86 = scmp.ne.s32.totalorder %s69, %s85
    %p87 = scmp.eq.s32.totalorder %s14, 0
    %p88 = por %p86, %p87
    %p89 = scmp.le.s32.totalorder 1, %s8
    %p90 = scmp.lt.s32.totalorder %s8, 3
    %p91 = pnand %p89, %p90
    %p92 = pneg %p91
    // Predicated region
    $region9: #{woodbury_glow_forward.7} parent=5 // pred_check
      _
    $region10: #{woodbury_glow_forward.7} parent=5 // pred_check_branch
      %94 = sbr.rel (%p91) target = $region12
    $region11: #{woodbury_glow_forward.7} parent=5 // pred_region
      %s95 = ssub.s32 %s8, 1
      // Predicated region
      $region13: #{woodbury_glow_forward.7} parent=11 // pred_check
        %p96 = pneg %p55
      $region14: #{woodbury_glow_forward.7} parent=11 // pred_check_branch
        %98 = sbr.rel (%p96) target = $region16
      $region15: #{woodbury_glow_forward.7} parent=11 // pred_region
        _
      $region16: #{woodbury_glow_forward.7} parent=11 // pred_fallthru
        _
    $region12: #{woodbury_glow_forward.7} parent=5 // pred_fallthru
      _
    %p99 = scmp.lt.s32.totalorder %s8, 2
    // Predicated region
    $region17: #{woodbury_glow_forward.7} parent=5 // pred_check
      %p100 = pneg %p99
    $region18: #{woodbury_glow_forward.7} parent=5 // pred_check_branch
      %102 = sbr.rel (%p100) target = $region20
    $region19: #{woodbury_glow_forward.7} parent=5 // pred_region
      // Predicated region
      $region21: #{woodbury_glow_forward.7} parent=19 // pred_check
        %p103 = pneg %p28
      $region22: #{woodbury_glow_forward.7} parent=19 // pred_check_branch
        %105 = sbr.rel (%p103) target = $region24
      $region23: #{woodbury_glow_forward.7} parent=19 // pred_region
        %p106 = scmp.lt.s32.totalorder %s8, 1
        %s107 = scalar_select %p106, %s8, 1
        %s108 = smul.addr %s107, 4
        %s109 = smul.addr %s108, 8
        %s110 = scalar_lea.vmem %s0, %s109
      $region24: #{woodbury_glow_forward.7} parent=19 // pred_fallthru
        _
    $region20: #{woodbury_glow_forward.7} parent=5 // pred_fallthru
      _
    %p111 = scmp.le.s32.totalorder 1, %s8
    %p112 = scmp.lt.s32.totalorder %s8, 3
    %p113 = pnand %p111, %p112
    %p114 = pneg %p113
    // Predicated region
    $region25: #{woodbury_glow_forward.7} parent=5 // pred_check
      _
    $region26: #{woodbury_glow_forward.7} parent=5 // pred_check_branch
      %116 = sbr.rel (%p113) target = $region28
    $region27: #{woodbury_glow_forward.7} parent=5 // pred_region
      %s117 = ssub.s32 %s8, 1
      %p118 = scmp.lt.s32.totalorder %s13, 1
      %s119 = scalar_select %p118, %s13, 1
      %s120 = smul.addr %s119, 4
      %s121 = smul.addr %s120, 8
      %s122 = scalar_lea.vmem %s0, %s121
      %p123 = pneg %p34
      %p124 = pneg %p31
      %p125 = pneg %p55
      %p126 = pneg %p52
      %p127 = pneg %p81
      %p128 = pneg %p78
      %p129 = scmp.lt.s32.totalorder %s13, 1
      %s130 = scalar_select %p129, %s13, 1
      %s131 = scalar_lea.vmem %s2, %s130
      %p132 = scmp.lt.s32.totalorder %s13, 1
      %s133 = scalar_select %p132, %s13, 1
      %s134 = smul.addr %s133, 4
      %s135 = smul.addr %s134, 8
      %s136 = scalar_lea.vmem %s0, %s135
      %p137 = scmp.lt.s32.totalorder %s13, 1
      %s138 = scalar_select %p137, %s13, 1
      %s139 = scalar_lea.vmem %s2, %s138
      %v140 = vld [vmem:[%s136] sm:$0xff]
      %v141 = vld [vmem:[%s136 + $0x8] sm:$0xff]
      %v142 = vld [vmem:[%s136 + $0x10] sm:$0xff]
      %v143 = vld [vmem:[%s136 + $0x18] sm:$0xff]
      %v144 = vmul.f32 %v140, %v140
      %v145 = vmul.f32 %v141, %v141
      %v146 = vmul.f32 %v142, %v142
      %v147 = vmul.f32 %v143, %v143
      %v148 = vadd.f32 %v144, 1.837877
      %v149 = vadd.f32 %v145, 1.837877
      %v150 = vadd.f32 %v146, 1.837877
      %v151 = vadd.f32 %v147, 1.837877
      %v152 = vmul.f32 %v148, -0.5
      %v153 = vmul.f32 %v149, -0.5
      %v154 = vmul.f32 %v150, -0.5
      %v155 = vmul.f32 %v151, -0.5
      %v156 = vld [vmem:[%s1] sm:$0xff]
      %v157 = vld [vmem:[%s1 + $0x8] sm:$0xff]
      %v158 = vld [vmem:[%s1 + $0x10] sm:$0xff]
      %v159 = vld [vmem:[%s1 + $0x18] sm:$0xff]
      %v160 = vmul.f32 %v152, %v156
      %v161 = vmul.f32 %v153, %v157
      %v162 = vmul.f32 %v154, %v158
      %v163 = vmul.f32 %v155, %v159
      %v164 = vadd.f32 %v160, %v161
      %v165 = vadd.f32 %v164, %v162
      %v166 = vadd.f32 %v165, %v163
      %v167 = vrot.slane %v166, 4
      %v168 = vadd.f32 %v166, %v167
      %v169 = vrot.slane %v168, 2
      %v170 = vadd.f32 %v168, %v169
      %v171 = vrot.slane %v170, 1
      %v172 = vadd.f32 %v170, %v171
      %173 = vst [vmem:[%s139] sm:$0x1] %v172
      %p174 = scmp.lt.s32.totalorder %s13, 1
      %s175 = scalar_select %p174, %s13, 1
      %s176 = scalar_lea.vmem %s2, %s175
      // Predicated region
      $region29: #{woodbury_glow_forward.7} parent=27 // pred_check
        %p177 = pneg %p78
      $region30: #{woodbury_glow_forward.7} parent=27 // pred_check_branch
        %179 = sbr.rel (%p177) target = $region32
      $region31: #{woodbury_glow_forward.7} parent=27 // pred_region
        _
      $region32: #{woodbury_glow_forward.7} parent=27 // pred_fallthru
        _
    $region28: #{woodbury_glow_forward.7} parent=5 // pred_fallthru
      _
    %p180 = scmp.le.s32.totalorder 2, %s8
    // Predicated region
    $region33: #{woodbury_glow_forward.7} parent=5 // pred_check
      %p181 = pneg %p180
    $region34: #{woodbury_glow_forward.7} parent=5 // pred_check_branch
      %183 = sbr.rel (%p181) target = $region36
    $region35: #{woodbury_glow_forward.7} parent=5 // pred_region
      %s184 = ssub.s32 %s8, 2
      // Predicated region
      $region37: #{woodbury_glow_forward.7} parent=35 // pred_check
        %p185 = pneg %p84
      $region38: #{woodbury_glow_forward.7} parent=35 // pred_check_branch
        %187 = sbr.rel (%p185) target = $region40
      $region39: #{woodbury_glow_forward.7} parent=35 // pred_region
        %p188 = scmp.lt.s32.totalorder %s14, 1
        %s189 = scalar_select %p188, %s14, 1
        %s190 = scalar_lea.vmem %s2, %s189
      $region40: #{woodbury_glow_forward.7} parent=35 // pred_fallthru
        _
    $region36: #{woodbury_glow_forward.7} parent=5 // pred_fallthru
      _
  $region6: #{woodbury_glow_forward.7} parent=0 // loop_footer
    %s12 = sadd.s32 1, %s8
  $region7: #{woodbury_glow_forward.7} parent=0 // loop_footer_branch
    %7 = sbr.rel target = $region3
  $region8: #{woodbury_glow_forward.7} parent=0 // loop_exit
    _

// kernel: woodbury_glow_forward.6
$region0: #{woodbury_glow_forward.6}
  #allocation0 [shape = 'u32[]', space=smem, size = 0x4, offset = 0x4, fixed_abs, tag = 'smem constant byte address 0x4 - core index']
  #allocation1 [shape = 'u32[72,128]{1,0:T(1,128)}', space=vmem, size = 0x9000, scoped, tag = 'internal scratch']
  %s0 = inlined_call_operand.vmem [shape: f32[2,32,128], index: 0, kind: input, shape index: {}]
  %s1 = inlined_call_operand.vmem [shape: bf16[2,32,32], index: 1, kind: input, shape index: {}]
  %s2 = inlined_call_operand.vmem [shape: f32[2,32,1], index: 2, kind: input, shape index: {}]
  %s3 = inlined_call_operand.vmem [shape: bf16[2,128,128], index: 3, kind: input, shape index: {}]
  %s4 = inlined_call_operand.vmem [shape: bf16[2,16,144], index: 4, kind: input, shape index: {}]
  %s5 = inlined_call_operand.vmem [shape: f32[2,16,1], index: 5, kind: input, shape index: {}]
  %s6 = inlined_call_operand.vmem [shape: bf16[2,16,16], index: 6, kind: input, shape index: {}]
  %s7 = inlined_call_operand.vmem [shape: f32[2,16,1], index: 7, kind: input, shape index: {}]
  %s8 = inlined_call_operand.vmem [shape: bf16[2,32,144], index: 8, kind: input, shape index: {}]
  %s9 = inlined_call_operand.vmem [shape: f32[2,32,1], index: 9, kind: input, shape index: {}]
  %s10 = inlined_call_operand.vmem [shape: f32[1,128], index: 10, kind: input, shape index: {}]
  %s11 = inlined_call_operand.vmem [shape: f32[2,32,128], index: 11, kind: output, shape index: {0}]
  %s12 = inlined_call_operand.vmem [shape: f32[2,1,128], index: 12, kind: output, shape index: {1}]
  %13 = xla_tuple %s11, %s12
  %s14 = sld [smem:[#allocation0]]
  $region89: #{woodbury_glow_forward.6} parent=0
    _
  %s16 = ssub.s32 1, %s14
  %s17 = scalar_select 0, %s16, %s14
  loop: start=0, step=1, limit=6
  $region2: #{woodbury_glow_forward.6} parent=0 // loop_pre_header
    _
  $region3: #{woodbury_glow_forward.6} parent=0 // loop_header
    %s19 = sphi 0, %s23
    %p20 = scmp.ge.s32.totalorder %s19, 6
    %s26 = sphi 0, %s38
    %s27 = sphi 0, %s34
    %s28 = sphi 0, %s26
    %s29 = sphi 0, %s27
    %s30 = sphi 0, %s28
    %s31 = sphi 0, %s29
    %s41 = sphi 0, %s43
    %s44 = sphi 0, %s41
    %s45 = sphi 0, %s44
    %s61 = sphi 0, %s45
    %s67 = sphi 0, %s69
    %s70 = sphi 0, %s67
    %s71 = sphi 0, %s70
    %s87 = sphi 0, %s71
    %s93 = sphi 0, %s95
    %s96 = sphi 0, %s93
    %s97 = sphi 0, %s96
    %s113 = sphi 0, %s97
    %s119 = sphi 0, %s121
    %s122 = sphi 0, %s119
    %s123 = sphi 0, %s122
    %s139 = sphi 0, %s123
    %s145 = sphi 0, %s147
    %s148 = sphi 0, %s145
    %s149 = sphi 0, %s148
    %s165 = sphi 0, %s149
    %s171 = sphi 0, %s173
    %s174 = sphi 0, %s171
    %s175 = sphi 0, %s174
    %s191 = sphi 0, %s175
    %s197 = sphi 0, %s199
    %s200 = sphi 0, %s197
    %s201 = sphi 0, %s200
    %s217 = sphi 0, %s201
    %s223 = sphi 0, %s225
    %s226 = sphi 0, %s223
    %s227 = sphi 0, %s226
    %s243 = sphi 0, %s227
    %s249 = sphi 0, %s251
    %s252 = sphi 0, %s249
    %s253 = sphi 0, %s252
    %s269 = sphi 0, %s253
    %s275 = sphi 0, %s277
    %s278 = sphi 0, %s275
    %s279 = sphi 0, %s278
    %s295 = sphi 0, %s279
    %s299 = sphi 0, %s299
    %s301 = sphi 0, %s299
    %s302 = sphi 0, %s301
    %s316 = sphi 0, %s302
    %s322 = sphi 0, %s324
    %s325 = sphi 0, %s322
    %s326 = sphi 0, %s325
    %s342 = sphi 0, %s326
    %s348 = sphi 0, %s350
    %s351 = sphi 0, %s348
    %s352 = sphi 0, %s351
    %s368 = sphi 0, %s352
  $region4: #{woodbury_glow_forward.6} parent=0 // loop_header_branch
    %22 = sbr.rel (%p20) target = $region8
  $region5: #{woodbury_glow_forward.6} parent=0 // loop_body
    %s24 = ssub.s32 %s19, 1
    %s25 = ssub.s32 %s19, 2
    %s32 = sadd.s32 1, %s27
    %p33 = scmp.ge.s32.totalorder %s32, 2
    %s34 = scalar_select %p33, 0, %s32
    %s35 = sadd.s32 1, %s26
    %s36 = scalar_select %p33, %s35, %s26
    %p37 = scmp.ge.s32.totalorder %s36, 2
    %s38 = scalar_select %p37, 0, %s36
    %s39 = ssub.s32 %s26, %s38
    %p40 = scmp.eq.s32.totalorder %s39, 0
    %s42 = sadd.s32 %s41, 1
    %s43 = scalar_select %p40, %s41, %s42
    %p46 = pneg %p40
    %p47 = scmp.eq.s32.totalorder %s19, 3
    %p48 = por %p46, %p47
    %p49 = scmp.ne.s32.totalorder %s41, %s44
    %p50 = scmp.eq.s32.totalorder %s19, 0
    %p51 = por %p49, %p50
    %p52 = scmp.ne.s32.totalorder %s41, %s44
    %p53 = scmp.eq.s32.totalorder %s24, 3
    %p54 = por %p52, %p53
    %p55 = scmp.ne.s32.totalorder %s44, %s45
    %p56 = scmp.eq.s32.totalorder %s24, 0
    %p57 = por %p55, %p56
    %p58 = scmp.ne.s32.totalorder %s44, %s45
    %p59 = scmp.eq.s32.totalorder %s25, 3
    %p60 = por %p58, %p59
    %p62 = scmp.ne.s32.totalorder %s45, %s61
    %p63 = scmp.eq.s32.totalorder %s25, 0
    %p64 = por %p62, %p63
    %s65 = ssub.s32 %s27, %s34
    %p66 = scmp.eq.s32.totalorder %s65, 0
    %s68 = sadd.s32 %s67, 1
    %s69 = scalar_select %p66, %s67, %s68
    %p72 = pneg %p66
    %p73 = scmp.eq.s32.totalorder %s19, 3
    %p74 = por %p72, %p73
    %p75 = scmp.ne.s32.totalorder %s67, %s70
    %p76 = scmp.eq.s32.totalorder %s19, 0
    %p77 = por %p75, %p76
    %p78 = scmp.ne.s32.totalorder %s67, %s70
    %p79 = scmp.eq.s32.totalorder %s24, 3
    %p80 = por %p78, %p79
    %p81 = scmp.ne.s32.totalorder %s70, %s71
    %p82 = scmp.eq.s32.totalorder %s24, 0
    %p83 = por %p81, %p82
    %p84 = scmp.ne.s32.totalorder %s70, %s71
    %p85 = scmp.eq.s32.totalorder %s25, 3
    %p86 = por %p84, %p85
    %p88 = scmp.ne.s32.totalorder %s71, %s87
    %p89 = scmp.eq.s32.totalorder %s25, 0
    %p90 = por %p88, %p89
    %s91 = ssub.s32 %s27, %s34
    %p92 = scmp.eq.s32.totalorder %s91, 0
    %s94 = sadd.s32 %s93, 1
    %s95 = scalar_select %p92, %s93, %s94
    %p98 = pneg %p92
    %p99 = scmp.eq.s32.totalorder %s19, 3
    %p100 = por %p98, %p99
    %p101 = scmp.ne.s32.totalorder %s93, %s96
    %p102 = scmp.eq.s32.totalorder %s19, 0
    %p103 = por %p101, %p102
    %p104 = scmp.ne.s32.totalorder %s93, %s96
    %p105 = scmp.eq.s32.totalorder %s24, 3
    %p106 = por %p104, %p105
    %p107 = scmp.ne.s32.totalorder %s96, %s97
    %p108 = scmp.eq.s32.totalorder %s24, 0
    %p109 = por %p107, %p108
    %p110 = scmp.ne.s32.totalorder %s96, %s97
    %p111 = scmp.eq.s32.totalorder %s25, 3
    %p112 = por %p110, %p111
    %p114 = scmp.ne.s32.totalorder %s97, %s113
    %p115 = scmp.eq.s32.totalorder %s25, 0
    %p116 = por %p114, %p115
    %s117 = ssub.s32 %s27, %s34
    %p118 = scmp.eq.s32.totalorder %s117, 0
    %s120 = sadd.s32 %s119, 1
    %s121 = scalar_select %p118, %s119, %s120
    %p124 = pneg %p118
    %p125 = scmp.eq.s32.totalorder %s19, 3
    %p126 = por %p124, %p125
    %p127 = scmp.ne.s32.totalorder %s119, %s122
    %p128 = scmp.eq.s32.totalorder %s19, 0
    %p129 = por %p127, %p128
    %p130 = scmp.ne.s32.totalorder %s119, %s122
    %p131 = scmp.eq.s32.totalorder %s24, 3
    %p132 = por %p130, %p131
    %p133 = scmp.ne.s32.totalorder %s122, %s123
    %p134 = scmp.eq.s32.totalorder %s24, 0
    %p135 = por %p133, %p134
    %p136 = scmp.ne.s32.totalorder %s122, %s123
    %p137 = scmp.eq.s32.totalorder %s25, 3
    %p138 = por %p136, %p137
    %p140 = scmp.ne.s32.totalorder %s123, %s139
    %p141 = scmp.eq.s32.totalorder %s25, 0
    %p142 = por %p140, %p141
    %s143 = ssub.s32 %s27, %s34
    %p144 = scmp.eq.s32.totalorder %s143, 0
    %s146 = sadd.s32 %s145, 1
    %s147 = scalar_select %p144, %s145, %s146
    %p150 = pneg %p144
    %p151 = scmp.eq.s32.totalorder %s19, 3
    %p152 = por %p150, %p151
    %p153 = scmp.ne.s32.totalorder %s145, %s148
    %p154 = scmp.eq.s32.totalorder %s19, 0
    %p155 = por %p153, %p154
    %p156 = scmp.ne.s32.totalorder %s145, %s148
    %p157 = scmp.eq.s32.totalorder %s24, 3
    %p158 = por %p156, %p157
    %p159 = scmp.ne.s32.totalorder %s148, %s149
    %p160 = scmp.eq.s32.totalorder %s24, 0
    %p161 = por %p159, %p160
    %p162 = scmp.ne.s32.totalorder %s148, %s149
    %p163 = scmp.eq.s32.totalorder %s25, 3
    %p164 = por %p162, %p163
    %p166 = scmp.ne.s32.totalorder %s149, %s165
    %p167 = scmp.eq.s32.totalorder %s25, 0
    %p168 = por %p166, %p167
    %s169 = ssub.s32 %s27, %s34
    %p170 = scmp.eq.s32.totalorder %s169, 0
    %s172 = sadd.s32 %s171, 1
    %s173 = scalar_select %p170, %s171, %s172
    %p176 = pneg %p170
    %p177 = scmp.eq.s32.totalorder %s19, 3
    %p178 = por %p176, %p177
    %p179 = scmp.ne.s32.totalorder %s171, %s174
    %p180 = scmp.eq.s32.totalorder %s19, 0
    %p181 = por %p179, %p180
    %p182 = scmp.ne.s32.totalorder %s171, %s174
    %p183 = scmp.eq.s32.totalorder %s24, 3
    %p184 = por %p182, %p183
    %p185 = scmp.ne.s32.totalorder %s174, %s175
    %p186 = scmp.eq.s32.totalorder %s24, 0
    %p187 = por %p185, %p186
    %p188 = scmp.ne.s32.totalorder %s174, %s175
    %p189 = scmp.eq.s32.totalorder %s25, 3
    %p190 = por %p188, %p189
    %p192 = scmp.ne.s32.totalorder %s175, %s191
    %p193 = scmp.eq.s32.totalorder %s25, 0
    %p194 = por %p192, %p193
    %s195 = ssub.s32 %s27, %s34
    %p196 = scmp.eq.s32.totalorder %s195, 0
    %s198 = sadd.s32 %s197, 1
    %s199 = scalar_select %p196, %s197, %s198
    %p202 = pneg %p196
    %p203 = scmp.eq.s32.totalorder %s19, 3
    %p204 = por %p202, %p203
    %p205 = scmp.ne.s32.totalorder %s197, %s200
    %p206 = scmp.eq.s32.totalorder %s19, 0
    %p207 = por %p205, %p206
    %p208 = scmp.ne.s32.totalorder %s197, %s200
    %p209 = scmp.eq.s32.totalorder %s24, 3
    %p210 = por %p208, %p209
    %p211 = scmp.ne.s32.totalorder %s200, %s201
    %p212 = scmp.eq.s32.totalorder %s24, 0
    %p213 = por %p211, %p212
    %p214 = scmp.ne.s32.totalorder %s200, %s201
    %p215 = scmp.eq.s32.totalorder %s25, 3
    %p216 = por %p214, %p215
    %p218 = scmp.ne.s32.totalorder %s201, %s217
    %p219 = scmp.eq.s32.totalorder %s25, 0
    %p220 = por %p218, %p219
    %s221 = ssub.s32 %s27, %s34
    %p222 = scmp.eq.s32.totalorder %s221, 0
    %s224 = sadd.s32 %s223, 1
    %s225 = scalar_select %p222, %s223, %s224
    %p228 = pneg %p222
    %p229 = scmp.eq.s32.totalorder %s19, 3
    %p230 = por %p228, %p229
    %p231 = scmp.ne.s32.totalorder %s223, %s226
    %p232 = scmp.eq.s32.totalorder %s19, 0
    %p233 = por %p231, %p232
    %p234 = scmp.ne.s32.totalorder %s223, %s226
    %p235 = scmp.eq.s32.totalorder %s24, 3
    %p236 = por %p234, %p235
    %p237 = scmp.ne.s32.totalorder %s226, %s227
    %p238 = scmp.eq.s32.totalorder %s24, 0
    %p239 = por %p237, %p238
    %p240 = scmp.ne.s32.totalorder %s226, %s227
    %p241 = scmp.eq.s32.totalorder %s25, 3
    %p242 = por %p240, %p241
    %p244 = scmp.ne.s32.totalorder %s227, %s243
    %p245 = scmp.eq.s32.totalorder %s25, 0
    %p246 = por %p244, %p245
    %s247 = ssub.s32 %s27, %s34
    %p248 = scmp.eq.s32.totalorder %s247, 0
    %s250 = sadd.s32 %s249, 1
    %s251 = scalar_select %p248, %s249, %s250
    %p254 = pneg %p248
    %p255 = scmp.eq.s32.totalorder %s19, 3
    %p256 = por %p254, %p255
    %p257 = scmp.ne.s32.totalorder %s249, %s252
    %p258 = scmp.eq.s32.totalorder %s19, 0
    %p259 = por %p257, %p258
    %p260 = scmp.ne.s32.totalorder %s249, %s252
    %p261 = scmp.eq.s32.totalorder %s24, 3
    %p262 = por %p260, %p261
    %p263 = scmp.ne.s32.totalorder %s252, %s253
    %p264 = scmp.eq.s32.totalorder %s24, 0
    %p265 = por %p263, %p264
    %p266 = scmp.ne.s32.totalorder %s252, %s253
    %p267 = scmp.eq.s32.totalorder %s25, 3
    %p268 = por %p266, %p267
    %p270 = scmp.ne.s32.totalorder %s253, %s269
    %p271 = scmp.eq.s32.totalorder %s25, 0
    %p272 = por %p270, %p271
    %s273 = ssub.s32 %s27, %s34
    %p274 = scmp.eq.s32.totalorder %s273, 0
    %s276 = sadd.s32 %s275, 1
    %s277 = scalar_select %p274, %s275, %s276
    %p280 = pneg %p274
    %p281 = scmp.eq.s32.totalorder %s19, 3
    %p282 = por %p280, %p281
    %p283 = scmp.ne.s32.totalorder %s275, %s278
    %p284 = scmp.eq.s32.totalorder %s19, 0
    %p285 = por %p283, %p284
    %p286 = scmp.ne.s32.totalorder %s275, %s278
    %p287 = scmp.eq.s32.totalorder %s24, 3
    %p288 = por %p286, %p287
    %p289 = scmp.ne.s32.totalorder %s278, %s279
    %p290 = scmp.eq.s32.totalorder %s24, 0
    %p291 = por %p289, %p290
    %p292 = scmp.ne.s32.totalorder %s278, %s279
    %p293 = scmp.eq.s32.totalorder %s25, 3
    %p294 = por %p292, %p293
    %p296 = scmp.ne.s32.totalorder %s279, %s295
    %p297 = scmp.eq.s32.totalorder %s25, 0
    %p298 = por %p296, %p297
    %s300 = sadd.s32 %s299, 1
    %p303 = scmp.eq.s32.totalorder %s19, 3
    %p304 = scmp.ne.s32.totalorder %s299, %s301
    %p305 = scmp.eq.s32.totalorder %s19, 0
    %p306 = por %p304, %p305
    %p307 = scmp.ne.s32.totalorder %s299, %s301
    %p308 = scmp.eq.s32.totalorder %s24, 3
    %p309 = por %p307, %p308
    %p310 = scmp.ne.s32.totalorder %s301, %s302
    %p311 = scmp.eq.s32.totalorder %s24, 0
    %p312 = por %p310, %p311
    %p313 = scmp.ne.s32.totalorder %s301, %s302
    %p314 = scmp.eq.s32.totalorder %s25, 3
    %p315 = por %p313, %p314
    %p317 = scmp.ne.s32.totalorder %s302, %s316
    %p318 = scmp.eq.s32.totalorder %s25, 0
    %p319 = por %p317, %p318
    %s320 = ssub.s32 %s26, %s38
    %p321 = scmp.eq.s32.totalorder %s320, 0
    %s323 = sadd.s32 %s322, 1
    %s324 = scalar_select %p321, %s322, %s323
    %p327 = pneg %p321
    %p328 = scmp.eq.s32.totalorder %s19, 3
    %p329 = por %p327, %p328
    %p330 = scmp.ne.s32.totalorder %s322, %s325
    %p331 = scmp.eq.s32.totalorder %s19, 0
    %p332 = por %p330, %p331
    %p333 = scmp.ne.s32.totalorder %s322, %s325
    %p334 = scmp.eq.s32.totalorder %s24, 3
    %p335 = por %p333, %p334
    %p336 = scmp.ne.s32.totalorder %s325, %s326
    %p337 = scmp.eq.s32.totalorder %s24, 0
    %p338 = por %p336, %p337
    %p339 = scmp.ne.s32.totalorder %s325, %s326
    %p340 = scmp.eq.s32.totalorder %s25, 3
    %p341 = por %p339, %p340
    %p343 = scmp.ne.s32.totalorder %s326, %s342
    %p344 = scmp.eq.s32.totalorder %s25, 0
    %p345 = por %p343, %p344
    %s346 = ssub.s32 %s26, %s38
    %p347 = scmp.eq.s32.totalorder %s346, 0
    %s349 = sadd.s32 %s348, 1
    %s350 = scalar_select %p347, %s348, %s349
    %p353 = pneg %p347
    %p354 = scmp.eq.s32.totalorder %s19, 3
    %p355 = por %p353, %p354
    %p356 = scmp.ne.s32.totalorder %s348, %s351
    %p357 = scmp.eq.s32.totalorder %s19, 0
    %p358 = por %p356, %p357
    %p359 = scmp.ne.s32.totalorder %s348, %s351
    %p360 = scmp.eq.s32.totalorder %s24, 3
    %p361 = por %p359, %p360
    %p362 = scmp.ne.s32.totalorder %s351, %s352
    %p363 = scmp.eq.s32.totalorder %s24, 0
    %p364 = por %p362, %p363
    %p365 = scmp.ne.s32.totalorder %s351, %s352
    %p366 = scmp.eq.s32.totalorder %s25, 3
    %p367 = por %p365, %p366
    %p369 = scmp.ne.s32.totalorder %s352, %s368
    %p370 = scmp.eq.s32.totalorder %s25, 0
    %p371 = por %p369, %p370
    %p372 = scmp.le.s32.totalorder 1, %s19
    %p373 = scmp.lt.s32.totalorder %s19, 5
    %p374 = pnand %p372, %p373
    %p375 = pneg %p374
    // Predicated region
    $region9: #{woodbury_glow_forward.6} parent=5 // pred_check
      _
    $region10: #{woodbury_glow_forward.6} parent=5 // pred_check_branch
      %377 = sbr.rel (%p374) target = $region12
    $region11: #{woodbury_glow_forward.6} parent=5 // pred_region
      %s378 = ssub.s32 %s19, 1
      // Predicated region
      $region13: #{woodbury_glow_forward.6} parent=11 // pred_check
        %p379 = pneg %p312
      $region14: #{woodbury_glow_forward.6} parent=11 // pred_check_branch
        %381 = sbr.rel (%p379) target = $region16
      $region15: #{woodbury_glow_forward.6} parent=11 // pred_region
        _
      $region16: #{woodbury_glow_forward.6} parent=11 // pred_fallthru
        _
    $region12: #{woodbury_glow_forward.6} parent=5 // pred_fallthru
      _
    %p382 = scmp.lt.s32.totalorder %s19, 4
    // Predicated region
    $region17: #{woodbury_glow_forward.6} parent=5 // pred_check
      %p383 = pneg %p382
    $region18: #{woodbury_glow_forward.6} parent=5 // pred_check_branch
      %385 = sbr.rel (%p383) target = $region20
    $region19: #{woodbury_glow_forward.6} parent=5 // pred_region
      // Predicated region
      $region21: #{woodbury_glow_forward.6} parent=19 // pred_check
        %p386 = pneg %p51
      $region22: #{woodbury_glow_forward.6} parent=19 // pred_check_branch
        %388 = sbr.rel (%p386) target = $region24
      $region23: #{woodbury_glow_forward.6} parent=19 // pred_region
        %p389 = scmp.lt.s32.totalorder %s26, 1
        %s390 = scalar_select %p389, %s26, 1
        %s391 = smul.addr %s390, 4
        %s392 = smul.addr %s391, 8
        %s393 = scalar_lea.vmem %s0, %s392
      $region24: #{woodbury_glow_forward.6} parent=19 // pred_fallthru
        _
      // Predicated region
      $region25: #{woodbury_glow_forward.6} parent=19 // pred_check
        %p394 = pneg %p77
      $region26: #{woodbury_glow_forward.6} parent=19 // pred_check_branch
        %396 = sbr.rel (%p394) target = $region28
      $region27: #{woodbury_glow_forward.6} parent=19 // pred_region
        %p397 = scmp.lt.s32.totalorder %s27, 1
        %s398 = scalar_select %p397, %s27, 1
        %s399 = smul.addr %s398, 4
        %s400 = smul.addr %s399, 4
        %s401 = scalar_lea.vmem %s1, %s400
      $region28: #{woodbury_glow_forward.6} parent=19 // pred_fallthru
        _
      // Predicated region
      $region29: #{woodbury_glow_forward.6} parent=19 // pred_check
        %p402 = pneg %p103
      $region30: #{woodbury_glow_forward.6} parent=19 // pred_check_branch
        %404 = sbr.rel (%p402) target = $region32
      $region31: #{woodbury_glow_forward.6} parent=19 // pred_region
        %p405 = scmp.lt.s32.totalorder %s27, 1
        %s406 = scalar_select %p405, %s27, 1
        %s407 = smul.addr %s406, 4
        %s408 = smul.addr %s407, 8
        %s409 = scalar_lea.vmem %s2, %s408
      $region32: #{woodbury_glow_forward.6} parent=19 // pred_fallthru
        _
      // Predicated region
      $region33: #{woodbury_glow_forward.6} parent=19 // pred_check
        %p410 = pneg %p129
      $region34: #{woodbury_glow_forward.6} parent=19 // pred_check_branch
        %412 = sbr.rel (%p410) target = $region36
      $region35: #{woodbury_glow_forward.6} parent=19 // pred_region
        %p413 = scmp.lt.s32.totalorder %s27, 1
        %s414 = scalar_select %p413, %s27, 1
        %s415 = smul.addr %s414, 16
        %s416 = smul.addr %s415, 4
        %s417 = scalar_lea.vmem %s3, %s416
      $region36: #{woodbury_glow_forward.6} parent=19 // pred_fallthru
        _
      // Predicated region
      $region37: #{woodbury_glow_forward.6} parent=19 // pred_check
        %p418 = pneg %p155
      $region38: #{woodbury_glow_forward.6} parent=19 // pred_check_branch
        %420 = sbr.rel (%p418) target = $region40
      $region39: #{woodbury_glow_forward.6} parent=19 // pred_region
        %p421 = scmp.lt.s32.totalorder %s27, 1
        %s422 = scalar_select %p421, %s27, 1
        %s423 = smul.addr %s422, 4
        %s424 = smul.addr %s423, 4
        %s425 = scalar_lea.vmem %s4, %s424
      $region40: #{woodbury_glow_forward.6} parent=19 // pred_fallthru
        _
      // Predicated region
      $region41: #{woodbury_glow_forward.6} parent=19 // pred_check
        %p426 = pneg %p181
      $region42: #{woodbury_glow_forward.6} parent=19 // pred_check_branch
        %428 = sbr.rel (%p426) target = $region44
      $region43: #{woodbury_glow_forward.6} parent=19 // pred_region
        %p429 = scmp.lt.s32.totalorder %s27, 1
        %s430 = scalar_select %p429, %s27, 1
        %s431 = smul.addr %s430, 2
        %s432 = smul.addr %s431, 8
        %s433 = scalar_lea.vmem %s5, %s432
      $region44: #{woodbury_glow_forward.6} parent=19 // pred_fallthru
        _
      // Predicated region
      $region45: #{woodbury_glow_forward.6} parent=19 // pred_check
        %p434 = pneg %p207
      $region46: #{woodbury_glow_forward.6} parent=19 // pred_check_branch
        %436 = sbr.rel (%p434) target = $region48
      $region47: #{woodbury_glow_forward.6} parent=19 // pred_region
        %p437 = scmp.lt.s32.totalorder %s27, 1
        %s438 = scalar_select %p437, %s27, 1
        %s439 = smul.addr %s438, 2
        %s440 = smul.addr %s439, 4
        %s441 = scalar_lea.vmem %s6, %s440
      $region48: #{woodbury_glow_forward.6} parent=19 // pred_fallthru
        _
      // Predicated region
      $region49: #{woodbury_glow_forward.6} parent=19 // pred_check
        %p442 = pneg %p233
      $region50: #{woodbury_glow_forward.6} parent=19 // pred_check_branch
        %444 = sbr.rel (%p442) target = $region52
      $region51: #{woodbury_glow_forward.6} parent=19 // pred_region
        %p445 = scmp.lt.s32.totalorder %s27, 1
        %s446 = scalar_select %p445, %s27, 1
        %s447 = smul.addr %s446, 2
        %s448 = smul.addr %s447, 8
        %s449 = scalar_lea.vmem %s7, %s448
      $region52: #{woodbury_glow_forward.6} parent=19 // pred_fallthru
        _
      // Predicated region
      $region53: #{woodbury_glow_forward.6} parent=19 // pred_check
        %p450 = pneg %p259
      $region54: #{woodbury_glow_forward.6} parent=19 // pred_check_branch
        %452 = sbr.rel (%p450) target = $region56
      $region55: #{woodbury_glow_forward.6} parent=19 // pred_region
        %p453 = scmp.lt.s32.totalorder %s27, 1
        %s454 = scalar_select %p453, %s27, 1
        %s455 = smul.addr %s454, 8
        %s456 = smul.addr %s455, 4
        %s457 = scalar_lea.vmem %s8, %s456
      $region56: #{woodbury_glow_forward.6} parent=19 // pred_fallthru
        _
      // Predicated region
      $region57: #{woodbury_glow_forward.6} parent=19 // pred_check
        %p458 = pneg %p285
      $region58: #{woodbury_glow_forward.6} parent=19 // pred_check_branch
        %460 = sbr.rel (%p458) target = $region60
      $region59: #{woodbury_glow_forward.6} parent=19 // pred_region
        %p461 = scmp.lt.s32.totalorder %s27, 1
        %s462 = scalar_select %p461, %s27, 1
        %s463 = smul.addr %s462, 4
        %s464 = smul.addr %s463, 8
        %s465 = scalar_lea.vmem %s9, %s464
      $region60: #{woodbury_glow_forward.6} parent=19 // pred_fallthru
        _
    $region20: #{woodbury_glow_forward.6} parent=5 // pred_fallthru
      _
    %p466 = scmp.le.s32.totalorder 1, %s19
    %p467 = scmp.lt.s32.totalorder %s19, 5
    %p468 = pnand %p466, %p467
    %p469 = pneg %p468
    // Predicated region
    $region61: #{woodbury_glow_forward.6} parent=5 // pred_check
      _
    $region62: #{woodbury_glow_forward.6} parent=5 // pred_check_branch
      %471 = sbr.rel (%p468) target = $region64
    $region63: #{woodbury_glow_forward.6} parent=5 // pred_region
      %s472 = ssub.s32 %s19, 1
      %p473 = scmp.lt.s32.totalorder %s28, 1
      %s474 = scalar_select %p473, %s28, 1
      %s475 = smul.addr %s474, 4
      %s476 = smul.addr %s475, 8
      %s477 = scalar_lea.vmem %s0, %s476
      %p478 = pneg %p57
      %p479 = pneg %p54
      %p480 = scmp.lt.s32.totalorder %s29, 1
      %s481 = scalar_select %p480, %s29, 1
      %s482 = smul.addr %s481, 4
      %s483 = smul.addr %s482, 4
      %s484 = scalar_lea.vmem %s1, %s483
      %p485 = pneg %p83
      %p486 = pneg %p80
      %p487 = scmp.lt.s32.totalorder %s29, 1
      %s488 = scalar_select %p487, %s29, 1
      %s489 = smul.addr %s488, 4
      %s490 = smul.addr %s489, 8
      %s491 = scalar_lea.vmem %s2, %s490
      %p492 = pneg %p109
      %p493 = pneg %p106
      %p494 = scmp.lt.s32.totalorder %s29, 1
      %s495 = scalar_select %p494, %s29, 1
      %s496 = smul.addr %s495, 16
      %s497 = smul.addr %s496, 4
      %s498 = scalar_lea.vmem %s3, %s497
      %p499 = pneg %p135
      %p500 = pneg %p132
      %p501 = scmp.lt.s32.totalorder %s29, 1
      %s502 = scalar_select %p501, %s29, 1
      %s503 = smul.addr %s502, 4
      %s504 = smul.addr %s503, 4
      %s505 = scalar_lea.vmem %s4, %s504
      %p506 = pneg %p161
      %p507 = pneg %p158
      %p508 = scmp.lt.s32.totalorder %s29, 1
      %s509 = scalar_select %p508, %s29, 1
      %s510 = smul.addr %s509, 2
      %s511 = smul.addr %s510, 8
      %s512 = scalar_lea.vmem %s5, %s511
      %p513 = pneg %p187
      %p514 = pneg %p184
      %p515 = scmp.lt.s32.totalorder %s29, 1
      %s516 = scalar_select %p515, %s29, 1
      %s517 = smul.addr %s516, 2
      %s518 = smul.addr %s517, 4
      %s519 = scalar_lea.vmem %s6, %s518
      %p520 = pneg %p213
      %p521 = pneg %p210
      %p522 = scmp.lt.s32.totalorder %s29, 1
      %s523 = scalar_select %p522, %s29, 1
      %s524 = smul.addr %s523, 2
      %s525 = smul.addr %s524, 8
      %s526 = scalar_lea.vmem %s7, %s525
      %p527 = pneg %p239
      %p528 = pneg %p236
      %p529 = scmp.lt.s32.totalorder %s29, 1
      %s530 = scalar_select %p529, %s29, 1
      %s531 = smul.addr %s530, 8
      %s532 = smul.addr %s531, 4
      %s533 = scalar_lea.vmem %s8, %s532
      %p534 = pneg %p265
      %p535 = pneg %p262
      %p536 = scmp.lt.s32.totalorder %s29, 1
      %s537 = scalar_select %p536, %s29, 1
      %s538 = smul.addr %s537, 4
      %s539 = smul.addr %s538, 8
      %s540 = scalar_lea.vmem %s9, %s539
      %p541 = pneg %p291
      %p542 = pneg %p288
      %p543 = pneg %p312
      %p544 = pneg %p309
      %p545 = pneg %p338
      %p546 = pneg %p335
      %p547 = scmp.lt.s32.totalorder %s28, 1
      %s548 = scalar_select %p547, %s28, 1
      %s549 = smul.addr %s548, 4
      %s550 = smul.addr %s549, 8
      %s551 = scalar_lea.vmem %s11, %s550
      %p552 = pneg %p364
      %p553 = pneg %p361
      %p554 = scmp.lt.s32.totalorder %s28, 1
      %s555 = scalar_select %p554, %s28, 1
      %s556 = scalar_lea.vmem %s12, %s555
      %p557 = scmp.lt.s32.totalorder %s28, 1
      %s558 = scalar_select %p557, %s28, 1
      %s559 = smul.addr %s558, 4
      %s560 = smul.addr %s559, 8
      %s561 = scalar_lea.vmem %s0, %s560
      %p562 = scmp.lt.s32.totalorder %s29, 1
      %s563 = scalar_select %p562, %s29, 1
      %s564 = smul.addr %s563, 4
      %s565 = smul.addr %s564, 4
      %s566 = scalar_lea.vmem %s1, %s565
      %p567 = scmp.lt.s32.totalorder %s29, 1
      %s568 = scalar_select %p567, %s29, 1
      %s569 = smul.addr %s568, 4
      %s570 = smul.addr %s569, 8
      %s571 = scalar_lea.vmem %s2, %s570
      %p572 = scmp.lt.s32.totalorder %s29, 1
      %s573 = scalar_select %p572, %s29, 1
      %s574 = smul.addr %s573, 16
      %s575 = smul.addr %s574, 4
      %s576 = scalar_lea.vmem %s3, %s575
      %p577 = scmp.lt.s32.totalorder %s29, 1
      %s578 = scalar_select %p577, %s29, 1
      %s579 = smul.addr %s578, 4
      %s580 = smul.addr %s579, 4
      %s581 = scalar_lea.vmem %s4, %s580
      %p582 = scmp.lt.s32.totalorder %s29, 1
      %s583 = scalar_select %p582, %s29, 1
      %s584 = smul.addr %s583, 2
      %s585 = smul.addr %s584, 8
      %s586 = scalar_lea.vmem %s5, %s585
      %p587 = scmp.lt.s32.totalorder %s29, 1
      %s588 = scalar_select %p587, %s29, 1
      %s589 = smul.addr %s588, 2
      %s590 = smul.addr %s589, 4
      %s591 = scalar_lea.vmem %s6, %s590
      %p592 = scmp.lt.s32.totalorder %s29, 1
      %s593 = scalar_select %p592, %s29, 1
      %s594 = smul.addr %s593, 2
      %s595 = smul.addr %s594, 8
      %s596 = scalar_lea.vmem %s7, %s595
      %p597 = scmp.lt.s32.totalorder %s29, 1
      %s598 = scalar_select %p597, %s29, 1
      %s599 = smul.addr %s598, 8
      %s600 = smul.addr %s599, 4
      %s601 = scalar_lea.vmem %s8, %s600
      %p602 = scmp.lt.s32.totalorder %s29, 1
      %s603 = scalar_select %p602, %s29, 1
      %s604 = smul.addr %s603, 4
      %s605 = smul.addr %s604, 8
      %s606 = scalar_lea.vmem %s9, %s605
      %p607 = scmp.lt.s32.totalorder %s28, 1
      %s608 = scalar_select %p607, %s28, 1
      %s609 = smul.addr %s608, 4
      %s610 = smul.addr %s609, 8
      %s611 = scalar_lea.vmem %s11, %s610
      %p612 = scmp.lt.s32.totalorder %s28, 1
      %s613 = scalar_select %p612, %s28, 1
      %s614 = scalar_lea.vmem %s12, %s613
      %p616 = scmp.eq.s32.totalorder %s29, 0
      // Predicated region
      $region65: #{woodbury_glow_forward.6} parent=63 // pred_check
        %p617 = pneg %p616
      $region66: #{woodbury_glow_forward.6} parent=63 // pred_check_branch
        %619 = sbr.rel (%p617) target = $region68
      $region67: #{woodbury_glow_forward.6} parent=63 // pred_region
        %v620 = vld [vmem:[%s561] sm:$0xff]
        %v621 = vld [vmem:[%s561 + $0x8] sm:$0xff]
        %v622 = vld [vmem:[%s561 + $0x10] sm:$0xff]
        %v623 = vld [vmem:[%s561 + $0x18] sm:$0xff]
        %624 = vst [vmem:[%s611] sm:$0xff] %v620
        %625 = vst [vmem:[%s611 + $0x8] sm:$0xff] %v621
        %626 = vst [vmem:[%s611 + $0x10] sm:$0xff] %v622
        %627 = vst [vmem:[%s611 + $0x18] sm:$0xff] %v623
        %628 = vst [vmem:[%s614] sm:$0x1] 0.0
      $region68: #{woodbury_glow_forward.6} parent=63 // pred_fallthru
        _
      %v629 = vld [vmem:[%s10] sm:$0x1]
      %v630 = vld [vmem:[%s611] sm:$0xff]
      %v631 = vld [vmem:[%s611 + $0x8] sm:$0xff]
      %v632 = vld [vmem:[%s611 + $0x10] sm:$0xff]
      %v633 = vld [vmem:[%s611 + $0x18] sm:$0xff]
      %v634 = vld [vmem:[%s566] sm:$0xf]
      %v635 = vld [vmem:[%s566 + $0x4] sm:$0xf]
      %v636 = vld [vmem:[%s566 + $0x8] sm:$0xf]
      %v637 = vld [vmem:[%s566 + $0xc] sm:$0xf]
      %v638 = vpack.c.bf16 %v631, %v630
      %v639 = vpack.c.bf16 %v633, %v632
      %v640 = vld [vmem:[%s571] sm:$0xff]
      %v641 = vld [vmem:[%s571 + $0x8] sm:$0xff]
      %v642 = vld [vmem:[%s571 + $0x10] sm:$0xff]
      %v643 = vld [vmem:[%s571 + $0x18] sm:$0xff]
      %645 = vset.pattern.permute.xlu0 0
      %646 = vperm.xlu0 %645, %v640
      %v647 = vpop.permute.xlu0 %646
      %650 = vset.pattern.permute.xlu0 0
      %651 = vperm.xlu0 %650, %v641
      %v652 = vpop.permute.xlu0 %651
      %655 = vset.pattern.permute.xlu0 0
      %656 = vperm.xlu0 %655, %v642
      %v657 = vpop.permute.xlu0 %656
      %660 = vset.pattern.permute.xlu0 0
      %661 = vperm.xlu0 %660, %v643
      %v662 = vpop.permute.xlu0 %661
      %v668 = vunpack.c.l.b16 %v634
      %v669 = vunpack.c.l.b16 %v635
      %v670 = vunpack.c.l.b16 %v636
      %v671 = vunpack.c.l.b16 %v637
      %v672 = vpack.c.b16 %v669, %v668
      %v673 = vpack.c.b16 %v671, %v670
      %vm674 = vcmask 261120
      %v676 = vsel %vm674, %v672, 0
      %v679 = vsel %vm674, %v673, 0
      %681 = vmatpush.bf16.msra.mxu0 0
      %682 = vmatpush.bf16.msra.mxu0 0
      %683 = vmatpush.bf16.msra.mxu0 0
      %684 = vmatpush.bf16.msra.mxu0 0
      %685 = vmatpush.bf16.msra.mxu0 0
      %686 = vmatpush.bf16.msra.mxu0 0
      %687 = vmatpush.bf16.msra.mxu0 %v639
      %688 = vmatpush.bf16.msra.mxu0 %v638
      %689 = vmatmul.bf16.gmra.mxu0 %v676
      %v690 = vpop.f32.mrf.mxu0
      %v691 = vadd.f32 %v647, %v690
      %v692 = vpop.f32.mrf.mxu0
      %v693 = vadd.f32 %v652, %v692
      %694 = vmatmul.bf16.gmra.mxu0 %v679
      %v695 = vpop.f32.mrf.mxu0
      %v696 = vadd.f32 %v657, %v695
      %v697 = vpop.f32.mrf.mxu0
      %v698 = vadd.f32 %v662, %v697
      %699 = vdwg.mxu0
      %v700 = vld [vmem:[%s576] sm:$0xf]
      %v701 = vld [vmem:[%s576 + $0x4] sm:$0xf]
      %v702 = vld [vmem:[%s576 + $0x8] sm:$0xf]
      %v703 = vld [vmem:[%s576 + $0xc] sm:$0xf]
      %v704 = vld [vmem:[%s576 + $0x10] sm:$0xf]
      %v705 = vld [vmem:[%s576 + $0x14] sm:$0xf]
      %v706 = vld [vmem:[%s576 + $0x18] sm:$0xf]
      %v707 = vld [vmem:[%s576 + $0x1c] sm:$0xf]
      %v708 = vld [vmem:[%s576 + $0x20] sm:$0xf]
      %v709 = vld [vmem:[%s576 + $0x24] sm:$0xf]
      %v710 = vld [vmem:[%s576 + $0x28] sm:$0xf]
      %v711 = vld [vmem:[%s576 + $0x2c] sm:$0xf]
      %v712 = vld [vmem:[%s576 + $0x30] sm:$0xf]
      %v713 = vld [vmem:[%s576 + $0x34] sm:$0xf]
      %v714 = vld [vmem:[%s576 + $0x38] sm:$0xf]
      %v715 = vld [vmem:[%s576 + $0x3c] sm:$0xf]
      %v716 = vpack.c.bf16 %v693, %v691
      %v717 = vpack.c.bf16 %v698, %v696
      %v734 = vunpack.c.l.b16 %v700
      %v735 = vunpack.c.l.b16 %v701
      %v736 = vunpack.c.l.b16 %v702
      %v737 = vunpack.c.l.b16 %v703
      %v738 = vunpack.c.l.b16 %v704
      %v739 = vunpack.c.l.b16 %v705
      %v740 = vunpack.c.l.b16 %v706
      %v741 = vunpack.c.l.b16 %v707
      %v742 = vunpack.c.l.b16 %v708
      %v743 = vunpack.c.l.b16 %v709
      %v744 = vunpack.c.l.b16 %v710
      %v745 = vunpack.c.l.b16 %v711
      %v746 = vunpack.c.l.b16 %v712
      %v747 = vunpack.c.l.b16 %v713
      %v748 = vunpack.c.l.b16 %v714
      %v749 = vunpack.c.l.b16 %v715
      %v750 = vpack.c.b16 %v735, %v734
      %v751 = vpack.c.b16 %v737, %v736
      %v752 = vpack.c.b16 %v739, %v738
      %v753 = vpack.c.b16 %v741, %v740
      %v754 = vpack.c.b16 %v743, %v742
      %v755 = vpack.c.b16 %v745, %v744
      %v756 = vpack.c.b16 %v747, %v746
      %v757 = vpack.c.b16 %v749, %v748
      %766 = vmatpush.bf16.msra.mxu0 %v757
      %767 = vmatpush.bf16.msra.mxu0 %v756
      %768 = vmatpush.bf16.msra.mxu0 %v755
      %769 = vmatpush.bf16.msra.mxu0 %v754
      %770 = vmatpush.bf16.msra.mxu0 %v753
      %771 = vmatpush.bf16.msra.mxu0 %v752
      %772 = vmatpush.bf16.msra.mxu0 %v751
      %773 = vmatpush.bf16.msra.mxu0 %v750
      %774 = vmatmul.bf16.gmra.mxu0 %v716
      %v775 = vpop.f32.mrf.mxu0
      %v776 = vadd.f32 0.0, %v775
      %v777 = vpop.f32.mrf.mxu0
      %v778 = vadd.f32 0.0, %v777
      %779 = vmatmul.bf16.gmra.mxu0 %v717
      %v780 = vpop.f32.mrf.mxu0
      %v781 = vadd.f32 0.0, %v780
      %v782 = vpop.f32.mrf.mxu0
      %v783 = vadd.f32 0.0, %v782
      %784 = vdwg.mxu0
      %v785 = vld [vmem:[%s581] sm:$0xff]
      %v786 = vld [vmem:[%s581 + $0x8] sm:$0xff]
      %v787 = vld [vmem:[%s586] sm:$0xff]
      %v788 = vld [vmem:[%s586 + $0x8] sm:$0xff]
      %789 = vrot.lane.b32.xlu0 %v776, 7
      %v790 = vpop.permute.xlu0 %789
      %791 = vrot.lane.b32.xlu0 %v778, 7
      %v792 = vpop.permute.xlu0 %791
      %793 = vrot.lane.b32.xlu0 %v776, 6
      %v794 = vpop.permute.xlu0 %793
      %795 = vrot.lane.b32.xlu0 %v778, 6
      %v796 = vpop.permute.xlu0 %795
      %797 = vrot.lane.b32.xlu0 %v776, 5
      %v798 = vpop.permute.xlu0 %797
      %799 = vrot.lane.b32.xlu0 %v778, 5
      %v800 = vpop.permute.xlu0 %799
      %801 = vrot.lane.b32.xlu0 %v776, 1
      %v802 = vpop.permute.xlu0 %801
      %803 = vrot.lane.b32.xlu0 %v778, 1
      %v804 = vpop.permute.xlu0 %803
      %805 = vrot.lane.b32.xlu0 %v776, 127
      %v806 = vpop.permute.xlu0 %805
      %807 = vrot.lane.b32.xlu0 %v778, 127
      %v808 = vpop.permute.xlu0 %807
      %809 = vrot.lane.b32.xlu0 %v776, 123
      %v810 = vpop.permute.xlu0 %809
      %811 = vrot.lane.b32.xlu0 %v778, 123
      %v812 = vpop.permute.xlu0 %811
      %813 = vrot.lane.b32.xlu0 %v776, 122
      %v814 = vpop.permute.xlu0 %813
      %815 = vrot.lane.b32.xlu0 %v778, 122
      %v816 = vpop.permute.xlu0 %815
      %817 = vrot.lane.b32.xlu0 %v776, 121
      %v818 = vpop.permute.xlu0 %817
      %819 = vrot.lane.b32.xlu0 %v778, 121
      %v820 = vpop.permute.xlu0 %819
      %v821 = vpack.c.bf16 %v792, %v790
      %v822 = vpack.c.bf16 %v796, %v794
      %v823 = vpack.c.bf16 %v800, %v798
      %v824 = vpack.c.bf16 %v804, %v802
      %v825 = vpack.c.bf16 %v778, %v776
      %v826 = vpack.c.bf16 %v808, %v806
      %v827 = vpack.c.bf16 %v812, %v810
      %v828 = vpack.c.bf16 %v816, %v814
      %v829 = vpack.c.bf16 %v820, %v818
      %831 = vset.pattern.permute.xlu0 0
      %832 = vperm.xlu0 %831, %v787
      %v833 = vpop.permute.xlu0 %832
      %836 = vset.pattern.permute.xlu0 0
      %837 = vperm.xlu0 %836, %v788
      %v838 = vpop.permute.xlu0 %837
      %v842 = vunpack.c.l.b16 %v785
      %v843 = vunpack.c.h.b16 %v785
      %v844 = vunpack.c.l.b16 %v786
      %v845 = vunpack.c.h.b16 %v786
      %v846 = vpack.c.b16 %v844, %v842
      %v847 = vpack.c.b16 %v845, %v843
      %vm849 = vcmask 130048
      %v851 = vsel %vm849, %v847, 0
      %853 = vmatpush.bf16.msra.mxu0 %v828
      %854 = vmatpush.bf16.msra.mxu0 %v827
      %855 = vmatpush.bf16.msra.mxu0 %v826
      %856 = vmatpush.bf16.msra.mxu0 %v825
      %857 = vmatpush.bf16.msra.mxu0 %v824
      %858 = vmatpush.bf16.msra.mxu0 %v823
      %859 = vmatpush.bf16.msra.mxu0 %v822
      %860 = vmatpush.bf16.msra.mxu0 %v821
      %861 = vmatmul.bf16.gmra.mxu0 %v846
      %v862 = vpop.f32.mrf.mxu0
      %v863 = vadd.f32 %v833, %v862
      %v864 = vpop.f32.mrf.mxu0
      %v865 = vadd.f32 %v838, %v864
      %866 = vdwg.mxu0
      %867 = vmatpush.bf16.msra.mxu0 0
      %868 = vmatpush.bf16.msra.mxu0 0
      %869 = vmatpush.bf16.msra.mxu0 0
      %870 = vmatpush.bf16.msra.mxu0 0
      %871 = vmatpush.bf16.msra.mxu0 0
      %872 = vmatpush.bf16.msra.mxu0 0
      %873 = vmatpush.bf16.msra.mxu0 0
      %874 = vmatpush.bf16.msra.mxu0 %v829
      %875 = vmatmul.bf16.gmra.mxu0 %v851
      %v876 = vpop.f32.mrf.mxu0
      %v877 = vadd.f32 %v863, %v876
      %v878 = vpop.f32.mrf.mxu0
      %v879 = vadd.f32 %v865, %v878
      %880 = vdwg.mxu0
      %v881 = vmax.f32 %v877, 0.0
      %v882 = vmax.f32 %v879, 0.0
      %v883 = vld [vmem:[%s591] sm:$0xf]
      %v884 = vld [vmem:[%s591 + $0x4] sm:$0xf]
      %v885 = vpack.c.bf16 %v882, %v881
      %v886 = vld [vmem:[%s596] sm:$0xff]
      %v887 = vld [vmem:[%s596 + $0x8] sm:$0xff]
      %889 = vset.pattern.permute.xlu0 0
      %890 = vperm.xlu0 %889, %v886
      %v891 = vpop.permute.xlu0 %890
      %894 = vset.pattern.permute.xlu0 0
      %895 = vperm.xlu0 %894, %v887
      %v896 = vpop.permute.xlu0 %895
      %v900 = vunpack.c.l.b16 %v883
      %v901 = vunpack.c.l.b16 %v884
      %v902 = vpack.c.b16 %v901, %v900
      %v904 = vsel %vm849, %v902, 0
      %906 = vmatpush.bf16.msra.mxu0 0
      %907 = vmatpush.bf16.msra.mxu0 0
      %908 = vmatpush.bf16.msra.mxu0 0
      %909 = vmatpush.bf16.msra.mxu0 0
      %910 = vmatpush.bf16.msra.mxu0 0
      %911 = vmatpush.bf16.msra.mxu0 0
      %912 = vmatpush.bf16.msra.mxu0 0
      %913 = vmatpush.bf16.msra.mxu0 %v885
      %914 = vmatmul.bf16.gmra.mxu0 %v904
      %v915 = vpop.f32.mrf.mxu0
      %v916 = vadd.f32 %v891, %v915
      %v917 = vpop.f32.mrf.mxu0
      %v918 = vadd.f32 %v896, %v917
      %919 = vdwg.mxu0
      %v920 = vmax.f32 %v916, 0.0
      %v921 = vmax.f32 %v918, 0.0
      %v923 = vperm.slane %v629, 0
      %v925 = vmul.f32 %v920, %v923
      %v926 = vmul.f32 %v921, %v923
      %v927 = vld [vmem:[%s601] sm:$0xff]
      %v928 = vld [vmem:[%s601 + $0x8] sm:$0xff]
      %v929 = vld [vmem:[%s601 + $0x10] sm:$0xff]
      %v930 = vld [vmem:[%s601 + $0x18] sm:$0xff]
      %v931 = vld [vmem:[%s606] sm:$0xff]
      %v932 = vld [vmem:[%s606 + $0x8] sm:$0xff]
      %v933 = vld [vmem:[%s606 + $0x10] sm:$0xff]
      %v934 = vld [vmem:[%s606 + $0x18] sm:$0xff]
      %935 = vrot.lane.b32.xlu0 %v925, 7
      %v936 = vpop.permute.xlu0 %935
      %937 = vrot.lane.b32.xlu0 %v926, 7
      %v938 = vpop.permute.xlu0 %937
      %939 = vrot.lane.b32.xlu0 %v925, 6
      %v940 = vpop.permute.xlu0 %939
      %941 = vrot.lane.b32.xlu0 %v926, 6
      %v942 = vpop.permute.xlu0 %941
      %943 = vrot.lane.b32.xlu0 %v925, 5
      %v944 = vpop.permute.xlu0 %943
      %945 = vrot.lane.b32.xlu0 %v926, 5
      %v946 = vpop.permute.xlu0 %945
      %947 = vrot.lane.b32.xlu0 %v925, 1
      %v948 = vpop.permute.xlu0 %947
      %949 = vrot.lane.b32.xlu0 %v926, 1
      %v950 = vpop.permute.xlu0 %949
      %951 = vrot.lane.b32.xlu0 %v925, 127
      %v952 = vpop.permute.xlu0 %951
      %953 = vrot.lane.b32.xlu0 %v926, 127
      %v954 = vpop.permute.xlu0 %953
      %955 = vrot.lane.b32.xlu0 %v925, 123
      %v956 = vpop.permute.xlu0 %955
      %957 = vrot.lane.b32.xlu0 %v926, 123
      %v958 = vpop.permute.xlu0 %957
      %959 = vrot.lane.b32.xlu0 %v925, 122
      %v960 = vpop.permute.xlu0 %959
      %961 = vrot.lane.b32.xlu0 %v926, 122
      %v962 = vpop.permute.xlu0 %961
      %963 = vrot.lane.b32.xlu0 %v925, 121
      %v964 = vpop.permute.xlu0 %963
      %965 = vrot.lane.b32.xlu0 %v926, 121
      %v966 = vpop.permute.xlu0 %965
      %v967 = vpack.c.bf16 %v938, %v936
      %v968 = vpack.c.bf16 %v942, %v940
      %v969 = vpack.c.bf16 %v946, %v944
      %v970 = vpack.c.bf16 %v950, %v948
      %v971 = vpack.c.bf16 %v926, %v925
      %v972 = vpack.c.bf16 %v954, %v952
      %v973 = vpack.c.bf16 %v958, %v956
      %v974 = vpack.c.bf16 %v962, %v960
      %v975 = vpack.c.bf16 %v966, %v964
      %977 = vset.pattern.permute.xlu0 0
      %978 = vperm.xlu0 %977, %v931
      %v979 = vpop.permute.xlu0 %978
      %982 = vset.pattern.permute.xlu0 0
      %983 = vperm.xlu0 %982, %v932
      %v984 = vpop.permute.xlu0 %983
      %987 = vset.pattern.permute.xlu0 0
      %988 = vperm.xlu0 %987, %v933
      %v989 = vpop.permute.xlu0 %988
      %992 = vset.pattern.permute.xlu0 0
      %993 = vperm.xlu0 %992, %v934
      %v994 = vpop.permute.xlu0 %993
      %v1000 = vunpack.c.l.b16 %v927
      %v1001 = vunpack.c.h.b16 %v927
      %v1002 = vunpack.c.l.b16 %v928
      %v1003 = vunpack.c.h.b16 %v928
      %v1004 = vunpack.c.l.b16 %v929
      %v1005 = vunpack.c.h.b16 %v929
      %v1006 = vunpack.c.l.b16 %v930
      %v1007 = vunpack.c.h.b16 %v930
      %v1008 = vpack.c.b16 %v1002, %v1000
      %v1009 = vpack.c.b16 %v1003, %v1001
      %v1010 = vpack.c.b16 %v1006, %v1004
      %v1011 = vpack.c.b16 %v1007, %v1005
      %v1015 = vsel %vm849, %v1009, 0
      %v1018 = vsel %vm849, %v1011, 0
      %1020 = vmatpush.bf16.msra.mxu0 %v974
      %1021 = vmatpush.bf16.msra.mxu0 %v973
      %1022 = vmatpush.bf16.msra.mxu0 %v972
      %1023 = vmatpush.bf16.msra.mxu0 %v971
      %1024 = vmatpush.bf16.msra.mxu0 %v970
      %1025 = vmatpush.bf16.msra.mxu0 %v969
      %1026 = vmatpush.bf16.msra.mxu0 %v968
      %1027 = vmatpush.bf16.msra.mxu0 %v967
      %1028 = vmatmul.bf16.gmra.mxu0 %v1008
      %v1029 = vpop.f32.mrf.mxu0
      %v1030 = vadd.f32 %v979, %v1029
      %v1031 = vpop.f32.mrf.mxu0
      %v1032 = vadd.f32 %v984, %v1031
      %1033 = vmatmul.bf16.gmra.mxu0 %v1010
      %v1034 = vpop.f32.mrf.mxu0
      %v1035 = vadd.f32 %v989, %v1034
      %v1036 = vpop.f32.mrf.mxu0
      %v1037 = vadd.f32 %v994, %v1036
      %1038 = vdwg.mxu0
      %1039 = vmatpush.bf16.msra.mxu0 0
      %1040 = vmatpush.bf16.msra.mxu0 0
      %1041 = vmatpush.bf16.msra.mxu0 0
      %1042 = vmatpush.bf16.msra.mxu0 0
      %1043 = vmatpush.bf16.msra.mxu0 0
      %1044 = vmatpush.bf16.msra.mxu0 0
      %1045 = vmatpush.bf16.msra.mxu0 0
      %1046 = vmatpush.bf16.msra.mxu0 %v975
      %1047 = vmatmul.bf16.gmra.mxu0 %v1015
      %v1048 = vpop.f32.mrf.mxu0
      %v1049 = vadd.f32 %v1030, %v1048
      %v1050 = vpop.f32.mrf.mxu0
      %v1051 = vadd.f32 %v1032, %v1050
      %1052 = vmatmul.bf16.gmra.mxu0 %v1018
      %v1053 = vpop.f32.mrf.mxu0
      %v1054 = vadd.f32 %v1035, %v1053
      %v1055 = vpop.f32.mrf.mxu0
      %v1056 = vadd.f32 %v1037, %v1055
      %1057 = vdwg.mxu0
      %v1058 = vadd.f32 %v1054, 2.0
      %v1059 = vadd.f32 %v1056, 2.0
      %v1060 = vand.u32 2147483647, %v1058
      %v1061 = vand.u32 2147483647, %v1059
      %v1062 = vsub.f32 0.0, %v1060
      %v1063 = vsub.f32 0.0, %v1061
      %v1064 = vmul.f32 %v1062, 1.442695
      %v1065 = vpow.pop %v1064
      %v1066 = vmul.f32 %v1063, 1.442695
      %v1067 = vpow.pop %v1066
      %v1068 = vadd.f32 %v1065, 1.0
      %v1069 = vadd.f32 %v1067, 1.0
      %v1070 = vrcp.pop %v1068
      %v1071 = vrcp.pop %v1069
      %vm1072 = vcmp.ge.f32.partialorder %v1058, 0.0
      %vm1073 = vcmp.ge.f32.partialorder %v1059, 0.0
      %v1074 = vmul.f32 %v1065, %v1070
      %v1075 = vmul.f32 %v1067, %v1071
      %v1076 = vsel %vm1072, %v1070, %v1074
      %v1077 = vsel %vm1073, %v1071, %v1075
      %v1078 = vmin.f32 %v1058, 0.0
      %v1079 = vmin.f32 %v1059, 0.0
      %v1080 = vlog2.pop %v1068
      %v1081 = vmul.f32 %v1080, 0.6931472
      %v1082 = vlog2.pop %v1069
      %v1083 = vmul.f32 %v1082, 0.6931472
      %v1084 = vsub.f32 %v1078, %v1081
      %v1085 = vsub.f32 %v1079, %v1083
      %1086 = vst [vmem:[%s611] sm:$0xff] %v776
      %1087 = vst [vmem:[%s611 + $0x8] sm:$0xff] %v778
      %v1088 = vadd.f32 %v781, %v1049
      %v1089 = vadd.f32 %v783, %v1051
      %v1090 = vmul.f32 %v1088, %v1076
      %v1091 = vmul.f32 %v1089, %v1077
      %1092 = vst [vmem:[%s611 + $0x10] sm:$0xff] %v1090
      %1093 = vst [vmem:[%s611 + $0x18] sm:$0xff] %v1091
      %v1094 = vld [vmem:[%s614] sm:$0x1]
      %v1095 = vmul.f32 %v1084, %v923
      %v1096 = vmul.f32 %v1085, %v923
      %v1097 = vadd.f32 %v1095, %v1096
      %v1098 = vrot.slane %v1097, 4
      %v1099 = vadd.f32 %v1097, %v1098
      %v1100 = vrot.slane %v1099, 2
      %v1101 = vadd.f32 %v1099, %v1100
      %v1102 = vrot.slane %v1101, 1
      %v1103 = vadd.f32 %v1101, %v1102
      %v1104 = vadd.f32 %v1094, %v1103
      %1105 = vst [vmem:[%s614] sm:$0x1] %v1104
      %p1106 = scmp.lt.s32.totalorder %s28, 1
      %s1107 = scalar_select %p1106, %s28, 1
      %s1108 = smul.addr %s1107, 4
      %s1109 = smul.addr %s1108, 8
      %s1110 = scalar_lea.vmem %s11, %s1109
      %p1111 = scmp.lt.s32.totalorder %s28, 1
      %s1112 = scalar_select %p1111, %s28, 1
      %s1113 = scalar_lea.vmem %s12, %s1112
      // Predicated region
      $region69: #{woodbury_glow_forward.6} parent=63 // pred_check
        %p1114 = pneg %p335
      $region70: #{woodbury_glow_forward.6} parent=63 // pred_check_branch
        %1116 = sbr.rel (%p1114) target = $region72
      $region71: #{woodbury_glow_forward.6} parent=63 // pred_region
        _
      $region72: #{woodbury_glow_forward.6} parent=63 // pred_fallthru
        _
      // Predicated region
      $region73: #{woodbury_glow_forward.6} parent=63 // pred_check
        %p1117 = pneg %p361
      $region74: #{woodbury_glow_forward.6} parent=63 // pred_check_branch
        %1119 = sbr.rel (%p1117) target = $region76
      $region75: #{woodbury_glow_forward.6} parent=63 // pred_region
        _
      $region76: #{woodbury_glow_forward.6} parent=63 // pred_fallthru
        _
    $region64: #{woodbury_glow_forward.6} parent=5 // pred_fallthru
      _
    %p1120 = scmp.le.s32.totalorder 2, %s19
    // Predicated region
    $region77: #{woodbury_glow_forward.6} parent=5 // pred_check
      %p1121 = pneg %p1120
    $region78: #{woodbury_glow_forward.6} parent=5 // pred_check_branch
      %1123 = sbr.rel (%p1121) target = $region80
    $region79: #{woodbury_glow_forward.6} parent=5 // pred_region
      %s1124 = ssub.s32 %s19, 2
      // Predicated region
      $region81: #{woodbury_glow_forward.6} parent=79 // pred_check
        %p1125 = pneg %p341
      $region82: #{woodbury_glow_forward.6} parent=79 // pred_check_branch
        %1127 = sbr.rel (%p1125) target = $region84
      $region83: #{woodbury_glow_forward.6} parent=79 // pred_region
        %p1128 = scmp.lt.s32.totalorder %s30, 1
        %s1129 = scalar_select %p1128, %s30, 1
        %s1130 = smul.addr %s1129, 4
        %s1131 = smul.addr %s1130, 8
        %s1132 = scalar_lea.vmem %s11, %s1131
      $region84: #{woodbury_glow_forward.6} parent=79 // pred_fallthru
        _
      // Predicated region
      $region85: #{woodbury_glow_forward.6} parent=79 // pred_check
        %p1133 = pneg %p367
      $region86: #{woodbury_glow_forward.6} parent=79 // pred_check_branch
        %1135 = sbr.rel (%p1133) target = $region88
      $region87: #{woodbury_glow_forward.6} parent=79 // pred_region
        %p1136 = scmp.lt.s32.totalorder %s30, 1
        %s1137 = scalar_select %p1136, %s30, 1
        %s1138 = scalar_lea.vmem %s12, %s1137
      $region88: #{woodbury_glow_forward.6} parent=79 // pred_fallthru
        _
    $region80: #{woodbury_glow_forward.6} parent=5 // pred_fallthru
      _
  $region6: #{woodbury_glow_forward.6} parent=0 // loop_footer
    %s23 = sadd.s32 1, %s19
  $region7: #{woodbury_glow_forward.6} parent=0 // loop_footer_branch
    %18 = sbr.rel target = $region3
  $region8: #{woodbury_glow_forward.6} parent=0 // loop_exit
    _

// kernel: custom-call.37
$region0: #{custom-call.37}
  %s0 = inlined_call_operand.vmem [shape: f32[4,4], index: 0, kind: input, shape index: {}]
  %s1 = inlined_call_operand.vmem [shape: f32[4,4], index: 1, kind: output, shape index: {0}]
  %s2 = inlined_call_operand.hbm [shape: s32[4], index: 2, kind: output, shape index: {1}]
  %s3 = inlined_call_operand.hbm [shape: s32[4], index: 3, kind: output, shape index: {2}]
  %4 = xla_tuple %s1, %s2, %s3
  $region1: #{custom-call.37} parent=0
    #allocation0 [shape = 'u8[4096]{0}', space=vmem, size = 0x1000, scoped, tag = 'operand span for operand 0']
    #allocation1 [shape = 'u8[2048]{0}', space=vmem, size = 0x800, scoped, tag = 'packed  for operand 0']
    #allocation2 [shape = 'u8[4096]{0}', space=vmem, size = 0x1000, scoped, tag = 'operand span for operand 1']
    #allocation3 [shape = 'u8[2048]{0}', space=vmem, size = 0x800, scoped, tag = 'packed  for operand 1']
    #allocation4 [shape = 'u8[4096]{0}', space=vmem, size = 0x1000, scoped, tag = 'operand span for operand 2']
    #allocation5 [shape = 'u8[512]{0}', space=vmem, size = 0x400, scoped, tag = 'packed  for operand 2']
    #allocation6 [shape = 's32[1]{0}', space=sflag, size = 0x4, scoped, tag = 'scoped memory for custom-call.37']
    #allocation7 [shape = 'u8[4096]{0}', space=vmem, size = 0x1000, scoped, tag = 'operand span for operand 3']
    #allocation8 [shape = 'u8[512]{0}', space=vmem, size = 0x400, scoped, tag = 'packed  for operand 3']
    #allocation9 [shape = 's32[1]{0}', space=sflag, size = 0x4, scoped, tag = 'scoped memory for custom-call.37']
    #allocation10 [shape = 's32[4,128]{1,0}', space=vmem, size = 0x1000, scoped, tag = 'scratch for permutations']
    %5 = vsyncpa [#allocation6], 0
    %6 = vsyncpa [#allocation9], 0
    // Predicated region
    $region2: #{custom-call.37} parent=1 // pred_check
      _
    $region3: #{custom-call.37} parent=1 // pred_check_branch
      %8 = sbr.rel (0) target = $region5
    $region4: #{custom-call.37} parent=1 // pred_region
      %p10 = scmp.gt.s32.totalorder 0, 0
      // Predicated region
      $region6: #{custom-call.37} parent=4 // pred_check
        %p11 = pneg %p10
      $region7: #{custom-call.37} parent=4 // pred_check_branch
        %13 = sbr.rel (%p11) target = $region9
      $region8: #{custom-call.37} parent=4 // pred_region
        %s14 = ssub.s32 0, 1
        %s15 = smul.u32 %s14, 8
        %s16 = scalar_lea.vmem %s0, %s15
        %v17 = vld [vmem:[%s0] sm:$0xff]
        // While loop
        $region10: #{custom-call.37} parent=8 // loop_pre_header
          _
        $region11: #{custom-call.37} parent=8 // loop_header
          %s18 = sphi %s0, %s40
          %s19 = sphi [#allocation1], %s41
          %v20 = vphi %v17, %v42
          %s21 = ssub.s32 %s16, 64
          %p22 = scmp.gt.s32.totalorder %s18, %s21
        $region12: #{custom-call.37} parent=8 // loop_header_branch
          %24 = sbr.rel (%p22) target = $region16
        $region13: #{custom-call.37} parent=8 // loop_body
          %25 = vst [vmem:[%s19] sm:$0xff] %v20
          %v26 = vld [vmem:[%s18 + $0x8] sm:$0xff]
          %27 = vst [vmem:[%s19 + $0x8] sm:$0xff] %v26
          %v28 = vld [vmem:[%s18 + $0x10] sm:$0xff]
          %29 = vst [vmem:[%s19 + $0x10] sm:$0xff] %v28
          %v30 = vld [vmem:[%s18 + $0x18] sm:$0xff]
          %31 = vst [vmem:[%s19 + $0x18] sm:$0xff] %v30
          %v32 = vld [vmem:[%s18 + $0x20] sm:$0xff]
          %33 = vst [vmem:[%s19 + $0x20] sm:$0xff] %v32
          %v34 = vld [vmem:[%s18 + $0x28] sm:$0xff]
          %35 = vst [vmem:[%s19 + $0x28] sm:$0xff] %v34
          %v36 = vld [vmem:[%s18 + $0x30] sm:$0xff]
          %37 = vst [vmem:[%s19 + $0x30] sm:$0xff] %v36
          %v38 = vld [vmem:[%s18 + $0x38] sm:$0xff]
          %39 = vst [vmem:[%s19 + $0x38] sm:$0xff] %v38
        $region14: #{custom-call.37} parent=8 // loop_footer
          %s40 = scalar_lea.vmem %s18, 64
          %s41 = scalar_lea.vmem %s19, 64
          %v42 = vld [vmem:[%s18 + $0x40] sm:$0xff]
        $region15: #{custom-call.37} parent=8 // loop_footer_branch
          %43 = sbr.rel target = $region11
        $region16: #{custom-call.37} parent=8 // loop_exit
          _
        // While loop
        $region17: #{custom-call.37} parent=8 // loop_pre_header
          _
        $region18: #{custom-call.37} parent=8 // loop_header
          %s44 = sphi %s18, %s52
          %s45 = sphi %s19, %s53
          %v46 = vphi %v20, %v46
          %p47 = scmp.gt.s32.totalorder %s44, %s16
        $region19: #{custom-call.37} parent=8 // loop_header_branch
          %49 = sbr.rel (%p47) target = $region23
        $region20: #{custom-call.37} parent=8 // loop_body
          %v50 = vld [vmem:[%s44] sm:$0xff]
          %51 = vst [vmem:[%s45] sm:$0xff] %v50
        $region21: #{custom-call.37} parent=8 // loop_footer
          %s52 = scalar_lea.vmem %s44, 8
          %s53 = scalar_lea.vmem %s45, 8
        $region22: #{custom-call.37} parent=8 // loop_footer_branch
          %54 = sbr.rel target = $region18
        $region23: #{custom-call.37} parent=8 // loop_exit
          _
      $region9: #{custom-call.37} parent=4 // pred_fallthru
        _
      %s56 = ssub.s32 16, 1
      %s57 = smul.u32 0, 8
      %s58 = scalar_lea.vmem [#allocation1], %s57
      %s59 = smul.u32 0, 8
      %s60 = scalar_lea.vmem %s0, %s59
      %v61 = vld [vmem:[%s60] sm:%s56]
      %62 = vst [vmem:[%s58] sm:%s56] %v61
    $region5: #{custom-call.37} parent=1 // pred_fallthru
      _
    %s64 = ssub.s32 16, 1
    %v65 = vld [vmem:[#allocation1] sm:%s64]
    %66 = vst [vmem:[#allocation0] sm:%s64] %v65
    %v67 = vld [vmem:[#allocation0] sm:$0xff]
    %68 = vst [vmem:[#allocation2] sm:$0xff] %v67
    %69 = vst [vmem:[#allocation4] sm:$0x1] 0
    %v70 = vlaneseq
    %v71 = vshrl.u32 %v70, 7
    %v72 = vmov %v71
    %74 = vst [vmem:[#allocation10] sm:$0xff] %v72
    loop: start=0, step=1, limit=4
    $region25: #{custom-call.37} parent=1 // loop_pre_header
      _
    $region26: #{custom-call.37} parent=1 // loop_header
      %s76 = sphi 0, %s80
      %p77 = scmp.ge.s32.totalorder %s76, 4
    $region27: #{custom-call.37} parent=1 // loop_header_branch
      %79 = sbr.rel (%p77) target = $region31
    $region28: #{custom-call.37} parent=1 // loop_body
      %v81 = vstv %s76
      %v82 = vlaneseq
      %v83 = vshrl.u32 %v82, 7
      %v84 = vmov %v83
      %v85 = vld [vmem:[#allocation2] sm:$0xff]
      %v86 = vand.u32 2147483647, %v85
      %v88 = vstv %s76
      %vm89 = vcmp.ge.s32.totalorder %v84, %v88
      %vm90 = vcmp.lt.s32.totalorder %v84, 4
      %vm91 = vmand %vm89, %vm90
      %vm92 = vcmp.lt.f32.partialorder -inf, %v86
      %vm93 = vmand %vm91, %vm92
      %v94 = vsel %vm93, %v84, %v81
      %v95 = vsel %vm93, %v86, -inf
      %v96 = vrot.slane %v95, 1
      %v97 = vrot.slane %v94, 1
      %vm98 = vcmp.ge.f32.partialorder %v96, %v95
      %v99 = vsel %vm98, %v96, %v95
      %v100 = vsel %vm98, %v97, %v94
      %v101 = vrot.slane %v96, 1
      %v102 = vrot.slane %v97, 1
      %vm103 = vcmp.ge.f32.partialorder %v101, %v99
      %v104 = vsel %vm103, %v101, %v99
      %v105 = vsel %vm103, %v102, %v100
      %v106 = vrot.slane %v101, 1
      %v107 = vrot.slane %v102, 1
      %vm108 = vcmp.ge.f32.partialorder %v106, %v104
      %v109 = vsel %vm108, %v106, %v104
      %v110 = vsel %vm108, %v107, %v105
      %v111 = vrot.slane %v106, 1
      %v112 = vrot.slane %v107, 1
      %vm113 = vcmp.ge.f32.partialorder %v111, %v109
      %v114 = vsel %vm113, %v111, %v109
      %v115 = vsel %vm113, %v112, %v110
      %v116 = vrot.slane %v111, 1
      %v117 = vrot.slane %v112, 1
      %vm118 = vcmp.ge.f32.partialorder %v116, %v114
      %v119 = vsel %vm118, %v116, %v114
      %v120 = vsel %vm118, %v117, %v115
      %v121 = vrot.slane %v116, 1
      %v122 = vrot.slane %v117, 1
      %vm123 = vcmp.ge.f32.partialorder %v121, %v119
      %v124 = vsel %vm123, %v121, %v119
      %v125 = vsel %vm123, %v122, %v120
      %v126 = vrot.slane %v121, 1
      %v127 = vrot.slane %v122, 1
      %vm128 = vcmp.ge.f32.partialorder %v126, %v124
      %v129 = vsel %vm128, %v126, %v124
      %v130 = vsel %vm128, %v127, %v125
      %s131 = ssub.s32 128, %s76
      %132 = vrot.lane.b32.xlu0 %v130, %s131
      %v133 = vpop.permute.xlu0 %132
      %s134 = vtos %v133
      %v135 = vstv %s76
      %v136 = vlaneseq
      %v137 = vand.u32 %v136, 127
      %vm138 = vcmp.eq.s32.totalorder %v137, %v135
      %v139 = vstv %s134
      %v140 = vld [vmem:[#allocation4] ss:$0 sm:$0xff]
      %v141 = vsel %vm138, %v139, %v140
      %142 = vst [vmem:[#allocation4] sm:$0x1] %v141
      %s143 = scalar_lea.vmem [#allocation2], %s76
      %s144 = scalar_lea.vmem [#allocation2], %s134
      %v145 = vld [vmem:[%s143] ss:$0 sm:$0xff]
      %v146 = vld [vmem:[%s144] ss:$0 sm:$0xff]
      %147 = vst [vmem:[%s144] sm:$0x1] %v145
      %148 = vst [vmem:[%s143] sm:$0x1] %v146
      %s149 = scalar_lea.vmem [#allocation10], %s76
      %s150 = scalar_lea.vmem [#allocation10], %s134
      %v151 = vld [vmem:[%s149] ss:$0 sm:$0xff]
      %v152 = vld [vmem:[%s150] ss:$0 sm:$0xff]
      %153 = vst [vmem:[%s150] sm:$0x1] %v151
      %154 = vst [vmem:[%s149] sm:$0x1] %v152
      %vm155 = vcmp.ne.f32.partialorder %v146, 0.0
      %vm156 = vmand %vm138, %vm155
      %v157 = vsel %vm156, %v146, 1.0
      %v158 = vlaneseq
      %v159 = vand.u32 %v158, 127
      %v160 = vstv %s76
      %vm161 = vcmp.gt.s32.totalorder %v159, %v160
      %v162 = vsel %vm161, %v146, 0.0
      %v163 = vlaneseq
      %v164 = vshrl.u32 %v163, 7
      %v165 = vmov %v164
      %v166 = vld [vmem:[#allocation2] sm:$0xff]
      %v168 = vstv %s76
      %vm169 = vcmp.gt.s32.totalorder %v165, %v168
      %v170 = vsel %vm169, %v157, 1.0
      %v171 = vrcp.pop %v170
      %v172 = vmul.f32 %v170, %v171
      %v173 = vsub.f32 1.0, %v172
      %v174 = vmul.f32 %v171, %v173
      %v175 = vadd.f32 %v171, %v174
      %vm176 = vweird.f32 %v170
      %vm177 = vweird.f32 %v171
      %vm178 = vmor %vm176, %vm177
      %v179 = vsel %vm178, %v171, %v175
      %v180 = vand.u32 2147483647, %v170
      %vm181 = vcmp.eq.f32.partialorder %v180, 8.507059e+37
      %v182 = vand.u32 %v170, 2147483648
      %v183 = vor.u32 1.1754944e-38, %v182
      %v184 = vsel %vm181, %v183, %v179
      %v185 = vmul.f32 %v166, %v184
      %vm186 = vmand %vm169, %vm138
      %v187 = vsel %vm186, %v185, 0.0
      %188 = vadd.xlane.f32.xlu0 %v187
      %v189 = vpop.xlane.xlu0 %188
      %v190 = vmul.f32 %v189, %v162
      %v191 = vsub.f32 %v185, %v190
      %192 = vst [vmem:[#allocation2] sm:$0xff] %v191
    $region29: #{custom-call.37} parent=1 // loop_footer
      %s80 = sadd.s32 1, %s76
    $region30: #{custom-call.37} parent=1 // loop_footer_branch
      %75 = sbr.rel target = $region26
    $region31: #{custom-call.37} parent=1 // loop_exit
      _
    %v193 = vld [vmem:[#allocation10] sm:$0xff]
    %s194 = scalar_lea.vmem [#allocation10], 8
    %s195 = scalar_lea.vmem [#allocation10], 16
    %s196 = scalar_lea.vmem [#allocation10], 24
    %s197 = scalar_lea.vmem [#allocation10], 32
    %s198 = scalar_lea.vmem [#allocation10], 40
    %s199 = scalar_lea.vmem [#allocation10], 48
    %s200 = scalar_lea.vmem [#allocation10], 56
    %s201 = scalar_lea.vmem [#allocation10], 64
    %s202 = scalar_lea.vmem [#allocation10], 72
    %s203 = scalar_lea.vmem [#allocation10], 80
    %s204 = scalar_lea.vmem [#allocation10], 88
    %s205 = scalar_lea.vmem [#allocation10], 96
    %s206 = scalar_lea.vmem [#allocation10], 104
    %s207 = scalar_lea.vmem [#allocation10], 112
    %s208 = scalar_lea.vmem [#allocation10], 120
    %209 = vxpose.xlu0.b32.start [1/16] %v193, 128
    %210 = vxpose.xlu0.b32.cont [2/16] 0, 128
    %211 = vxpose.xlu0.b32.cont [3/16] 0, 128
    %212 = vxpose.xlu0.b32.cont [4/16] 0, 128
    %213 = vxpose.xlu0.b32.cont [5/16] 0, 128
    %214 = vxpose.xlu0.b32.cont [6/16] 0, 128
    %215 = vxpose.xlu0.b32.cont [7/16] 0, 128
    %216 = vxpose.xlu0.b32.cont [8/16] 0, 128
    %217 = vxpose.xlu0.b32.cont [9/16] 0, 128
    %218 = vxpose.xlu0.b32.cont [10/16] 0, 128
    %219 = vxpose.xlu0.b32.cont [11/16] 0, 128
    %220 = vxpose.xlu0.b32.cont [12/16] 0, 128
    %221 = vxpose.xlu0.b32.cont [13/16] 0, 128
    %222 = vxpose.xlu0.b32.cont [14/16] 0, 128
    %223 = vxpose.xlu0.b32.cont [15/16] 0, 128
    %224 = vxpose.xlu0.b32.end [16/16] 0, 128
    %v225 = vpop.trf.xlu0
    %v226 = vpop.trf.xlu0
    %v227 = vpop.trf.xlu0
    %v228 = vpop.trf.xlu0
    %v229 = vpop.trf.xlu0
    %v230 = vpop.trf.xlu0
    %v231 = vpop.trf.xlu0
    %v232 = vpop.trf.xlu0
    %v233 = vpop.trf.xlu0
    %v234 = vpop.trf.xlu0
    %v235 = vpop.trf.xlu0
    %v236 = vpop.trf.xlu0
    %v237 = vpop.trf.xlu0
    %v238 = vpop.trf.xlu0
    %v239 = vpop.trf.xlu0
    %v240 = vpop.trf.xlu0
    %241 = vst [vmem:[#allocation7] sm:$0x1] %v225
    %s243 = ssub.s32 16, 1
    %v244 = vld [vmem:[#allocation2] sm:%s243]
    %s246 = ssub.s32 16, 1
    %247 = vst [vmem:[#allocation3] sm:%s246] %v244
    %s249 = ssub.s32 2, 1
    %v250 = vld [vmem:[#allocation4] sm:%s249]
    %s252 = ssub.s32 2, 1
    %253 = vst [vmem:[#allocation5] sm:%s252] %v250
    %s255 = ssub.s32 2, 1
    %v256 = vld [vmem:[#allocation7] sm:%s255]
    %s258 = ssub.s32 2, 1
    %259 = vst [vmem:[#allocation8] sm:%s258] %v256
    // Predicated region
    $region32: #{custom-call.37} parent=1 // pred_check
      _
    $region33: #{custom-call.37} parent=1 // pred_check_branch
      %261 = sbr.rel (0) target = $region35
    $region34: #{custom-call.37} parent=1 // pred_region
      %p263 = scmp.gt.s32.totalorder 0, 0
      // Predicated region
      $region36: #{custom-call.37} parent=34 // pred_check
        %p264 = pneg %p263
      $region37: #{custom-call.37} parent=34 // pred_check_branch
        %266 = sbr.rel (%p264) target = $region39
      $region38: #{custom-call.37} parent=34 // pred_region
        %s267 = ssub.s32 0, 1
        %s268 = smul.u32 %s267, 8
        %s269 = scalar_lea.vmem [#allocation3], %s268
        %v270 = vld [vmem:[#allocation3] sm:$0xff]
        // While loop
        $region40: #{custom-call.37} parent=38 // loop_pre_header
          _
        $region41: #{custom-call.37} parent=38 // loop_header
          %s271 = sphi [#allocation3], %s293
          %s272 = sphi %s1, %s294
          %v273 = vphi %v270, %v295
          %s274 = ssub.s32 %s269, 64
          %p275 = scmp.gt.s32.totalorder %s271, %s274
        $region42: #{custom-call.37} parent=38 // loop_header_branch
          %277 = sbr.rel (%p275) target = $region46
        $region43: #{custom-call.37} parent=38 // loop_body
          %278 = vst [vmem:[%s272] sm:$0xff] %v273
          %v279 = vld [vmem:[%s271 + $0x8] sm:$0xff]
          %280 = vst [vmem:[%s272 + $0x8] sm:$0xff] %v279
          %v281 = vld [vmem:[%s271 + $0x10] sm:$0xff]
          %282 = vst [vmem:[%s272 + $0x10] sm:$0xff] %v281
          %v283 = vld [vmem:[%s271 + $0x18] sm:$0xff]
          %284 = vst [vmem:[%s272 + $0x18] sm:$0xff] %v283
          %v285 = vld [vmem:[%s271 + $0x20] sm:$0xff]
          %286 = vst [vmem:[%s272 + $0x20] sm:$0xff] %v285
          %v287 = vld [vmem:[%s271 + $0x28] sm:$0xff]
          %288 = vst [vmem:[%s272 + $0x28] sm:$0xff] %v287
          %v289 = vld [vmem:[%s271 + $0x30] sm:$0xff]
          %290 = vst [vmem:[%s272 + $0x30] sm:$0xff] %v289
          %v291 = vld [vmem:[%s271 + $0x38] sm:$0xff]
          %292 = vst [vmem:[%s272 + $0x38] sm:$0xff] %v291
        $region44: #{custom-call.37} parent=38 // loop_footer
          %s293 = scalar_lea.vmem %s271, 64
          %s294 = scalar_lea.vmem %s272, 64
          %v295 = vld [vmem:[%s271 + $0x40] sm:$0xff]
        $region45: #{custom-call.37} parent=38 // loop_footer_branch
          %296 = sbr.rel target = $region41
        $region46: #{custom-call.37} parent=38 // loop_exit
          _
        // While loop
        $region47: #{custom-call.37} parent=38 // loop_pre_header
          _
        $region48: #{custom-call.37} parent=38 // loop_header
          %s297 = sphi %s271, %s305
          %s298 = sphi %s272, %s306
          %v299 = vphi %v273, %v299
          %p300 = scmp.gt.s32.totalorder %s297, %s269
        $region49: #{custom-call.37} parent=38 // loop_header_branch
          %302 = sbr.rel (%p300) target = $region53
        $region50: #{custom-call.37} parent=38 // loop_body
          %v303 = vld [vmem:[%s297] sm:$0xff]
          %304 = vst [vmem:[%s298] sm:$0xff] %v303
        $region51: #{custom-call.37} parent=38 // loop_footer
          %s305 = scalar_lea.vmem %s297, 8
          %s306 = scalar_lea.vmem %s298, 8
        $region52: #{custom-call.37} parent=38 // loop_footer_branch
          %307 = sbr.rel target = $region48
        $region53: #{custom-call.37} parent=38 // loop_exit
          _
      $region39: #{custom-call.37} parent=34 // pred_fallthru
        _
      %s309 = ssub.s32 16, 1
      %s310 = smul.u32 0, 8
      %s311 = scalar_lea.vmem %s1, %s310
      %s312 = smul.u32 0, 8
      %s313 = scalar_lea.vmem [#allocation3], %s312
      %v314 = vld [vmem:[%s313] sm:%s309]
      %315 = vst [vmem:[%s311] sm:%s309] %v314
    $region35: #{custom-call.37} parent=1 // pred_fallthru
      _
    // Predicated region
    $region54: #{custom-call.37} parent=1 // pred_check
      _
    $region55: #{custom-call.37} parent=1 // pred_check_branch
      %317 = sbr.rel (0) target = $region57
    $region56: #{custom-call.37} parent=1 // pred_region
      %319 = vsyncadd [#allocation6], 0
      %s321 = sshll.u32 [#allocation5], 4
      %s322 = int_to_ptr.vmem [resolvable:$true] %s321
      %s323 = sshll.u32 %s2, 4
      %s324 = int_to_ptr.hbm [resolvable:$true] %s323
      %326 = dma.vmem_to_hbm [thread:$0]  %s322, 16, %s324, [#allocation6]
    $region57: #{custom-call.37} parent=1 // pred_fallthru
      _
    // Predicated region
    $region58: #{custom-call.37} parent=1 // pred_check
      _
    $region59: #{custom-call.37} parent=1 // pred_check_branch
      %328 = sbr.rel (0) target = $region61
    $region60: #{custom-call.37} parent=1 // pred_region
      %330 = vsyncadd [#allocation9], 0
      %s332 = sshll.u32 [#allocation8], 4
      %s333 = int_to_ptr.vmem [resolvable:$true] %s332
      %s334 = sshll.u32 %s3, 4
      %s335 = int_to_ptr.hbm [resolvable:$true] %s334
      %337 = dma.vmem_to_hbm [thread:$0]  %s333, 16, %s335, [#allocation9]
    $region61: #{custom-call.37} parent=1 // pred_fallthru
      _
    // Predicated region
    $region62: #{custom-call.37} parent=1 // pred_check
      _
    $region63: #{custom-call.37} parent=1 // pred_check_branch
      %339 = sbr.rel (0) target = $region65
    $region64: #{custom-call.37} parent=1 // pred_region
      %341 = dma.done [#allocation6], 16
    $region65: #{custom-call.37} parent=1 // pred_fallthru
      _
    // Predicated region
    $region66: #{custom-call.37} parent=1 // pred_check
      _
    $region67: #{custom-call.37} parent=1 // pred_check_branch
      %343 = sbr.rel (0) target = $region69
    $region68: #{custom-call.37} parent=1 // pred_region
      %345 = dma.done [#allocation9], 16
    $region69: #{custom-call.37} parent=1 // pred_fallthru
      _
    %346 = vsyncpa [#allocation6], 1
    %347 = vsyncpa [#allocation9], 1

// kernel: woodbury_glow_forward.5
$region0: #{woodbury_glow_forward.5}
  #allocation0 [shape = 'u32[]', space=smem, size = 0x4, offset = 0x4, fixed_abs, tag = 'smem constant byte address 0x4 - core index']
  #allocation1 [shape = 'u32[72,128]{1,0:T(1,128)}', space=vmem, size = 0x9000, scoped, tag = 'internal scratch']
  %s0 = inlined_call_operand.vmem [shape: f32[2,16,128], index: 0, kind: input, shape index: {}]
  %s1 = inlined_call_operand.vmem [shape: bf16[16,72], index: 1, kind: input, shape index: {}]
  %s2 = inlined_call_operand.vmem [shape: f32[16,1], index: 2, kind: input, shape index: {}]
  %s3 = inlined_call_operand.vmem [shape: f32[1,128], index: 3, kind: input, shape index: {}]
  %s4 = inlined_call_operand.vmem [shape: f32[2,1,128], index: 4, kind: output, shape index: {}]
  %s5 = sld [smem:[#allocation0]]
  $region49: #{woodbury_glow_forward.5} parent=0
    _
  %s7 = ssub.s32 1, %s5
  %s8 = scalar_select 0, %s7, %s5
  loop: start=0, step=1, limit=4
  $region2: #{woodbury_glow_forward.5} parent=0 // loop_pre_header
    _
  $region3: #{woodbury_glow_forward.5} parent=0 // loop_header
    %s10 = sphi 0, %s14
    %p11 = scmp.ge.s32.totalorder %s10, 4
    %s20 = sphi 0, %s22
    %s23 = sphi 0, %s20
    %s24 = sphi 0, %s23
    %s40 = sphi 0, %s24
    %s44 = sphi 0, %s44
    %s46 = sphi 0, %s44
    %s47 = sphi 0, %s46
    %s61 = sphi 0, %s47
    %s65 = sphi 0, %s65
    %s67 = sphi 0, %s65
    %s68 = sphi 0, %s67
    %s82 = sphi 0, %s68
    %s86 = sphi 0, %s86
    %s88 = sphi 0, %s86
    %s89 = sphi 0, %s88
    %s103 = sphi 0, %s89
    %s109 = sphi 0, %s111
    %s112 = sphi 0, %s109
    %s113 = sphi 0, %s112
    %s129 = sphi 0, %s113
  $region4: #{woodbury_glow_forward.5} parent=0 // loop_header_branch
    %13 = sbr.rel (%p11) target = $region8
  $region5: #{woodbury_glow_forward.5} parent=0 // loop_body
    %s15 = ssub.s32 %s10, 1
    %s16 = ssub.s32 %s10, 2
    %s17 = sadd.s32 %s10, 1
    %s18 = ssub.s32 %s10, %s17
    %p19 = scmp.eq.s32.totalorder %s18, 0
    %s21 = sadd.s32 %s20, 1
    %s22 = scalar_select %p19, %s20, %s21
    %p25 = pneg %p19
    %p26 = scmp.eq.s32.totalorder %s10, 1
    %p27 = por %p25, %p26
    %p28 = scmp.ne.s32.totalorder %s20, %s23
    %p29 = scmp.eq.s32.totalorder %s10, 0
    %p30 = por %p28, %p29
    %p31 = scmp.ne.s32.totalorder %s20, %s23
    %p32 = scmp.eq.s32.totalorder %s15, 1
    %p33 = por %p31, %p32
    %p34 = scmp.ne.s32.totalorder %s23, %s24
    %p35 = scmp.eq.s32.totalorder %s15, 0
    %p36 = por %p34, %p35
    %p37 = scmp.ne.s32.totalorder %s23, %s24
    %p38 = scmp.eq.s32.totalorder %s16, 1
    %p39 = por %p37, %p38
    %p41 = scmp.ne.s32.totalorder %s24, %s40
    %p42 = scmp.eq.s32.totalorder %s16, 0
    %p43 = por %p41, %p42
    %s45 = sadd.s32 %s44, 1
    %p48 = scmp.eq.s32.totalorder %s10, 1
    %p49 = scmp.ne.s32.totalorder %s44, %s46
    %p50 = scmp.eq.s32.totalorder %s10, 0
    %p51 = por %p49, %p50
    %p52 = scmp.ne.s32.totalorder %s44, %s46
    %p53 = scmp.eq.s32.totalorder %s15, 1
    %p54 = por %p52, %p53
    %p55 = scmp.ne.s32.totalorder %s46, %s47
    %p56 = scmp.eq.s32.totalorder %s15, 0
    %p57 = por %p55, %p56
    %p58 = scmp.ne.s32.totalorder %s46, %s47
    %p59 = scmp.eq.s32.totalorder %s16, 1
    %p60 = por %p58, %p59
    %p62 = scmp.ne.s32.totalorder %s47, %s61
    %p63 = scmp.eq.s32.totalorder %s16, 0
    %p64 = por %p62, %p63
    %s66 = sadd.s32 %s65, 1
    %p69 = scmp.eq.s32.totalorder %s10, 1
    %p70 = scmp.ne.s32.totalorder %s65, %s67
    %p71 = scmp.eq.s32.totalorder %s10, 0
    %p72 = por %p70, %p71
    %p73 = scmp.ne.s32.totalorder %s65, %s67
    %p74 = scmp.eq.s32.totalorder %s15, 1
    %p75 = por %p73, %p74
    %p76 = scmp.ne.s32.totalorder %s67, %s68
    %p77 = scmp.eq.s32.totalorder %s15, 0
    %p78 = por %p76, %p77
    %p79 = scmp.ne.s32.totalorder %s67, %s68
    %p80 = scmp.eq.s32.totalorder %s16, 1
    %p81 = por %p79, %p80
    %p83 = scmp.ne.s32.totalorder %s68, %s82
    %p84 = scmp.eq.s32.totalorder %s16, 0
    %p85 = por %p83, %p84
    %s87 = sadd.s32 %s86, 1
    %p90 = scmp.eq.s32.totalorder %s10, 1
    %p91 = scmp.ne.s32.totalorder %s86, %s88
    %p92 = scmp.eq.s32.totalorder %s10, 0
    %p93 = por %p91, %p92
    %p94 = scmp.ne.s32.totalorder %s86, %s88
    %p95 = scmp.eq.s32.totalorder %s15, 1
    %p96 = por %p94, %p95
    %p97 = scmp.ne.s32.totalorder %s88, %s89
    %p98 = scmp.eq.s32.totalorder %s15, 0
    %p99 = por %p97, %p98
    %p100 = scmp.ne.s32.totalorder %s88, %s89
    %p101 = scmp.eq.s32.totalorder %s16, 1
    %p102 = por %p100, %p101
    %p104 = scmp.ne.s32.totalorder %s89, %s103
    %p105 = scmp.eq.s32.totalorder %s16, 0
    %p106 = por %p104, %p105
    %s107 = ssub.s32 %s10, %s17
    %p108 = scmp.eq.s32.totalorder %s107, 0
    %s110 = sadd.s32 %s109, 1
    %s111 = scalar_select %p108, %s109, %s110
    %p114 = pneg %p108
    %p115 = scmp.eq.s32.totalorder %s10, 1
    %p116 = por %p114, %p115
    %p117 = scmp.ne.s32.totalorder %s109, %s112
    %p118 = scmp.eq.s32.totalorder %s10, 0
    %p119 = por %p117, %p118
    %p120 = scmp.ne.s32.totalorder %s109, %s112
    %p121 = scmp.eq.s32.totalorder %s15, 1
    %p122 = por %p120, %p121
    %p123 = scmp.ne.s32.totalorder %s112, %s113
    %p124 = scmp.eq.s32.totalorder %s15, 0
    %p125 = por %p123, %p124
    %p126 = scmp.ne.s32.totalorder %s112, %s113
    %p127 = scmp.eq.s32.totalorder %s16, 1
    %p128 = por %p126, %p127
    %p130 = scmp.ne.s32.totalorder %s113, %s129
    %p131 = scmp.eq.s32.totalorder %s16, 0
    %p132 = por %p130, %p131
    %p133 = scmp.le.s32.totalorder 1, %s10
    %p134 = scmp.lt.s32.totalorder %s10, 3
    %p135 = pnand %p133, %p134
    %p136 = pneg %p135
    // Predicated region
    $region9: #{woodbury_glow_forward.5} parent=5 // pred_check
      _
    $region10: #{woodbury_glow_forward.5} parent=5 // pred_check_branch
      %138 = sbr.rel (%p135) target = $region12
    $region11: #{woodbury_glow_forward.5} parent=5 // pred_region
      %s139 = ssub.s32 %s10, 1
      // Predicated region
      $region13: #{woodbury_glow_forward.5} parent=11 // pred_check
        %p140 = pneg %p57
      $region14: #{woodbury_glow_forward.5} parent=11 // pred_check_branch
        %142 = sbr.rel (%p140) target = $region16
      $region15: #{woodbury_glow_forward.5} parent=11 // pred_region
        _
      $region16: #{woodbury_glow_forward.5} parent=11 // pred_fallthru
        _
      // Predicated region
      $region17: #{woodbury_glow_forward.5} parent=11 // pred_check
        %p143 = pneg %p78
      $region18: #{woodbury_glow_forward.5} parent=11 // pred_check_branch
        %145 = sbr.rel (%p143) target = $region20
      $region19: #{woodbury_glow_forward.5} parent=11 // pred_region
        _
      $region20: #{woodbury_glow_forward.5} parent=11 // pred_fallthru
        _
      // Predicated region
      $region21: #{woodbury_glow_forward.5} parent=11 // pred_check
        %p146 = pneg %p99
      $region22: #{woodbury_glow_forward.5} parent=11 // pred_check_branch
        %148 = sbr.rel (%p146) target = $region24
      $region23: #{woodbury_glow_forward.5} parent=11 // pred_region
        _
      $region24: #{woodbury_glow_forward.5} parent=11 // pred_fallthru
        _
    $region12: #{woodbury_glow_forward.5} parent=5 // pred_fallthru
      _
    %p149 = scmp.lt.s32.totalorder %s10, 2
    // Predicated region
    $region25: #{woodbury_glow_forward.5} parent=5 // pred_check
      %p150 = pneg %p149
    $region26: #{woodbury_glow_forward.5} parent=5 // pred_check_branch
      %152 = sbr.rel (%p150) target = $region28
    $region27: #{woodbury_glow_forward.5} parent=5 // pred_region
      // Predicated region
      $region29: #{woodbury_glow_forward.5} parent=27 // pred_check
        %p153 = pneg %p30
      $region30: #{woodbury_glow_forward.5} parent=27 // pred_check_branch
        %155 = sbr.rel (%p153) target = $region32
      $region31: #{woodbury_glow_forward.5} parent=27 // pred_region
        %p156 = scmp.lt.s32.totalorder %s10, 1
        %s157 = scalar_select %p156, %s10, 1
        %s158 = smul.addr %s157, 2
        %s159 = smul.addr %s158, 8
        %s160 = scalar_lea.vmem %s0, %s159
      $region32: #{woodbury_glow_forward.5} parent=27 // pred_fallthru
        _
    $region28: #{woodbury_glow_forward.5} parent=5 // pred_fallthru
      _
    %p161 = scmp.le.s32.totalorder 1, %s10
    %p162 = scmp.lt.s32.totalorder %s10, 3
    %p163 = pnand %p161, %p162
    %p164 = pneg %p163
    // Predicated region
    $region33: #{woodbury_glow_forward.5} parent=5 // pred_check
      _
    $region34: #{woodbury_glow_forward.5} parent=5 // pred_check_branch
      %166 = sbr.rel (%p163) target = $region36
    $region35: #{woodbury_glow_forward.5} parent=5 // pred_region
      %s167 = ssub.s32 %s10, 1
      %p168 = scmp.lt.s32.totalorder %s15, 1
      %s169 = scalar_select %p168, %s15, 1
      %s170 = smul.addr %s169, 2
      %s171 = smul.addr %s170, 8
      %s172 = scalar_lea.vmem %s0, %s171
      %p173 = pneg %p36
      %p174 = pneg %p33
      %p175 = pneg %p57
      %p176 = pneg %p54
      %p177 = pneg %p78
      %p178 = pneg %p75
      %p179 = pneg %p99
      %p180 = pneg %p96
      %p181 = pneg %p125
      %p182 = pneg %p122
      %p183 = scmp.lt.s32.totalorder %s15, 1
      %s184 = scalar_select %p183, %s15, 1
      %s185 = scalar_lea.vmem %s4, %s184
      %p186 = scmp.lt.s32.totalorder %s15, 1
      %s187 = scalar_select %p186, %s15, 1
      %s188 = smul.addr %s187, 2
      %s189 = smul.addr %s188, 8
      %s190 = scalar_lea.vmem %s0, %s189
      %p191 = scmp.lt.s32.totalorder %s15, 1
      %s192 = scalar_select %p191, %s15, 1
      %s193 = scalar_lea.vmem %s4, %s192
      %v195 = vld [vmem:[%s3] sm:$0x1]
      %v196 = vld [vmem:[%s190] sm:$0xff]
      %v197 = vld [vmem:[%s190 + $0x8] sm:$0xff]
      %v198 = vld [vmem:[%s1] sm:$0xf]
      %v199 = vld [vmem:[%s1 + $0x4] sm:$0xf]
      %v200 = vld [vmem:[%s2] sm:$0xff]
      %v201 = vld [vmem:[%s2 + $0x8] sm:$0xff]
      %202 = vrot.lane.b32.xlu0 %v196, 11
      %v203 = vpop.permute.xlu0 %202
      %204 = vrot.lane.b32.xlu0 %v196, 10
      %v205 = vpop.permute.xlu0 %204
      %206 = vrot.lane.b32.xlu0 %v196, 9
      %v207 = vpop.permute.xlu0 %206
      %208 = vrot.lane.b32.xlu0 %v196, 1
      %v209 = vpop.permute.xlu0 %208
      %210 = vrot.lane.b32.xlu0 %v196, 127
      %v211 = vpop.permute.xlu0 %210
      %212 = vrot.lane.b32.xlu0 %v196, 119
      %v213 = vpop.permute.xlu0 %212
      %214 = vrot.lane.b32.xlu0 %v196, 118
      %v215 = vpop.permute.xlu0 %214
      %216 = vrot.lane.b32.xlu0 %v196, 117
      %v217 = vpop.permute.xlu0 %216
      %v218 = vpack.c.bf16 %v205, %v203
      %v219 = vpack.c.bf16 %v209, %v207
      %v220 = vpack.c.bf16 %v211, %v196
      %v221 = vpack.c.bf16 %v215, %v213
      %v222 = vpack.c.bf16 %v217, %v217
      %224 = vset.pattern.permute.xlu0 0
      %225 = vperm.xlu0 %224, %v200
      %v226 = vpop.permute.xlu0 %225
      %229 = vset.pattern.permute.xlu0 0
      %230 = vperm.xlu0 %229, %v201
      %v231 = vpop.permute.xlu0 %230
      %v235 = vunpack.c.l.b16 %v198
      %v236 = vunpack.c.l.b16 %v199
      %v237 = vpack.c.b16 %v236, %v235
      %vm238 = vcmask 588800
      %v240 = vsel %vm238, %v237, 0
      %vm242 = vcmask 1043456
      %v244 = vsel %vm242, %v222, 0
      %246 = vmatpush.bf16.msra.mxu0 0
      %247 = vmatpush.bf16.msra.mxu0 0
      %248 = vmatpush.bf16.msra.mxu0 0
      %249 = vmatpush.bf16.msra.mxu0 %v244
      %250 = vmatpush.bf16.msra.mxu0 %v221
      %251 = vmatpush.bf16.msra.mxu0 %v220
      %252 = vmatpush.bf16.msra.mxu0 %v219
      %253 = vmatpush.bf16.msra.mxu0 %v218
      %254 = vmatmul.bf16.gmra.mxu0 %v240
      %v255 = vpop.f32.mrf.mxu0
      %v256 = vadd.f32 %v226, %v255
      %v257 = vpop.f32.mrf.mxu0
      %v258 = vadd.f32 %v231, %v257
      %259 = vdwg.mxu0
      %v261 = vperm.slane %v195, 0
      %v263 = vmul.f32 %v258, %v261
      %v264 = vsub.f32 %v197, %v256
      %v265 = vmul.f32 %v264, %v261
      %v266 = vmul.f32 %v263, 2.0
      %v267 = vadd.f32 %v266, 1.837877
      %v268 = vmul.f32 %v267, %v261
      %v269 = vmul.f32 %v265, %v265
      %v270 = vmul.f32 %v263, -2.0
      %v271 = vmul.f32 %v270, 1.442695
      %v272 = vpow.pop %v271
      %v273 = vmul.f32 %v269, %v272
      %v274 = vadd.f32 %v268, %v273
      %v275 = vmul.f32 %v274, -0.5
      %v276 = vrot.slane %v275, 4
      %v277 = vadd.f32 %v275, %v276
      %v278 = vrot.slane %v277, 2
      %v279 = vadd.f32 %v277, %v278
      %v280 = vrot.slane %v279, 1
      %v281 = vadd.f32 %v279, %v280
      %282 = vst [vmem:[%s193] sm:$0x1] %v281
      %p283 = scmp.lt.s32.totalorder %s15, 1
      %s284 = scalar_select %p283, %s15, 1
      %s285 = scalar_lea.vmem %s4, %s284
      // Predicated region
      $region37: #{woodbury_glow_forward.5} parent=35 // pred_check
        %p286 = pneg %p122
      $region38: #{woodbury_glow_forward.5} parent=35 // pred_check_branch
        %288 = sbr.rel (%p286) target = $region40
      $region39: #{woodbury_glow_forward.5} parent=35 // pred_region
        _
      $region40: #{woodbury_glow_forward.5} parent=35 // pred_fallthru
        _
    $region36: #{woodbury_glow_forward.5} parent=5 // pred_fallthru
      _
    %p289 = scmp.le.s32.totalorder 2, %s10
    // Predicated region
    $region41: #{woodbury_glow_forward.5} parent=5 // pred_check
      %p290 = pneg %p289
    $region42: #{woodbury_glow_forward.5} parent=5 // pred_check_branch
      %292 = sbr.rel (%p290) target = $region44
    $region43: #{woodbury_glow_forward.5} parent=5 // pred_region
      %s293 = ssub.s32 %s10, 2
      // Predicated region
      $region45: #{woodbury_glow_forward.5} parent=43 // pred_check
        %p294 = pneg %p128
      $region46: #{woodbury_glow_forward.5} parent=43 // pred_check_branch
        %296 = sbr.rel (%p294) target = $region48
      $region47: #{woodbury_glow_forward.5} parent=43 // pred_region
        %p297 = scmp.lt.s32.totalorder %s16, 1
        %s298 = scalar_select %p297, %s16, 1
        %s299 = scalar_lea.vmem %s4, %s298
      $region48: #{woodbury_glow_forward.5} parent=43 // pred_fallthru
        _
    $region44: #{woodbury_glow_forward.5} parent=5 // pred_fallthru
      _
  $region6: #{woodbury_glow_forward.5} parent=0 // loop_footer
    %s14 = sadd.s32 1, %s10
  $region7: #{woodbury_glow_forward.5} parent=0 // loop_footer_branch
    %9 = sbr.rel target = $region3
  $region8: #{woodbury_glow_forward.5} parent=0 // loop_exit
    _

</llo_original>
